<compile_context>
chip_gen: v6e
topology: v6e:2x2x1
jax: 0.10.0
libtpu: 0.0.40
codegen_flags: <defaults>
</compile_context>

<pallas_src>
import jax
import jax.numpy as jnp
from jax import lax
from jax.experimental import pallas as pl
from jax.experimental.pallas import tpu as pltpu

HIDDEN = 6          # LSTM hidden size
INPUT = 1           # LSTM input size
HP = 8              # hidden padded to 8 sublanes (one sublane group per gate)
G4 = 4 * HP         # 32 gate rows (i, f, g, o), each padded to 8
LANES = 128         # lane width; batch lives on lanes
TB = 8              # timesteps per grid block (statically unrolled)


def lstm2_kernel(x_ref, wih0_ref, b0_ref, whh0_ref, wih1_ref, whh1_ref, b1_ref,
                 y_ref, state_ref):
    """Two stacked LSTM layers, PyTorch gate order (i, f, g, o).

    Layout: batch on lanes, gate rows on sublanes (each gate padded 6 -> 8).

      x_ref    : (TB, BL)      input block x[t, b] (time on sublanes)
      wih0_ref : (G4, BL)      layer-0 input weight column, lane-broadcast
      b0_ref   : (G4, BL)      layer-0 combined bias (b_ih + b_hh), lane-bcast
      whh0_ref : (G4, HP)      layer-0 hidden weights (row & col padded)
      wih1_ref : (G4, HP)      layer-1 input  weights
      whh1_ref : (G4, HP)      layer-1 hidden weights
      b1_ref   : (G4, BL)      layer-1 combined bias, lane-broadcast
      y_ref    : (TB, HP, BL)  top-layer hidden states (output block)
      state_ref: (4, HP, BL)   persistent carries [h0, c0, h1, c1]
    """
    tb = x_ref.shape[0]

    # Fresh sequence: zero the carried state on the first time block.
    @pl.when(pl.program_id(1) == 0)
    def _():
        state_ref[...] = jnp.zeros_like(state_ref)

    # Weights/biases -> values once per block (vreg resident, no per-step loads).
    wih0 = wih0_ref[...]
    b0 = b0_ref[...]
    whh0 = whh0_ref[...]
    wih1 = wih1_ref[...]
    whh1 = whh1_ref[...]
    b1 = b1_ref[...]
    x_blk = x_ref[...]

    h0 = state_ref[0]
    c0 = state_ref[1]
    h1 = state_ref[2]
    c1 = state_ref[3]

    def sigmoid(v):
        # approx reciprocal -> EUP slot; removes the full-precision divide
        # from the serial per-step chain.
        return pl.reciprocal(1.0 + jnp.exp(-v), approx=True)

    def act(g, c_prev):
        # One sigmoid pass + one tanh pass over the whole (G4, BL) gate tensor;
        # gate extraction is a sublane slice at multiples of 8 -> free.
        sg = sigmoid(g)
        tg = jnp.tanh(g)
        i = sg[0 * HP:1 * HP]
        f = sg[1 * HP:2 * HP]
        gg = tg[2 * HP:3 * HP]
        o = sg[3 * HP:4 * HP]
        c = f * c_prev + i * gg
        h = o * jnp.tanh(c)
        return h, c

    # TODO(synk): evaluate replacing the tiny (32,8)x(8,128) MXU dots with a
    # VPU broadcast-FMA expansion over K (6/12) once bundle dumps confirm the
    # MXU push->pop latency is the per-step floor.
    for s in range(tb):  # static unroll: scheduler sees the whole block
        # Layer-1 partial that depends only on h1_{t-1}: independent of
        # layer-0's work for this step, so it can overlap with it.
        g1p = jnp.dot(whh1, h1, preferred_element_type=jnp.float32) + b1

        # Layer 0 (input_size=1 -> input projection is a broadcast FMA).
        g0 = (wih0 * x_blk[s:s + 1, :] + b0
              + jnp.dot(whh0, h0, preferred_element_type=jnp.float32))
        h0, c0 = act(g0, c0)

        # Layer 1.
        g1 = g1p + jnp.dot(wih1, h0, preferred_element_type=jnp.float32)
        h1, c1 = act(g1, c1)

        # Lane-dense, (8,128)-aligned store (unmasked vst).
        y_ref[s] = h1

    state_ref[0] = h0
    state_ref[1] = c0
    state_ref[2] = h1
    state_ref[3] = c1


def _pad_gate_rows(w):
    """(4*H, K) -> (4*HP, K): pad each gate's 6 rows out to 8 sublanes."""
    K = w.shape[1]
    w = w.reshape(4, HIDDEN, K)
    w = jnp.pad(w, ((0, 0), (0, HP - HIDDEN), (0, 0)))
    return w.reshape(4 * HP, K)


def _pad_gate_bias(b):
    """(4*H,) -> (4*HP, 1)."""
    b = b.reshape(4, HIDDEN)
    b = jnp.pad(b, ((0, 0), (0, HP - HIDDEN)))
    return b.reshape(4 * HP, 1)


def init_params(key):
    """Deterministic params matching nn.LSTM(1, 6, num_layers=2) shapes,
    U(-1/sqrt(H), 1/sqrt(H)) like PyTorch's default init."""
    k = 1.0 / float(jnp.sqrt(float(HIDDEN)))
    keys = jax.random.split(key, 8)

    def u(k_, shape):
        return jax.random.uniform(k_, shape, jnp.float32, -k, k)

    w_ih0 = u(keys[0], (4 * HIDDEN, INPUT))
    w_hh0 = u(keys[1], (4 * HIDDEN, HIDDEN))
    b_ih0 = u(keys[2], (4 * HIDDEN,))
    b_hh0 = u(keys[3], (4 * HIDDEN,))
    w_ih1 = u(keys[4], (4 * HIDDEN, HIDDEN))
    w_hh1 = u(keys[5], (4 * HIDDEN, HIDDEN))
    b_ih1 = u(keys[6], (4 * HIDDEN,))
    b_hh1 = u(keys[7], (4 * HIDDEN,))

    def pad_cols(w):  # pad the contraction (hidden) axis 6 -> 8 columns
        return jnp.pad(w, ((0, 0), (0, HP - HIDDEN)))

    # Kernel consumes row/col-padded weights (gate layout on sublanes) and
    # lane-broadcast bias / layer-0 input-weight columns.
    kernel_params = (
        jnp.broadcast_to(_pad_gate_rows(w_ih0), (G4, LANES)),           # (32,128)
        jnp.broadcast_to(_pad_gate_bias(b_ih0 + b_hh0), (G4, LANES)),   # (32,128)
        pad_cols(_pad_gate_rows(w_hh0)),                                # (32,8)
        pad_cols(_pad_gate_rows(w_ih1)),                                # (32,8)
        pad_cols(_pad_gate_rows(w_hh1)),                                # (32,8)
        jnp.broadcast_to(_pad_gate_bias(b_ih1 + b_hh1), (G4, LANES)),   # (32,128)
    )
    raw_params = (w_ih0, w_hh0, b_ih0, b_hh0, w_ih1, w_hh1, b_ih1, b_hh1)
    return kernel_params, raw_params


def replicator_forward(x, kernel_params):
    """x: (B, T, 1) float32 -> (B, T, 6) float32 (same as PyTorch lstm0 output)."""
    x = x.astype(jnp.float32)
    B, T, _ = x.shape
    wih0_b, b0_b, whh0_p, wih1_p, whh1_p, b1_b = kernel_params

    # Pad T to a multiple of the unroll block and B to full 128-lane blocks.
    T_pad = ((T + TB - 1) // TB) * TB
    BP = ((B + LANES - 1) // LANES) * LANES
    NT = T_pad // TB
    NB = BP // LANES

    x_tm = jnp.transpose(x[..., 0], (1, 0))                 # (T, B) time-major
    x_tm = jnp.pad(x_tm, ((0, T_pad - T), (0, BP - B)))     # (T_pad, BP)

    # VMEM footprint is ~100 KiB including double buffering — far below v5e's
    # 16 MiB scoped default and v7x's 64 MiB physical; limit set explicitly
    # with plenty of headroom anyway.
    y_tm = pl.pallas_call(
        lstm2_kernel,
        out_shape=jax.ShapeDtypeStruct((T_pad, HP, BP), jnp.float32),
        grid_spec=pltpu.PrefetchScalarGridSpec(
            num_scalar_prefetch=0,
            grid=(NB, NT),                                     # (batch blocks, time blocks)
            in_specs=[
                pl.BlockSpec((TB, LANES), lambda b, t: (t, b)),   # x
                pl.BlockSpec((G4, LANES), lambda b, t: (0, 0)),   # W_ih0 (lane-bcast)
                pl.BlockSpec((G4, LANES), lambda b, t: (0, 0)),   # b0
                pl.BlockSpec((G4, HP), lambda b, t: (0, 0)),      # W_hh0
                pl.BlockSpec((G4, HP), lambda b, t: (0, 0)),      # W_ih1
                pl.BlockSpec((G4, HP), lambda b, t: (0, 0)),      # W_hh1
                pl.BlockSpec((G4, LANES), lambda b, t: (0, 0)),   # b1
            ],
            out_specs=pl.BlockSpec((TB, HP, LANES), lambda b, t: (t, 0, b)),
            scratch_shapes=[pltpu.VMEM((4, HP, LANES), jnp.float32)],
        ),
        compiler_params=pltpu.CompilerParams(
            dimension_semantics=("parallel", "arbitrary"),
            vmem_limit_bytes=32 * 1024 * 1024,
        ),
    )(x_tm, wih0_b, b0_b, whh0_p, wih1_p, whh1_p, b1_b)

    # Strip T/H/B padding, back to batch-first (B, T, H).
    return jnp.transpose(y_tm[:T, :HIDDEN, :B], (2, 0, 1))


def replicator_reference(x, raw_params):
    """Pure-JAX reference (lax.scan) for correctness checking."""
    w_ih0, w_hh0, b_ih0, b_hh0, w_ih1, w_hh1, b_ih1, b_hh1 = raw_params
    H = HIDDEN
    x = x.astype(jnp.float32)
    B = x.shape[0]

    def cell(xt, h, c, w_ih, w_hh, b_ih, b_hh):
        g = xt @ w_ih.T + h @ w_hh.T + b_ih + b_hh
        i = jax.nn.sigmoid(g[:, 0 * H:1 * H])
        f = jax.nn.sigmoid(g[:, 1 * H:2 * H])
        gg = jnp.tanh(g[:, 2 * H:3 * H])
        o = jax.nn.sigmoid(g[:, 3 * H:4 * H])
        c = f * c + i * gg
        h = o * jnp.tanh(c)
        return h, c

    def step(carry, xt):
        h0, c0, h1, c1 = carry
        h0, c0 = cell(xt, h0, c0, w_ih0, w_hh0, b_ih0, b_hh0)
        h1, c1 = cell(h0, h1, c1, w_ih1, w_hh1, b_ih1, b_hh1)
        return (h0, c0, h1, c1), h1

    zeros = jnp.zeros((B, H), jnp.float32)
    _, ys = lax.scan(step, (zeros, zeros, zeros, zeros),
                     jnp.transpose(x, (1, 0, 2)))
    return jnp.transpose(ys, (1, 0, 2))


if __name__ == "__main__":
    key = jax.random.PRNGKey(0)
    k_param, k_x = jax.random.split(key)

    kernel_params, raw_params = init_params(k_param)

    B, T = 2, 8
    x = jax.random.normal(k_x, (B, T, INPUT), dtype=jnp.float32)

    y = replicator_forward(x, kernel_params)
    y = jax.block_until_ready(y)

    y_ref = replicator_reference(x, raw_params)
    assert y.shape == (B, T, HIDDEN)
    # Tolerance loosened slightly vs. 1e-4 because the kernel uses the EUP
    # approx-reciprocal sigmoid; a wiring/gate-order bug would show up as
    # errors orders of magnitude larger than this.
    assert jnp.allclose(y, y_ref, atol=5e-3, rtol=5e-3), "mismatch vs reference"

    print("KERNEL_OK")
</pallas_src>

<mosaic_0001>
module attributes {stable_mosaic.version = 11 : i64} {
  func.func @lstm2_kernel(%arg0: i32, %arg1: i32, %arg2: memref<8x128xf32, #tpu.memory_space<vmem>>, %arg3: memref<32x128xf32, #tpu.memory_space<vmem>>, %arg4: memref<32x128xf32, #tpu.memory_space<vmem>>, %arg5: memref<32x8xf32, #tpu.memory_space<vmem>>, %arg6: memref<32x8xf32, #tpu.memory_space<vmem>>, %arg7: memref<32x8xf32, #tpu.memory_space<vmem>>, %arg8: memref<32x128xf32, #tpu.memory_space<vmem>>, %arg9: memref<8x8x128xf32, #tpu.memory_space<vmem>>, %arg10: memref<4x8x128xf32, #tpu.memory_space<vmem>>) attributes {dimension_semantics = [#tpu.dimension_semantics<parallel>, #tpu.dimension_semantics<arbitrary>], iteration_bounds = array<i64: 1, 1>, scalar_prefetch = 0 : i64, scratch_operands = 1 : i64, tpu.core_type = #tpu.core_type<tc>, window_params = [{transform_indices = @transform_0, window_bounds = array<i64: 8, 128>}, {pipeline_mode = #tpu.pipeline_mode<synchronous>, transform_indices = @transform_1, window_bounds = array<i64: 32, 128>}, {pipeline_mode = #tpu.pipeline_mode<synchronous>, transform_indices = @transform_2, window_bounds = array<i64: 32, 128>}, {pipeline_mode = #tpu.pipeline_mode<synchronous>, transform_indices = @transform_3, window_bounds = array<i64: 32, 8>}, {pipeline_mode = #tpu.pipeline_mode<synchronous>, transform_indices = @transform_4, window_bounds = array<i64: 32, 8>}, {pipeline_mode = #tpu.pipeline_mode<synchronous>, transform_indices = @transform_5, window_bounds = array<i64: 32, 8>}, {pipeline_mode = #tpu.pipeline_mode<synchronous>, transform_indices = @transform_6, window_bounds = array<i64: 32, 128>}, {transform_indices = @transform_7, window_bounds = array<i64: 8, 8, 128>}]} {
    %c0_i32 = arith.constant 0 : i32
    %0 = arith.cmpi eq, %arg1, %c0_i32 : i32
    %1 = arith.extui %0 : i1 to i32
    %c0_i32_0 = arith.constant 0 : i32
    %2 = arith.cmpi ne, %1, %c0_i32_0 : i32
    scf.if %2 {
      %cst_110 = arith.constant 0.000000e+00 : f32
      %390 = vector.broadcast %cst_110 : f32 to vector<4x8x128xf32>
      %c0_111 = arith.constant 0 : index
      %c0_112 = arith.constant 0 : index
      %c0_113 = arith.constant 0 : index
      %391 = vector.load %arg10[%c0_111, %c0_112, %c0_113] : memref<4x8x128xf32, #tpu.memory_space<vmem>>, vector<4x8x128xf32>
      tpu.vector_store %arg10[%c0_111, %c0_112, %c0_113], %390 {strides = array<i32>} : memref<4x8x128xf32, #tpu.memory_space<vmem>>, vector<4x8x128xf32>,
    } else {
    }
    %c0 = arith.constant 0 : index
    %c0_1 = arith.constant 0 : index
    %3 = vector.load %arg3[%c0, %c0_1] : memref<32x128xf32, #tpu.memory_space<vmem>>, vector<32x128xf32>
    %c0_2 = arith.constant 0 : index
    %c0_3 = arith.constant 0 : index
    %4 = vector.load %arg4[%c0_2, %c0_3] : memref<32x128xf32, #tpu.memory_space<vmem>>, vector<32x128xf32>
    %c0_4 = arith.constant 0 : index
    %c0_5 = arith.constant 0 : index
    %5 = vector.load %arg5[%c0_4, %c0_5] : memref<32x8xf32, #tpu.memory_space<vmem>>, vector<32x8xf32>
    %c0_6 = arith.constant 0 : index
    %c0_7 = arith.constant 0 : index
    %6 = vector.load %arg6[%c0_6, %c0_7] : memref<32x8xf32, #tpu.memory_space<vmem>>, vector<32x8xf32>
    %c0_8 = arith.constant 0 : index
    %c0_9 = arith.constant 0 : index
    %7 = vector.load %arg7[%c0_8, %c0_9] : memref<32x8xf32, #tpu.memory_space<vmem>>, vector<32x8xf32>
    %c0_10 = arith.constant 0 : index
    %c0_11 = arith.constant 0 : index
    %8 = vector.load %arg8[%c0_10, %c0_11] : memref<32x128xf32, #tpu.memory_space<vmem>>, vector<32x128xf32>
    %c0_12 = arith.constant 0 : index
    %c0_13 = arith.constant 0 : index
    %9 = vector.load %arg2[%c0_12, %c0_13] : memref<8x128xf32, #tpu.memory_space<vmem>>, vector<8x128xf32>
    %c0_14 = arith.constant 0 : index
    %c0_15 = arith.constant 0 : index
    %c0_16 = arith.constant 0 : index
    %10 = vector.load %arg10[%c0_14, %c0_15, %c0_16] : memref<4x8x128xf32, #tpu.memory_space<vmem>>, vector<1x8x128xf32>
    %11 = vector.shape_cast %10 : vector<1x8x128xf32> to vector<8x128xf32>
    %c1 = arith.constant 1 : index
    %c0_17 = arith.constant 0 : index
    %c0_18 = arith.constant 0 : index
    %12 = vector.load %arg10[%c1, %c0_17, %c0_18] : memref<4x8x128xf32, #tpu.memory_space<vmem>>, vector<1x8x128xf32>
    %13 = vector.shape_cast %12 : vector<1x8x128xf32> to vector<8x128xf32>
    %c2 = arith.constant 2 : index
    %c0_19 = arith.constant 0 : index
    %c0_20 = arith.constant 0 : index
    %14 = vector.load %arg10[%c2, %c0_19, %c0_20] : memref<4x8x128xf32, #tpu.memory_space<vmem>>, vector<1x8x128xf32>
    %15 = vector.shape_cast %14 : vector<1x8x128xf32> to vector<8x128xf32>
    %c3 = arith.constant 3 : index
    %c0_21 = arith.constant 0 : index
    %c0_22 = arith.constant 0 : index
    %16 = vector.load %arg10[%c3, %c0_21, %c0_22] : memref<4x8x128xf32, #tpu.memory_space<vmem>>, vector<1x8x128xf32>
    %17 = vector.shape_cast %16 : vector<1x8x128xf32> to vector<8x128xf32>
    %cst = arith.constant dense<0.000000e+00> : vector<32x128xf32>
    %18 = tpu.matmul %7, %15, %cst {dimension_numbers = #tpu.dot_dimension_numbers<[1], [0], [0], [1], [0, 0, 1, 1], [], []>} : vector<32x8xf32>, vector<8x128xf32>, vector<32x128xf32> -> vector<32x128xf32>
    %19 = arith.addf %18, %8 : vector<32x128xf32>
    %20 = vector.extract_strided_slice %9 {offsets = [0, 0], sizes = [1, 128], strides = [1, 1]} : vector<8x128xf32> to vector<1x128xf32>
    %21 = vector.broadcast %20 : vector<1x128xf32> to vector<32x128xf32>
    %22 = arith.mulf %3, %21 : vector<32x128xf32>
    %23 = arith.addf %22, %4 : vector<32x128xf32>
    %cst_23 = arith.constant dense<0.000000e+00> : vector<32x128xf32>
    %24 = tpu.matmul %5, %11, %cst_23 {dimension_numbers = #tpu.dot_dimension_numbers<[1], [0], [0], [1], [0, 0, 1, 1], [], []>} : vector<32x8xf32>, vector<8x128xf32>, vector<32x128xf32> -> vector<32x128xf32>
    %25 = arith.addf %23, %24 : vector<32x128xf32>
    %cst_24 = arith.constant 0.000000e+00 : f32
    %26 = vector.broadcast %cst_24 : f32 to vector<32x128xf32>
    %27 = arith.subf %26, %25 : vector<32x128xf32>
    %28 = math.exp %27 : vector<32x128xf32>
    %cst_25 = arith.constant 1.000000e+00 : f32
    %29 = vector.broadcast %cst_25 : f32 to vector<32x128xf32>
    %30 = arith.addf %29, %28 : vector<32x128xf32>
    %31 = tpu.reciprocal %30 {approx = true} : vector<32x128xf32> -> vector<32x128xf32>
    %32 = math.tanh %25 : vector<32x128xf32>
    %33 = vector.extract_strided_slice %31 {offsets = [0, 0], sizes = [8, 128], strides = [1, 1]} : vector<32x128xf32> to vector<8x128xf32>
    %34 = vector.extract_strided_slice %31 {offsets = [8, 0], sizes = [8, 128], strides = [1, 1]} : vector<32x128xf32> to vector<8x128xf32>
    %35 = vector.extract_strided_slice %32 {offsets = [16, 0], sizes = [8, 128], strides = [1, 1]} : vector<32x128xf32> to vector<8x128xf32>
    %36 = vector.extract_strided_slice %31 {offsets = [24, 0], sizes = [8, 128], strides = [1, 1]} : vector<32x128xf32> to vector<8x128xf32>
    %37 = arith.mulf %34, %13 : vector<8x128xf32>
    %38 = arith.mulf %33, %35 : vector<8x128xf32>
    %39 = arith.addf %37, %38 : vector<8x128xf32>
    %40 = math.tanh %39 : vector<8x128xf32>
    %41 = arith.mulf %36, %40 : vector<8x128xf32>
    %cst_26 = arith.constant dense<0.000000e+00> : vector<32x128xf32>
    %42 = tpu.matmul %6, %41, %cst_26 {dimension_numbers = #tpu.dot_dimension_numbers<[1], [0], [0], [1], [0, 0, 1, 1], [], []>} : vector<32x8xf32>, vector<8x128xf32>, vector<32x128xf32> -> vector<32x128xf32>
    %43 = arith.addf %19, %42 : vector<32x128xf32>
    %cst_27 = arith.constant 0.000000e+00 : f32
    %44 = vector.broadcast %cst_27 : f32 to vector<32x128xf32>
    %45 = arith.subf %44, %43 : vector<32x128xf32>
    %46 = math.exp %45 : vector<32x128xf32>
    %cst_28 = arith.constant 1.000000e+00 : f32
    %47 = vector.broadcast %cst_28 : f32 to vector<32x128xf32>
    %48 = arith.addf %47, %46 : vector<32x128xf32>
    %49 = tpu.reciprocal %48 {approx = true} : vector<32x128xf32> -> vector<32x128xf32>
    %50 = math.tanh %43 : vector<32x128xf32>
    %51 = vector.extract_strided_slice %49 {offsets = [0, 0], sizes = [8, 128], strides = [1, 1]} : vector<32x128xf32> to vector<8x128xf32>
    %52 = vector.extract_strided_slice %49 {offsets = [8, 0], sizes = [8, 128], strides = [1, 1]} : vector<32x128xf32> to vector<8x128xf32>
    %53 = vector.extract_strided_slice %50 {offsets = [16, 0], sizes = [8, 128], strides = [1, 1]} : vector<32x128xf32> to vector<8x128xf32>
    %54 = vector.extract_strided_slice %49 {offsets = [24, 0], sizes = [8, 128], strides = [1, 1]} : vector<32x128xf32> to vector<8x128xf32>
    %55 = arith.mulf %52, %17 : vector<8x128xf32>
    %56 = arith.mulf %51, %53 : vector<8x128xf32>
    %57 = arith.addf %55, %56 : vector<8x128xf32>
    %58 = math.tanh %57 : vector<8x128xf32>
    %59 = arith.mulf %54, %58 : vector<8x128xf32>
    %c0_29 = arith.constant 0 : index
    %c0_30 = arith.constant 0 : index
    %c0_31 = arith.constant 0 : index
    %60 = vector.load %arg9[%c0_29, %c0_30, %c0_31] : memref<8x8x128xf32, #tpu.memory_space<vmem>>, vector<1x8x128xf32>
    %61 = vector.shape_cast %60 : vector<1x8x128xf32> to vector<8x128xf32>
    %62 = vector.shape_cast %59 : vector<8x128xf32> to vector<1x8x128xf32>
    tpu.vector_store %arg9[%c0_29, %c0_30, %c0_31], %62 {strides = array<i32>} : memref<8x8x128xf32, #tpu.memory_space<vmem>>, vector<1x8x128xf32>,
    %cst_32 = arith.constant dense<0.000000e+00> : vector<32x128xf32>
    %63 = tpu.matmul %7, %59, %cst_32 {dimension_numbers = #tpu.dot_dimension_numbers<[1], [0], [0], [1], [0, 0, 1, 1], [], []>} : vector<32x8xf32>, vector<8x128xf32>, vector<32x128xf32> -> vector<32x128xf32>
    %64 = arith.addf %63, %8 : vector<32x128xf32>
    %65 = vector.extract_strided_slice %9 {offsets = [1, 0], sizes = [1, 128], strides = [1, 1]} : vector<8x128xf32> to vector<1x128xf32>
    %66 = vector.broadcast %65 : vector<1x128xf32> to vector<32x128xf32>
    %67 = arith.mulf %3, %66 : vector<32x128xf32>
    %68 = arith.addf %67, %4 : vector<32x128xf32>
    %cst_33 = arith.constant dense<0.000000e+00> : vector<32x128xf32>
    %69 = tpu.matmul %5, %41, %cst_33 {dimension_numbers = #tpu.dot_dimension_numbers<[1], [0], [0], [1], [0, 0, 1, 1], [], []>} : vector<32x8xf32>, vector<8x128xf32>, vector<32x128xf32> -> vector<32x128xf32>
    %70 = arith.addf %68, %69 : vector<32x128xf32>
    %cst_34 = arith.constant 0.000000e+00 : f32
    %71 = vector.broadcast %cst_34 : f32 to vector<32x128xf32>
    %72 = arith.subf %71, %70 : vector<32x128xf32>
    %73 = math.exp %72 : vector<32x128xf32>
    %cst_35 = arith.constant 1.000000e+00 : f32
    %74 = vector.broadcast %cst_35 : f32 to vector<32x128xf32>
    %75 = arith.addf %74, %73 : vector<32x128xf32>
    %76 = tpu.reciprocal %75 {approx = true} : vector<32x128xf32> -> vector<32x128xf32>
    %77 = math.tanh %70 : vector<32x128xf32>
    %78 = vector.extract_strided_slice %76 {offsets = [0, 0], sizes = [8, 128], strides = [1, 1]} : vector<32x128xf32> to vector<8x128xf32>
    %79 = vector.extract_strided_slice %76 {offsets = [8, 0], sizes = [8, 128], strides = [1, 1]} : vector<32x128xf32> to vector<8x128xf32>
    %80 = vector.extract_strided_slice %77 {offsets = [16, 0], sizes = [8, 128], strides = [1, 1]} : vector<32x128xf32> to vector<8x128xf32>
    %81 = vector.extract_strided_slice %76 {offsets = [24, 0], sizes = [8, 128], strides = [1, 1]} : vector<32x128xf32> to vector<8x128xf32>
    %82 = arith.mulf %79, %39 : vector<8x128xf32>
    %83 = arith.mulf %78, %80 : vector<8x128xf32>
    %84 = arith.addf %82, %83 : vector<8x128xf32>
    %85 = math.tanh %84 : vector<8x128xf32>
    %86 = arith.mulf %81, %85 : vector<8x128xf32>
    %cst_36 = arith.constant dense<0.000000e+00> : vector<32x128xf32>
    %87 = tpu.matmul %6, %86, %cst_36 {dimension_numbers = #tpu.dot_dimension_numbers<[1], [0], [0], [1], [0, 0, 1, 1], [], []>} : vector<32x8xf32>, vector<8x128xf32>, vector<32x128xf32> -> vector<32x128xf32>
    %88 = arith.addf %64, %87 : vector<32x128xf32>
    %cst_37 = arith.constant 0.000000e+00 : f32
    %89 = vector.broadcast %cst_37 : f32 to vector<32x128xf32>
    %90 = arith.subf %89, %88 : vector<32x128xf32>
    %91 = math.exp %90 : vector<32x128xf32>
    %cst_38 = arith.constant 1.000000e+00 : f32
    %92 = vector.broadcast %cst_38 : f32 to vector<32x128xf32>
    %93 = arith.addf %92, %91 : vector<32x128xf32>
    %94 = tpu.reciprocal %93 {approx = true} : vector<32x128xf32> -> vector<32x128xf32>
    %95 = math.tanh %88 : vector<32x128xf32>
    %96 = vector.extract_strided_slice %94 {offsets = [0, 0], sizes = [8, 128], strides = [1, 1]} : vector<32x128xf32> to vector<8x128xf32>
    %97 = vector.extract_strided_slice %94 {offsets = [8, 0], sizes = [8, 128], strides = [1, 1]} : vector<32x128xf32> to vector<8x128xf32>
    %98 = vector.extract_strided_slice %95 {offsets = [16, 0], sizes = [8, 128], strides = [1, 1]} : vector<32x128xf32> to vector<8x128xf32>
    %99 = vector.extract_strided_slice %94 {offsets = [24, 0], sizes = [8, 128], strides = [1, 1]} : vector<32x128xf32> to vector<8x128xf32>
    %100 = arith.mulf %97, %57 : vector<8x128xf32>
    %101 = arith.mulf %96, %98 : vector<8x128xf32>
    %102 = arith.addf %100, %101 : vector<8x128xf32>
    %103 = math.tanh %102 : vector<8x128xf32>
    %104 = arith.mulf %99, %103 : vector<8x128xf32>
    %c1_39 = arith.constant 1 : index
    %c0_40 = arith.constant 0 : index
    %c0_41 = arith.constant 0 : index
    %105 = vector.load %arg9[%c1_39, %c0_40, %c0_41] : memref<8x8x128xf32, #tpu.memory_space<vmem>>, vector<1x8x128xf32>
    %106 = vector.shape_cast %105 : vector<1x8x128xf32> to vector<8x128xf32>
    %107 = vector.shape_cast %104 : vector<8x128xf32> to vector<1x8x128xf32>
    tpu.vector_store %arg9[%c1_39, %c0_40, %c0_41], %107 {strides = array<i32>} : memref<8x8x128xf32, #tpu.memory_space<vmem>>, vector<1x8x128xf32>,
    %cst_42 = arith.constant dense<0.000000e+00> : vector<32x128xf32>
    %108 = tpu.matmul %7, %104, %cst_42 {dimension_numbers = #tpu.dot_dimension_numbers<[1], [0], [0], [1], [0, 0, 1, 1], [], []>} : vector<32x8xf32>, vector<8x128xf32>, vector<32x128xf32> -> vector<32x128xf32>
    %109 = arith.addf %108, %8 : vector<32x128xf32>
    %110 = vector.extract_strided_slice %9 {offsets = [2, 0], sizes = [1, 128], strides = [1, 1]} : vector<8x128xf32> to vector<1x128xf32>
    %111 = vector.broadcast %110 : vector<1x128xf32> to vector<32x128xf32>
    %112 = arith.mulf %3, %111 : vector<32x128xf32>
    %113 = arith.addf %112, %4 : vector<32x128xf32>
    %cst_43 = arith.constant dense<0.000000e+00> : vector<32x128xf32>
    %114 = tpu.matmul %5, %86, %cst_43 {dimension_numbers = #tpu.dot_dimension_numbers<[1], [0], [0], [1], [0, 0, 1, 1], [], []>} : vector<32x8xf32>, vector<8x128xf32>, vector<32x128xf32> -> vector<32x128xf32>
    %115 = arith.addf %113, %114 : vector<32x128xf32>
    %cst_44 = arith.constant 0.000000e+00 : f32
    %116 = vector.broadcast %cst_44 : f32 to vector<32x128xf32>
    %117 = arith.subf %116, %115 : vector<32x128xf32>
    %118 = math.exp %117 : vector<32x128xf32>
    %cst_45 = arith.constant 1.000000e+00 : f32
    %119 = vector.broadcast %cst_45 : f32 to vector<32x128xf32>
    %120 = arith.addf %119, %118 : vector<32x128xf32>
    %121 = tpu.reciprocal %120 {approx = true} : vector<32x128xf32> -> vector<32x128xf32>
    %122 = math.tanh %115 : vector<32x128xf32>
    %123 = vector.extract_strided_slice %121 {offsets = [0, 0], sizes = [8, 128], strides = [1, 1]} : vector<32x128xf32> to vector<8x128xf32>
    %124 = vector.extract_strided_slice %121 {offsets = [8, 0], sizes = [8, 128], strides = [1, 1]} : vector<32x128xf32> to vector<8x128xf32>
    %125 = vector.extract_strided_slice %122 {offsets = [16, 0], sizes = [8, 128], strides = [1, 1]} : vector<32x128xf32> to vector<8x128xf32>
    %126 = vector.extract_strided_slice %121 {offsets = [24, 0], sizes = [8, 128], strides = [1, 1]} : vector<32x128xf32> to vector<8x128xf32>
    %127 = arith.mulf %124, %84 : vector<8x128xf32>
    %128 = arith.mulf %123, %125 : vector<8x128xf32>
    %129 = arith.addf %127, %128 : vector<8x128xf32>
    %130 = math.tanh %129 : vector<8x128xf32>
    %131 = arith.mulf %126, %130 : vector<8x128xf32>
    %cst_46 = arith.constant dense<0.000000e+00> : vector<32x128xf32>
    %132 = tpu.matmul %6, %131, %cst_46 {dimension_numbers = #tpu.dot_dimension_numbers<[1], [0], [0], [1], [0, 0, 1, 1], [], []>} : vector<32x8xf32>, vector<8x128xf32>, vector<32x128xf32> -> vector<32x128xf32>
    %133 = arith.addf %109, %132 : vector<32x128xf32>
    %cst_47 = arith.constant 0.000000e+00 : f32
    %134 = vector.broadcast %cst_47 : f32 to vector<32x128xf32>
    %135 = arith.subf %134, %133 : vector<32x128xf32>
    %136 = math.exp %135 : vector<32x128xf32>
    %cst_48 = arith.constant 1.000000e+00 : f32
    %137 = vector.broadcast %cst_48 : f32 to vector<32x128xf32>
    %138 = arith.addf %137, %136 : vector<32x128xf32>
    %139 = tpu.reciprocal %138 {approx = true} : vector<32x128xf32> -> vector<32x128xf32>
    %140 = math.tanh %133 : vector<32x128xf32>
    %141 = vector.extract_strided_slice %139 {offsets = [0, 0], sizes = [8, 128], strides = [1, 1]} : vector<32x128xf32> to vector<8x128xf32>
    %142 = vector.extract_strided_slice %139 {offsets = [8, 0], sizes = [8, 128], strides = [1, 1]} : vector<32x128xf32> to vector<8x128xf32>
    %143 = vector.extract_strided_slice %140 {offsets = [16, 0], sizes = [8, 128], strides = [1, 1]} : vector<32x128xf32> to vector<8x128xf32>
    %144 = vector.extract_strided_slice %139 {offsets = [24, 0], sizes = [8, 128], strides = [1, 1]} : vector<32x128xf32> to vector<8x128xf32>
    %145 = arith.mulf %142, %102 : vector<8x128xf32>
    %146 = arith.mulf %141, %143 : vector<8x128xf32>
    %147 = arith.addf %145, %146 : vector<8x128xf32>
    %148 = math.tanh %147 : vector<8x128xf32>
    %149 = arith.mulf %144, %148 : vector<8x128xf32>
    %c2_49 = arith.constant 2 : index
    %c0_50 = arith.constant 0 : index
    %c0_51 = arith.constant 0 : index
    %150 = vector.load %arg9[%c2_49, %c0_50, %c0_51] : memref<8x8x128xf32, #tpu.memory_space<vmem>>, vector<1x8x128xf32>
    %151 = vector.shape_cast %150 : vector<1x8x128xf32> to vector<8x128xf32>
    %152 = vector.shape_cast %149 : vector<8x128xf32> to vector<1x8x128xf32>
    tpu.vector_store %arg9[%c2_49, %c0_50, %c0_51], %152 {strides = array<i32>} : memref<8x8x128xf32, #tpu.memory_space<vmem>>, vector<1x8x128xf32>,
    %cst_52 = arith.constant dense<0.000000e+00> : vector<32x128xf32>
    %153 = tpu.matmul %7, %149, %cst_52 {dimension_numbers = #tpu.dot_dimension_numbers<[1], [0], [0], [1], [0, 0, 1, 1], [], []>} : vector<32x8xf32>, vector<8x128xf32>, vector<32x128xf32> -> vector<32x128xf32>
    %154 = arith.addf %153, %8 : vector<32x128xf32>
    %155 = vector.extract_strided_slice %9 {offsets = [3, 0], sizes = [1, 128], strides = [1, 1]} : vector<8x128xf32> to vector<1x128xf32>
    %156 = vector.broadcast %155 : vector<1x128xf32> to vector<32x128xf32>
    %157 = arith.mulf %3, %156 : vector<32x128xf32>
    %158 = arith.addf %157, %4 : vector<32x128xf32>
    %cst_53 = arith.constant dense<0.000000e+00> : vector<32x128xf32>
    %159 = tpu.matmul %5, %131, %cst_53 {dimension_numbers = #tpu.dot_dimension_numbers<[1], [0], [0], [1], [0, 0, 1, 1], [], []>} : vector<32x8xf32>, vector<8x128xf32>, vector<32x128xf32> -> vector<32x128xf32>
    %160 = arith.addf %158, %159 : vector<32x128xf32>
    %cst_54 = arith.constant 0.000000e+00 : f32
    %161 = vector.broadcast %cst_54 : f32 to vector<32x128xf32>
    %162 = arith.subf %161, %160 : vector<32x128xf32>
    %163 = math.exp %162 : vector<32x128xf32>
    %cst_55 = arith.constant 1.000000e+00 : f32
    %164 = vector.broadcast %cst_55 : f32 to vector<32x128xf32>
    %165 = arith.addf %164, %163 : vector<32x128xf32>
    %166 = tpu.reciprocal %165 {approx = true} : vector<32x128xf32> -> vector<32x128xf32>
    %167 = math.tanh %160 : vector<32x128xf32>
    %168 = vector.extract_strided_slice %166 {offsets = [0, 0], sizes = [8, 128], strides = [1, 1]} : vector<32x128xf32> to vector<8x128xf32>
    %169 = vector.extract_strided_slice %166 {offsets = [8, 0], sizes = [8, 128], strides = [1, 1]} : vector<32x128xf32> to vector<8x128xf32>
    %170 = vector.extract_strided_slice %167 {offsets = [16, 0], sizes = [8, 128], strides = [1, 1]} : vector<32x128xf32> to vector<8x128xf32>
    %171 = vector.extract_strided_slice %166 {offsets = [24, 0], sizes = [8, 128], strides = [1, 1]} : vector<32x128xf32> to vector<8x128xf32>
    %172 = arith.mulf %169, %129 : vector<8x128xf32>
    %173 = arith.mulf %168, %170 : vector<8x128xf32>
    %174 = arith.addf %172, %173 : vector<8x128xf32>
    %175 = math.tanh %174 : vector<8x128xf32>
    %176 = arith.mulf %171, %175 : vector<8x128xf32>
    %cst_56 = arith.constant dense<0.000000e+00> : vector<32x128xf32>
    %177 = tpu.matmul %6, %176, %cst_56 {dimension_numbers = #tpu.dot_dimension_numbers<[1], [0], [0], [1], [0, 0, 1, 1], [], []>} : vector<32x8xf32>, vector<8x128xf32>, vector<32x128xf32> -> vector<32x128xf32>
    %178 = arith.addf %154, %177 : vector<32x128xf32>
    %cst_57 = arith.constant 0.000000e+00 : f32
    %179 = vector.broadcast %cst_57 : f32 to vector<32x128xf32>
    %180 = arith.subf %179, %178 : vector<32x128xf32>
    %181 = math.exp %180 : vector<32x128xf32>
    %cst_58 = arith.constant 1.000000e+00 : f32
    %182 = vector.broadcast %cst_58 : f32 to vector<32x128xf32>
    %183 = arith.addf %182, %181 : vector<32x128xf32>
    %184 = tpu.reciprocal %183 {approx = true} : vector<32x128xf32> -> vector<32x128xf32>
    %185 = math.tanh %178 : vector<32x128xf32>
    %186 = vector.extract_strided_slice %184 {offsets = [0, 0], sizes = [8, 128], strides = [1, 1]} : vector<32x128xf32> to vector<8x128xf32>
    %187 = vector.extract_strided_slice %184 {offsets = [8, 0], sizes = [8, 128], strides = [1, 1]} : vector<32x128xf32> to vector<8x128xf32>
    %188 = vector.extract_strided_slice %185 {offsets = [16, 0], sizes = [8, 128], strides = [1, 1]} : vector<32x128xf32> to vector<8x128xf32>
    %189 = vector.extract_strided_slice %184 {offsets = [24, 0], sizes = [8, 128], strides = [1, 1]} : vector<32x128xf32> to vector<8x128xf32>
    %190 = arith.mulf %187, %147 : vector<8x128xf32>
    %191 = arith.mulf %186, %188 : vector<8x128xf32>
    %192 = arith.addf %190, %191 : vector<8x128xf32>
    %193 = math.tanh %192 : vector<8x128xf32>
    %194 = arith.mulf %189, %193 : vector<8x128xf32>
    %c3_59 = arith.constant 3 : index
    %c0_60 = arith.constant 0 : index
    %c0_61 = arith.constant 0 : index
    %195 = vector.load %arg9[%c3_59, %c0_60, %c0_61] : memref<8x8x128xf32, #tpu.memory_space<vmem>>, vector<1x8x128xf32>
    %196 = vector.shape_cast %195 : vector<1x8x128xf32> to vector<8x128xf32>
    %197 = vector.shape_cast %194 : vector<8x128xf32> to vector<1x8x128xf32>
    tpu.vector_store %arg9[%c3_59, %c0_60, %c0_61], %197 {strides = array<i32>} : memref<8x8x128xf32, #tpu.memory_space<vmem>>, vector<1x8x128xf32>,
    %cst_62 = arith.constant dense<0.000000e+00> : vector<32x128xf32>
    %198 = tpu.matmul %7, %194, %cst_62 {dimension_numbers = #tpu.dot_dimension_numbers<[1], [0], [0], [1], [0, 0, 1, 1], [], []>} : vector<32x8xf32>, vector<8x128xf32>, vector<32x128xf32> -> vector<32x128xf32>
    %199 = arith.addf %198, %8 : vector<32x128xf32>
    %200 = vector.extract_strided_slice %9 {offsets = [4, 0], sizes = [1, 128], strides = [1, 1]} : vector<8x128xf32> to vector<1x128xf32>
    %201 = vector.broadcast %200 : vector<1x128xf32> to vector<32x128xf32>
    %202 = arith.mulf %3, %201 : vector<32x128xf32>
    %203 = arith.addf %202, %4 : vector<32x128xf32>
    %cst_63 = arith.constant dense<0.000000e+00> : vector<32x128xf32>
    %204 = tpu.matmul %5, %176, %cst_63 {dimension_numbers = #tpu.dot_dimension_numbers<[1], [0], [0], [1], [0, 0, 1, 1], [], []>} : vector<32x8xf32>, vector<8x128xf32>, vector<32x128xf32> -> vector<32x128xf32>
    %205 = arith.addf %203, %204 : vector<32x128xf32>
    %cst_64 = arith.constant 0.000000e+00 : f32
    %206 = vector.broadcast %cst_64 : f32 to vector<32x128xf32>
    %207 = arith.subf %206, %205 : vector<32x128xf32>
    %208 = math.exp %207 : vector<32x128xf32>
    %cst_65 = arith.constant 1.000000e+00 : f32
    %209 = vector.broadcast %cst_65 : f32 to vector<32x128xf32>
    %210 = arith.addf %209, %208 : vector<32x128xf32>
    %211 = tpu.reciprocal %210 {approx = true} : vector<32x128xf32> -> vector<32x128xf32>
    %212 = math.tanh %205 : vector<32x128xf32>
    %213 = vector.extract_strided_slice %211 {offsets = [0, 0], sizes = [8, 128], strides = [1, 1]} : vector<32x128xf32> to vector<8x128xf32>
    %214 = vector.extract_strided_slice %211 {offsets = [8, 0], sizes = [8, 128], strides = [1, 1]} : vector<32x128xf32> to vector<8x128xf32>
    %215 = vector.extract_strided_slice %212 {offsets = [16, 0], sizes = [8, 128], strides = [1, 1]} : vector<32x128xf32> to vector<8x128xf32>
    %216 = vector.extract_strided_slice %211 {offsets = [24, 0], sizes = [8, 128], strides = [1, 1]} : vector<32x128xf32> to vector<8x128xf32>
    %217 = arith.mulf %214, %174 : vector<8x128xf32>
    %218 = arith.mulf %213, %215 : vector<8x128xf32>
    %219 = arith.addf %217, %218 : vector<8x128xf32>
    %220 = math.tanh %219 : vector<8x128xf32>
    %221 = arith.mulf %216, %220 : vector<8x128xf32>
    %cst_66 = arith.constant dense<0.000000e+00> : vector<32x128xf32>
    %222 = tpu.matmul %6, %221, %cst_66 {dimension_numbers = #tpu.dot_dimension_numbers<[1], [0], [0], [1], [0, 0, 1, 1], [], []>} : vector<32x8xf32>, vector<8x128xf32>, vector<32x128xf32> -> vector<32x128xf32>
    %223 = arith.addf %199, %222 : vector<32x128xf32>
    %cst_67 = arith.constant 0.000000e+00 : f32
    %224 = vector.broadcast %cst_67 : f32 to vector<32x128xf32>
    %225 = arith.subf %224, %223 : vector<32x128xf32>
    %226 = math.exp %225 : vector<32x128xf32>
    %cst_68 = arith.constant 1.000000e+00 : f32
    %227 = vector.broadcast %cst_68 : f32 to vector<32x128xf32>
    %228 = arith.addf %227, %226 : vector<32x128xf32>
    %229 = tpu.reciprocal %228 {approx = true} : vector<32x128xf32> -> vector<32x128xf32>
    %230 = math.tanh %223 : vector<32x128xf32>
    %231 = vector.extract_strided_slice %229 {offsets = [0, 0], sizes = [8, 128], strides = [1, 1]} : vector<32x128xf32> to vector<8x128xf32>
    %232 = vector.extract_strided_slice %229 {offsets = [8, 0], sizes = [8, 128], strides = [1, 1]} : vector<32x128xf32> to vector<8x128xf32>
    %233 = vector.extract_strided_slice %230 {offsets = [16, 0], sizes = [8, 128], strides = [1, 1]} : vector<32x128xf32> to vector<8x128xf32>
    %234 = vector.extract_strided_slice %229 {offsets = [24, 0], sizes = [8, 128], strides = [1, 1]} : vector<32x128xf32> to vector<8x128xf32>
    %235 = arith.mulf %232, %192 : vector<8x128xf32>
    %236 = arith.mulf %231, %233 : vector<8x128xf32>
    %237 = arith.addf %235, %236 : vector<8x128xf32>
    %238 = math.tanh %237 : vector<8x128xf32>
    %239 = arith.mulf %234, %238 : vector<8x128xf32>
    %c4 = arith.constant 4 : index
    %c0_69 = arith.constant 0 : index
    %c0_70 = arith.constant 0 : index
    %240 = vector.load %arg9[%c4, %c0_69, %c0_70] : memref<8x8x128xf32, #tpu.memory_space<vmem>>, vector<1x8x128xf32>
    %241 = vector.shape_cast %240 : vector<1x8x128xf32> to vector<8x128xf32>
    %242 = vector.shape_cast %239 : vector<8x128xf32> to vector<1x8x128xf32>
    tpu.vector_store %arg9[%c4, %c0_69, %c0_70], %242 {strides = array<i32>} : memref<8x8x128xf32, #tpu.memory_space<vmem>>, vector<1x8x128xf32>,
    %cst_71 = arith.constant dense<0.000000e+00> : vector<32x128xf32>
    %243 = tpu.matmul %7, %239, %cst_71 {dimension_numbers = #tpu.dot_dimension_numbers<[1], [0], [0], [1], [0, 0, 1, 1], [], []>} : vector<32x8xf32>, vector<8x128xf32>, vector<32x128xf32> -> vector<32x128xf32>
    %244 = arith.addf %243, %8 : vector<32x128xf32>
    %245 = vector.extract_strided_slice %9 {offsets = [5, 0], sizes = [1, 128], strides = [1, 1]} : vector<8x128xf32> to vector<1x128xf32>
    %246 = vector.broadcast %245 : vector<1x128xf32> to vector<32x128xf32>
    %247 = arith.mulf %3, %246 : vector<32x128xf32>
    %248 = arith.addf %247, %4 : vector<32x128xf32>
    %cst_72 = arith.constant dense<0.000000e+00> : vector<32x128xf32>
    %249 = tpu.matmul %5, %221, %cst_72 {dimension_numbers = #tpu.dot_dimension_numbers<[1], [0], [0], [1], [0, 0, 1, 1], [], []>} : vector<32x8xf32>, vector<8x128xf32>, vector<32x128xf32> -> vector<32x128xf32>
    %250 = arith.addf %248, %249 : vector<32x128xf32>
    %cst_73 = arith.constant 0.000000e+00 : f32
    %251 = vector.broadcast %cst_73 : f32 to vector<32x128xf32>
    %252 = arith.subf %251, %250 : vector<32x128xf32>
    %253 = math.exp %252 : vector<32x128xf32>
    %cst_74 = arith.constant 1.000000e+00 : f32
    %254 = vector.broadcast %cst_74 : f32 to vector<32x128xf32>
    %255 = arith.addf %254, %253 : vector<32x128xf32>
    %256 = tpu.reciprocal %255 {approx = true} : vector<32x128xf32> -> vector<32x128xf32>
    %257 = math.tanh %250 : vector<32x128xf32>
    %258 = vector.extract_strided_slice %256 {offsets = [0, 0], sizes = [8, 128], strides = [1, 1]} : vector<32x128xf32> to vector<8x128xf32>
    %259 = vector.extract_strided_slice %256 {offsets = [8, 0], sizes = [8, 128], strides = [1, 1]} : vector<32x128xf32> to vector<8x128xf32>
    %260 = vector.extract_strided_slice %257 {offsets = [16, 0], sizes = [8, 128], strides = [1, 1]} : vector<32x128xf32> to vector<8x128xf32>
    %261 = vector.extract_strided_slice %256 {offsets = [24, 0], sizes = [8, 128], strides = [1, 1]} : vector<32x128xf32> to vector<8x128xf32>
    %262 = arith.mulf %259, %219 : vector<8x128xf32>
    %263 = arith.mulf %258, %260 : vector<8x128xf32>
    %264 = arith.addf %262, %263 : vector<8x128xf32>
    %265 = math.tanh %264 : vector<8x128xf32>
    %266 = arith.mulf %261, %265 : vector<8x128xf32>
    %cst_75 = arith.constant dense<0.000000e+00> : vector<32x128xf32>
    %267 = tpu.matmul %6, %266, %cst_75 {dimension_numbers = #tpu.dot_dimension_numbers<[1], [0], [0], [1], [0, 0, 1, 1], [], []>} : vector<32x8xf32>, vector<8x128xf32>, vector<32x128xf32> -> vector<32x128xf32>
    %268 = arith.addf %244, %267 : vector<32x128xf32>
    %cst_76 = arith.constant 0.000000e+00 : f32
    %269 = vector.broadcast %cst_76 : f32 to vector<32x128xf32>
    %270 = arith.subf %269, %268 : vector<32x128xf32>
    %271 = math.exp %270 : vector<32x128xf32>
    %cst_77 = arith.constant 1.000000e+00 : f32
    %272 = vector.broadcast %cst_77 : f32 to vector<32x128xf32>
    %273 = arith.addf %272, %271 : vector<32x128xf32>
    %274 = tpu.reciprocal %273 {approx = true} : vector<32x128xf32> -> vector<32x128xf32>
    %275 = math.tanh %268 : vector<32x128xf32>
    %276 = vector.extract_strided_slice %274 {offsets = [0, 0], sizes = [8, 128], strides = [1, 1]} : vector<32x128xf32> to vector<8x128xf32>
    %277 = vector.extract_strided_slice %274 {offsets = [8, 0], sizes = [8, 128], strides = [1, 1]} : vector<32x128xf32> to vector<8x128xf32>
    %278 = vector.extract_strided_slice %275 {offsets = [16, 0], sizes = [8, 128], strides = [1, 1]} : vector<32x128xf32> to vector<8x128xf32>
    %279 = vector.extract_strided_slice %274 {offsets = [24, 0], sizes = [8, 128], strides = [1, 1]} : vector<32x128xf32> to vector<8x128xf32>
    %280 = arith.mulf %277, %237 : vector<8x128xf32>
    %281 = arith.mulf %276, %278 : vector<8x128xf32>
    %282 = arith.addf %280, %281 : vector<8x128xf32>
    %283 = math.tanh %282 : vector<8x128xf32>
    %284 = arith.mulf %279, %283 : vector<8x128xf32>
    %c5 = arith.constant 5 : index
    %c0_78 = arith.constant 0 : index
    %c0_79 = arith.constant 0 : index
    %285 = vector.load %arg9[%c5, %c0_78, %c0_79] : memref<8x8x128xf32, #tpu.memory_space<vmem>>, vector<1x8x128xf32>
    %286 = vector.shape_cast %285 : vector<1x8x128xf32> to vector<8x128xf32>
    %287 = vector.shape_cast %284 : vector<8x128xf32> to vector<1x8x128xf32>
    tpu.vector_store %arg9[%c5, %c0_78, %c0_79], %287 {strides = array<i32>} : memref<8x8x128xf32, #tpu.memory_space<vmem>>, vector<1x8x128xf32>,
    %cst_80 = arith.constant dense<0.000000e+00> : vector<32x128xf32>
    %288 = tpu.matmul %7, %284, %cst_80 {dimension_numbers = #tpu.dot_dimension_numbers<[1], [0], [0], [1], [0, 0, 1, 1], [], []>} : vector<32x8xf32>, vector<8x128xf32>, vector<32x128xf32> -> vector<32x128xf32>
    %289 = arith.addf %288, %8 : vector<32x128xf32>
    %290 = vector.extract_strided_slice %9 {offsets = [6, 0], sizes = [1, 128], strides = [1, 1]} : vector<8x128xf32> to vector<1x128xf32>
    %291 = vector.broadcast %290 : vector<1x128xf32> to vector<32x128xf32>
    %292 = arith.mulf %3, %291 : vector<32x128xf32>
    %293 = arith.addf %292, %4 : vector<32x128xf32>
    %cst_81 = arith.constant dense<0.000000e+00> : vector<32x128xf32>
    %294 = tpu.matmul %5, %266, %cst_81 {dimension_numbers = #tpu.dot_dimension_numbers<[1], [0], [0], [1], [0, 0, 1, 1], [], []>} : vector<32x8xf32>, vector<8x128xf32>, vector<32x128xf32> -> vector<32x128xf32>
    %295 = arith.addf %293, %294 : vector<32x128xf32>
    %cst_82 = arith.constant 0.000000e+00 : f32
    %296 = vector.broadcast %cst_82 : f32 to vector<32x128xf32>
    %297 = arith.subf %296, %295 : vector<32x128xf32>
    %298 = math.exp %297 : vector<32x128xf32>
    %cst_83 = arith.constant 1.000000e+00 : f32
    %299 = vector.broadcast %cst_83 : f32 to vector<32x128xf32>
    %300 = arith.addf %299, %298 : vector<32x128xf32>
    %301 = tpu.reciprocal %300 {approx = true} : vector<32x128xf32> -> vector<32x128xf32>
    %302 = math.tanh %295 : vector<32x128xf32>
    %303 = vector.extract_strided_slice %301 {offsets = [0, 0], sizes = [8, 128], strides = [1, 1]} : vector<32x128xf32> to vector<8x128xf32>
    %304 = vector.extract_strided_slice %301 {offsets = [8, 0], sizes = [8, 128], strides = [1, 1]} : vector<32x128xf32> to vector<8x128xf32>
    %305 = vector.extract_strided_slice %302 {offsets = [16, 0], sizes = [8, 128], strides = [1, 1]} : vector<32x128xf32> to vector<8x128xf32>
    %306 = vector.extract_strided_slice %301 {offsets = [24, 0], sizes = [8, 128], strides = [1, 1]} : vector<32x128xf32> to vector<8x128xf32>
    %307 = arith.mulf %304, %264 : vector<8x128xf32>
    %308 = arith.mulf %303, %305 : vector<8x128xf32>
    %309 = arith.addf %307, %308 : vector<8x128xf32>
    %310 = math.tanh %309 : vector<8x128xf32>
    %311 = arith.mulf %306, %310 : vector<8x128xf32>
    %cst_84 = arith.constant dense<0.000000e+00> : vector<32x128xf32>
    %312 = tpu.matmul %6, %311, %cst_84 {dimension_numbers = #tpu.dot_dimension_numbers<[1], [0], [0], [1], [0, 0, 1, 1], [], []>} : vector<32x8xf32>, vector<8x128xf32>, vector<32x128xf32> -> vector<32x128xf32>
    %313 = arith.addf %289, %312 : vector<32x128xf32>
    %cst_85 = arith.constant 0.000000e+00 : f32
    %314 = vector.broadcast %cst_85 : f32 to vector<32x128xf32>
    %315 = arith.subf %314, %313 : vector<32x128xf32>
    %316 = math.exp %315 : vector<32x128xf32>
    %cst_86 = arith.constant 1.000000e+00 : f32
    %317 = vector.broadcast %cst_86 : f32 to vector<32x128xf32>
    %318 = arith.addf %317, %316 : vector<32x128xf32>
    %319 = tpu.reciprocal %318 {approx = true} : vector<32x128xf32> -> vector<32x128xf32>
    %320 = math.tanh %313 : vector<32x128xf32>
    %321 = vector.extract_strided_slice %319 {offsets = [0, 0], sizes = [8, 128], strides = [1, 1]} : vector<32x128xf32> to vector<8x128xf32>
    %322 = vector.extract_strided_slice %319 {offsets = [8, 0], sizes = [8, 128], strides = [1, 1]} : vector<32x128xf32> to vector<8x128xf32>
    %323 = vector.extract_strided_slice %320 {offsets = [16, 0], sizes = [8, 128], strides = [1, 1]} : vector<32x128xf32> to vector<8x128xf32>
    %324 = vector.extract_strided_slice %319 {offsets = [24, 0], sizes = [8, 128], strides = [1, 1]} : vector<32x128xf32> to vector<8x128xf32>
    %325 = arith.mulf %322, %282 : vector<8x128xf32>
    %326 = arith.mulf %321, %323 : vector<8x128xf32>
    %327 = arith.addf %325, %326 : vector<8x128xf32>
    %328 = math.tanh %327 : vector<8x128xf32>
    %329 = arith.mulf %324, %328 : vector<8x128xf32>
    %c6 = arith.constant 6 : index
    %c0_87 = arith.constant 0 : index
    %c0_88 = arith.constant 0 : index
    %330 = vector.load %arg9[%c6, %c0_87, %c0_88] : memref<8x8x128xf32, #tpu.memory_space<vmem>>, vector<1x8x128xf32>
    %331 = vector.shape_cast %330 : vector<1x8x128xf32> to vector<8x128xf32>
    %332 = vector.shape_cast %329 : vector<8x128xf32> to vector<1x8x128xf32>
    tpu.vector_store %arg9[%c6, %c0_87, %c0_88], %332 {strides = array<i32>} : memref<8x8x128xf32, #tpu.memory_space<vmem>>, vector<1x8x128xf32>,
    %cst_89 = arith.constant dense<0.000000e+00> : vector<32x128xf32>
    %333 = tpu.matmul %7, %329, %cst_89 {dimension_numbers = #tpu.dot_dimension_numbers<[1], [0], [0], [1], [0, 0, 1, 1], [], []>} : vector<32x8xf32>, vector<8x128xf32>, vector<32x128xf32> -> vector<32x128xf32>
    %334 = arith.addf %333, %8 : vector<32x128xf32>
    %335 = vector.extract_strided_slice %9 {offsets = [7, 0], sizes = [1, 128], strides = [1, 1]} : vector<8x128xf32> to vector<1x128xf32>
    %336 = vector.broadcast %335 : vector<1x128xf32> to vector<32x128xf32>
    %337 = arith.mulf %3, %336 : vector<32x128xf32>
    %338 = arith.addf %337, %4 : vector<32x128xf32>
    %cst_90 = arith.constant dense<0.000000e+00> : vector<32x128xf32>
    %339 = tpu.matmul %5, %311, %cst_90 {dimension_numbers = #tpu.dot_dimension_numbers<[1], [0], [0], [1], [0, 0, 1, 1], [], []>} : vector<32x8xf32>, vector<8x128xf32>, vector<32x128xf32> -> vector<32x128xf32>
    %340 = arith.addf %338, %339 : vector<32x128xf32>
    %cst_91 = arith.constant 0.000000e+00 : f32
    %341 = vector.broadcast %cst_91 : f32 to vector<32x128xf32>
    %342 = arith.subf %341, %340 : vector<32x128xf32>
    %343 = math.exp %342 : vector<32x128xf32>
    %cst_92 = arith.constant 1.000000e+00 : f32
    %344 = vector.broadcast %cst_92 : f32 to vector<32x128xf32>
    %345 = arith.addf %344, %343 : vector<32x128xf32>
    %346 = tpu.reciprocal %345 {approx = true} : vector<32x128xf32> -> vector<32x128xf32>
    %347 = math.tanh %340 : vector<32x128xf32>
    %348 = vector.extract_strided_slice %346 {offsets = [0, 0], sizes = [8, 128], strides = [1, 1]} : vector<32x128xf32> to vector<8x128xf32>
    %349 = vector.extract_strided_slice %346 {offsets = [8, 0], sizes = [8, 128], strides = [1, 1]} : vector<32x128xf32> to vector<8x128xf32>
    %350 = vector.extract_strided_slice %347 {offsets = [16, 0], sizes = [8, 128], strides = [1, 1]} : vector<32x128xf32> to vector<8x128xf32>
    %351 = vector.extract_strided_slice %346 {offsets = [24, 0], sizes = [8, 128], strides = [1, 1]} : vector<32x128xf32> to vector<8x128xf32>
    %352 = arith.mulf %349, %309 : vector<8x128xf32>
    %353 = arith.mulf %348, %350 : vector<8x128xf32>
    %354 = arith.addf %352, %353 : vector<8x128xf32>
    %355 = math.tanh %354 : vector<8x128xf32>
    %356 = arith.mulf %351, %355 : vector<8x128xf32>
    %cst_93 = arith.constant dense<0.000000e+00> : vector<32x128xf32>
    %357 = tpu.matmul %6, %356, %cst_93 {dimension_numbers = #tpu.dot_dimension_numbers<[1], [0], [0], [1], [0, 0, 1, 1], [], []>} : vector<32x8xf32>, vector<8x128xf32>, vector<32x128xf32> -> vector<32x128xf32>
    %358 = arith.addf %334, %357 : vector<32x128xf32>
    %cst_94 = arith.constant 0.000000e+00 : f32
    %359 = vector.broadcast %cst_94 : f32 to vector<32x128xf32>
    %360 = arith.subf %359, %358 : vector<32x128xf32>
    %361 = math.exp %360 : vector<32x128xf32>
    %cst_95 = arith.constant 1.000000e+00 : f32
    %362 = vector.broadcast %cst_95 : f32 to vector<32x128xf32>
    %363 = arith.addf %362, %361 : vector<32x128xf32>
    %364 = tpu.reciprocal %363 {approx = true} : vector<32x128xf32> -> vector<32x128xf32>
    %365 = math.tanh %358 : vector<32x128xf32>
    %366 = vector.extract_strided_slice %364 {offsets = [0, 0], sizes = [8, 128], strides = [1, 1]} : vector<32x128xf32> to vector<8x128xf32>
    %367 = vector.extract_strided_slice %364 {offsets = [8, 0], sizes = [8, 128], strides = [1, 1]} : vector<32x128xf32> to vector<8x128xf32>
    %368 = vector.extract_strided_slice %365 {offsets = [16, 0], sizes = [8, 128], strides = [1, 1]} : vector<32x128xf32> to vector<8x128xf32>
    %369 = vector.extract_strided_slice %364 {offsets = [24, 0], sizes = [8, 128], strides = [1, 1]} : vector<32x128xf32> to vector<8x128xf32>
    %370 = arith.mulf %367, %327 : vector<8x128xf32>
    %371 = arith.mulf %366, %368 : vector<8x128xf32>
    %372 = arith.addf %370, %371 : vector<8x128xf32>
    %373 = math.tanh %372 : vector<8x128xf32>
    %374 = arith.mulf %369, %373 : vector<8x128xf32>
    %c7 = arith.constant 7 : index
    %c0_96 = arith.constant 0 : index
    %c0_97 = arith.constant 0 : index
    %375 = vector.load %arg9[%c7, %c0_96, %c0_97] : memref<8x8x128xf32, #tpu.memory_space<vmem>>, vector<1x8x128xf32>
    %376 = vector.shape_cast %375 : vector<1x8x128xf32> to vector<8x128xf32>
    %377 = vector.shape_cast %374 : vector<8x128xf32> to vector<1x8x128xf32>
    tpu.vector_store %arg9[%c7, %c0_96, %c0_97], %377 {strides = array<i32>} : memref<8x8x128xf32, #tpu.memory_space<vmem>>, vector<1x8x128xf32>,
    %c0_98 = arith.constant 0 : index
    %c0_99 = arith.constant 0 : index
    %c0_100 = arith.constant 0 : index
    %378 = vector.load %arg10[%c0_98, %c0_99, %c0_100] : memref<4x8x128xf32, #tpu.memory_space<vmem>>, vector<1x8x128xf32>
    %379 = vector.shape_cast %378 : vector<1x8x128xf32> to vector<8x128xf32>
    %380 = vector.shape_cast %356 : vector<8x128xf32> to vector<1x8x128xf32>
    tpu.vector_store %arg10[%c0_98, %c0_99, %c0_100], %380 {strides = array<i32>} : memref<4x8x128xf32, #tpu.memory_space<vmem>>, vector<1x8x128xf32>,
    %c1_101 = arith.constant 1 : index
    %c0_102 = arith.constant 0 : index
    %c0_103 = arith.constant 0 : index
    %381 = vector.load %arg10[%c1_101, %c0_102, %c0_103] : memref<4x8x128xf32, #tpu.memory_space<vmem>>, vector<1x8x128xf32>
    %382 = vector.shape_cast %381 : vector<1x8x128xf32> to vector<8x128xf32>
    %383 = vector.shape_cast %354 : vector<8x128xf32> to vector<1x8x128xf32>
    tpu.vector_store %arg10[%c1_101, %c0_102, %c0_103], %383 {strides = array<i32>} : memref<4x8x128xf32, #tpu.memory_space<vmem>>, vector<1x8x128xf32>,
    %c2_104 = arith.constant 2 : index
    %c0_105 = arith.constant 0 : index
    %c0_106 = arith.constant 0 : index
    %384 = vector.load %arg10[%c2_104, %c0_105, %c0_106] : memref<4x8x128xf32, #tpu.memory_space<vmem>>, vector<1x8x128xf32>
    %385 = vector.shape_cast %384 : vector<1x8x128xf32> to vector<8x128xf32>
    %386 = vector.shape_cast %374 : vector<8x128xf32> to vector<1x8x128xf32>
    tpu.vector_store %arg10[%c2_104, %c0_105, %c0_106], %386 {strides = array<i32>} : memref<4x8x128xf32, #tpu.memory_space<vmem>>, vector<1x8x128xf32>,
    %c3_107 = arith.constant 3 : index
    %c0_108 = arith.constant 0 : index
    %c0_109 = arith.constant 0 : index
    %387 = vector.load %arg10[%c3_107, %c0_108, %c0_109] : memref<4x8x128xf32, #tpu.memory_space<vmem>>, vector<1x8x128xf32>
    %388 = vector.shape_cast %387 : vector<1x8x128xf32> to vector<8x128xf32>
    %389 = vector.shape_cast %372 : vector<8x128xf32> to vector<1x8x128xf32>
    tpu.vector_store %arg10[%c3_107, %c0_108, %c0_109], %389 {strides = array<i32>} : memref<4x8x128xf32, #tpu.memory_space<vmem>>, vector<1x8x128xf32>,
    return
  }
  func.func @transform_0(%arg0: i32, %arg1: i32) -> (i32, i32) {
    %c0_i32 = arith.constant 0 : i32
    return %arg1, %arg0 : i32, i32
  }
  func.func @transform_1(%arg0: i32, %arg1: i32) -> (i32, i32) {
    %c0_i32 = arith.constant 0 : i32
    %c0_i32_0 = arith.constant 0 : i32
    %c0_i32_1 = arith.constant 0 : i32
    return %c0_i32, %c0_i32_0 : i32, i32
  }
  func.func @transform_2(%arg0: i32, %arg1: i32) -> (i32, i32) {
    %c0_i32 = arith.constant 0 : i32
    %c0_i32_0 = arith.constant 0 : i32
    %c0_i32_1 = arith.constant 0 : i32
    return %c0_i32, %c0_i32_0 : i32, i32
  }
  func.func @transform_3(%arg0: i32, %arg1: i32) -> (i32, i32) {
    %c0_i32 = arith.constant 0 : i32
    %c0_i32_0 = arith.constant 0 : i32
    %c0_i32_1 = arith.constant 0 : i32
    return %c0_i32, %c0_i32_0 : i32, i32
  }
  func.func @transform_4(%arg0: i32, %arg1: i32) -> (i32, i32) {
    %c0_i32 = arith.constant 0 : i32
    %c0_i32_0 = arith.constant 0 : i32
    %c0_i32_1 = arith.constant 0 : i32
    return %c0_i32, %c0_i32_0 : i32, i32
  }
  func.func @transform_5(%arg0: i32, %arg1: i32) -> (i32, i32) {
    %c0_i32 = arith.constant 0 : i32
    %c0_i32_0 = arith.constant 0 : i32
    %c0_i32_1 = arith.constant 0 : i32
    return %c0_i32, %c0_i32_0 : i32, i32
  }
  func.func @transform_6(%arg0: i32, %arg1: i32) -> (i32, i32) {
    %c0_i32 = arith.constant 0 : i32
    %c0_i32_0 = arith.constant 0 : i32
    %c0_i32_1 = arith.constant 0 : i32
    return %c0_i32, %c0_i32_0 : i32, i32
  }
  func.func @transform_7(%arg0: i32, %arg1: i32) -> (i32, i32, i32) {
    %c0_i32 = arith.constant 0 : i32
    %c0_i32_0 = arith.constant 0 : i32
    return %arg1, %c0_i32, %arg0 : i32, i32, i32
  }
}

</mosaic_0001>

<llo_original>
// kernel: tpu_custom_call.1
$region0: #{tpu_custom_call.1}
  #allocation0 [shape = 'u32[]', space=smem, size = 0x4, offset = 0x4, fixed_abs, tag = 'smem constant byte address 0x4 - core index']
  #allocation1 [shape = 'u32[144,128]{1,0:T(1,128)}', space=vmem, size = 0x12000, scoped, tag = 'internal scratch']
  #allocation2 [shape = 'f32[4,8,128]{2,1,0:T(8,128)}', space=vmem, size = 0x4000, scoped, tag = 'scratch operand']
  %s0 = inlined_call_operand.vmem [shape: f32[8,128], index: 0, kind: input, shape index: {}]
  %s1 = inlined_call_operand.vmem [shape: f32[32,128], index: 1, kind: input, shape index: {}]
  %s2 = inlined_call_operand.vmem [shape: f32[32,128], index: 2, kind: input, shape index: {}]
  %s3 = inlined_call_operand.vmem [shape: f32[32,8], index: 3, kind: input, shape index: {}]
  %s4 = inlined_call_operand.vmem [shape: f32[32,8], index: 4, kind: input, shape index: {}]
  %s5 = inlined_call_operand.vmem [shape: f32[32,8], index: 5, kind: input, shape index: {}]
  %s6 = inlined_call_operand.vmem [shape: f32[32,128], index: 6, kind: input, shape index: {}]
  %s7 = inlined_call_operand.hbm [shape: f32[8,8,128], index: 7, kind: output, shape index: {}]
  %s8 = sld [smem:[#allocation0]]
  $region42: #{tpu_custom_call.1} parent=0
    _
  %s10 = ssub.s32 1, %s8
  %s11 = scalar_select 0, %s10, %s8
  $region1: #{tpu_custom_call.1} parent=0
    #allocation3 [shape = 'u8[32768]{0}', space=vmem, size = 0x8000, scoped, tag = 'output window, operand 0, single buffered']
    #allocation4 [shape = 's32[1]{0}', space=sflag, size = 0x4, scoped, tag = 'scoped memory for tpu_custom_call.1']
    %12 = vsyncpa [#allocation4], 0
    // Predicated region
    $region2: #{tpu_custom_call.1} parent=1 // pred_check
      _
    $region3: #{tpu_custom_call.1} parent=1 // pred_check_branch
      %14 = sbr.rel (0) target = $region5
    $region4: #{tpu_custom_call.1} parent=1 // pred_region
      _
    $region5: #{tpu_custom_call.1} parent=1 // pred_fallthru
      _
    // Predicated region
    $region6: #{tpu_custom_call.1} parent=1 // pred_check
      _
    $region7: #{tpu_custom_call.1} parent=1 // pred_check_branch
      %16 = sbr.rel (0) target = $region9
    $region8: #{tpu_custom_call.1} parent=1 // pred_region
      _
    $region9: #{tpu_custom_call.1} parent=1 // pred_fallthru
      _
    // Predicated region
    $region10: #{tpu_custom_call.1} parent=1 // pred_check
      _
    $region11: #{tpu_custom_call.1} parent=1 // pred_check_branch
      %18 = sbr.rel (0) target = $region13
    $region12: #{tpu_custom_call.1} parent=1 // pred_region
      _
    $region13: #{tpu_custom_call.1} parent=1 // pred_fallthru
      _
    // Predicated region
    $region14: #{tpu_custom_call.1} parent=1 // pred_check
      _
    $region15: #{tpu_custom_call.1} parent=1 // pred_check_branch
      %20 = sbr.rel (0) target = $region17
    $region16: #{tpu_custom_call.1} parent=1 // pred_region
      _
    $region17: #{tpu_custom_call.1} parent=1 // pred_fallthru
      _
    // Predicated region
    $region18: #{tpu_custom_call.1} parent=1 // pred_check
      _
    $region19: #{tpu_custom_call.1} parent=1 // pred_check_branch
      %22 = sbr.rel (0) target = $region21
    $region20: #{tpu_custom_call.1} parent=1 // pred_region
      _
    $region21: #{tpu_custom_call.1} parent=1 // pred_fallthru
      _
    // Predicated region
    $region22: #{tpu_custom_call.1} parent=1 // pred_check
      _
    $region23: #{tpu_custom_call.1} parent=1 // pred_check_branch
      %24 = sbr.rel (0) target = $region25
    $region24: #{tpu_custom_call.1} parent=1 // pred_region
      _
    $region25: #{tpu_custom_call.1} parent=1 // pred_fallthru
      _
    // Predicated region
    $region26: #{tpu_custom_call.1} parent=1 // pred_check
      _
    $region27: #{tpu_custom_call.1} parent=1 // pred_check_branch
      %26 = sbr.rel (0) target = $region29
    $region28: #{tpu_custom_call.1} parent=1 // pred_region
      _
    $region29: #{tpu_custom_call.1} parent=1 // pred_fallthru
      _
    %p27 = scmp.eq.s32.totalorder 0, 0
    // Predicated region
    $region30: #{tpu_custom_call.1} parent=1 // pred_check
      %p28 = pneg %p27
    $region31: #{tpu_custom_call.1} parent=1 // pred_check_branch
      %30 = sbr.rel (%p28) target = $region33
    $region32: #{tpu_custom_call.1} parent=1 // pred_region
      %31 = vst [vmem:[#allocation2] sm:$0xff] 0.0
      %32 = vst [vmem:[#allocation2 + $0x8] sm:$0xff] 0.0
      %33 = vst [vmem:[#allocation2 + $0x10] sm:$0xff] 0.0
      %34 = vst [vmem:[#allocation2 + $0x18] sm:$0xff] 0.0
    $region33: #{tpu_custom_call.1} parent=1 // pred_fallthru
      _
    %v35 = vld [vmem:[%s1] sm:$0xff]
    %v36 = vld [vmem:[%s1 + $0x8] sm:$0xff]
    %v37 = vld [vmem:[%s1 + $0x10] sm:$0xff]
    %v38 = vld [vmem:[%s1 + $0x18] sm:$0xff]
    %v39 = vld [vmem:[%s2] sm:$0xff]
    %v40 = vld [vmem:[%s2 + $0x8] sm:$0xff]
    %v41 = vld [vmem:[%s2 + $0x10] sm:$0xff]
    %v42 = vld [vmem:[%s2 + $0x18] sm:$0xff]
    %v43 = vld [vmem:[%s3] sm:$0xff]
    %v44 = vld [vmem:[%s3 + $0x8] sm:$0xff]
    %v45 = vld [vmem:[%s3 + $0x10] sm:$0xff]
    %v46 = vld [vmem:[%s3 + $0x18] sm:$0xff]
    %v47 = vld [vmem:[%s4] sm:$0xff]
    %v48 = vld [vmem:[%s4 + $0x8] sm:$0xff]
    %v49 = vld [vmem:[%s4 + $0x10] sm:$0xff]
    %v50 = vld [vmem:[%s4 + $0x18] sm:$0xff]
    %v51 = vld [vmem:[%s5] sm:$0xff]
    %v52 = vld [vmem:[%s5 + $0x8] sm:$0xff]
    %v53 = vld [vmem:[%s5 + $0x10] sm:$0xff]
    %v54 = vld [vmem:[%s5 + $0x18] sm:$0xff]
    %v55 = vld [vmem:[%s6] sm:$0xff]
    %v56 = vld [vmem:[%s6 + $0x8] sm:$0xff]
    %v57 = vld [vmem:[%s6 + $0x10] sm:$0xff]
    %v58 = vld [vmem:[%s6 + $0x18] sm:$0xff]
    %v59 = vld [vmem:[%s0] sm:$0xff]
    %v60 = vld [vmem:[#allocation2] sm:$0xff]
    %s61 = scalar_lea.vmem [#allocation2], 8
    %v62 = vld [vmem:[%s61] sm:$0xff]
    %s63 = scalar_lea.vmem [#allocation2], 16
    %v64 = vld [vmem:[%s63] sm:$0xff]
    %s65 = scalar_lea.vmem [#allocation2], 24
    %v66 = vld [vmem:[%s65] sm:$0xff]
    %vm67 = vcmask 64512
    %v69 = vsel %vm67, %v51, 0
    %v72 = vsel %vm67, %v52, 0
    %v75 = vsel %vm67, %v53, 0
    %v78 = vsel %vm67, %v54, 0
    %80 = vmatprep.subr.mxu0 0.0
    %81 = vmatpush1.msra.mxu0 0.0
    %82 = vmatprep.subr.mxu0 0.0
    %83 = vmatpush1.msra.mxu0 0.0
    %84 = vmatprep.subr.mxu0 0.0
    %85 = vmatpush1.msra.mxu0 0.0
    %86 = vmatprep.subr.mxu0 0.0
    %87 = vmatpush1.msra.mxu0 0.0
    %88 = vmatprep.subr.mxu0 0.0
    %89 = vmatpush1.msra.mxu0 0.0
    %90 = vmatprep.subr.mxu0 0.0
    %91 = vmatpush1.msra.mxu0 0.0
    %92 = vmatprep.subr.mxu0 0.0
    %93 = vmatpush1.msra.mxu0 0.0
    %94 = vmatprep.subr.mxu0 0.0
    %95 = vmatpush1.msra.mxu0 0.0
    %96 = vmatprep.subr.mxu0 0.0
    %97 = vmatpush1.msra.mxu0 0.0
    %98 = vmatprep.subr.mxu0 0.0
    %99 = vmatpush1.msra.mxu0 0.0
    %100 = vmatprep.subr.mxu0 0.0
    %101 = vmatpush1.msra.mxu0 0.0
    %102 = vmatprep.subr.mxu0 0.0
    %103 = vmatpush1.msra.mxu0 0.0
    %104 = vmatprep.subr.mxu0 0.0
    %105 = vmatpush1.msra.mxu0 0.0
    %106 = vmatprep.subr.mxu0 0.0
    %107 = vmatpush1.msra.mxu0 0.0
    %108 = vmatprep.subr.mxu0 0.0
    %109 = vmatpush1.msra.mxu0 0.0
    %110 = vmatprep.subr.mxu0 0.0
    %111 = vmatpush1.msra.mxu0 %v64
    %112 = vmatprep.subr.mxu0 0.0
    %113 = vmatpush2.msra.mxu0 0.0
    %114 = vmatprep.subr.mxu0 0.0
    %115 = vmatpush2.msra.mxu0 0.0
    %116 = vmatprep.subr.mxu0 0.0
    %117 = vmatpush2.msra.mxu0 0.0
    %118 = vmatprep.subr.mxu0 0.0
    %119 = vmatpush2.msra.mxu0 0.0
    %120 = vmatprep.subr.mxu0 0.0
    %121 = vmatpush2.msra.mxu0 0.0
    %122 = vmatprep.subr.mxu0 0.0
    %123 = vmatpush2.msra.mxu0 0.0
    %124 = vmatprep.subr.mxu0 0.0
    %125 = vmatpush2.msra.mxu0 0.0
    %126 = vmatprep.subr.mxu0 0.0
    %127 = vmatpush2.msra.mxu0 0.0
    %128 = vmatprep.subr.mxu0 0.0
    %129 = vmatpush2.msra.mxu0 0.0
    %130 = vmatprep.subr.mxu0 0.0
    %131 = vmatpush2.msra.mxu0 0.0
    %132 = vmatprep.subr.mxu0 0.0
    %133 = vmatpush2.msra.mxu0 0.0
    %134 = vmatprep.subr.mxu0 0.0
    %135 = vmatpush2.msra.mxu0 0.0
    %136 = vmatprep.subr.mxu0 0.0
    %137 = vmatpush2.msra.mxu0 0.0
    %138 = vmatprep.subr.mxu0 0.0
    %139 = vmatpush2.msra.mxu0 0.0
    %140 = vmatprep.subr.mxu0 0.0
    %141 = vmatpush2.msra.mxu0 0.0
    %142 = vmatprep.subr.mxu0 0.0
    %143 = vmatpush2.msra.mxu0 0.0
    %144 = vmatprep.mubr.f32.mxu0 0.0
    %145 = vmatmul.mubr.f32.gmra.mxu0 %v69
    %v146 = vpop.f32.mrf.mxu0
    %v147 = vadd.f32 %v55, %v146
    %v148 = vpop.f32.mrf.mxu0
    %149 = vmatprep.mubr.f32.mxu0 0.0
    %150 = vmatmul.mubr.f32.gmra.mxu0 %v72
    %v151 = vpop.f32.mrf.mxu0
    %v152 = vadd.f32 %v56, %v151
    %v153 = vpop.f32.mrf.mxu0
    %154 = vmatprep.mubr.f32.mxu0 0.0
    %155 = vmatmul.mubr.f32.gmra.mxu0 %v75
    %v156 = vpop.f32.mrf.mxu0
    %v157 = vadd.f32 %v57, %v156
    %v158 = vpop.f32.mrf.mxu0
    %159 = vmatprep.mubr.f32.mxu0 0.0
    %160 = vmatmul.mubr.f32.gmra.mxu0 %v78
    %v161 = vpop.f32.mrf.mxu0
    %v162 = vadd.f32 %v58, %v161
    %v163 = vpop.f32.mrf.mxu0
    %164 = vdwg.mxu0
    %v165 = vlaneseq
    %v166 = vshrl.u32 %v165, 7
    %v167 = vsub.s32 0, %v166
    %v168 = vrot.slane %v59, %v167
    %v169 = vmul.f32 %v35, %v168
    %v170 = vmul.f32 %v36, %v168
    %v171 = vmul.f32 %v37, %v168
    %v172 = vmul.f32 %v38, %v168
    %v173 = vadd.f32 %v169, %v39
    %v174 = vadd.f32 %v170, %v40
    %v175 = vadd.f32 %v171, %v41
    %v176 = vadd.f32 %v172, %v42
    %v178 = vsel %vm67, %v43, 0
    %v181 = vsel %vm67, %v44, 0
    %v184 = vsel %vm67, %v45, 0
    %v187 = vsel %vm67, %v46, 0
    %189 = vmatprep.subr.mxu0 0.0
    %190 = vmatpush1.msra.mxu0 0.0
    %191 = vmatprep.subr.mxu0 0.0
    %192 = vmatpush1.msra.mxu0 0.0
    %193 = vmatprep.subr.mxu0 0.0
    %194 = vmatpush1.msra.mxu0 0.0
    %195 = vmatprep.subr.mxu0 0.0
    %196 = vmatpush1.msra.mxu0 0.0
    %197 = vmatprep.subr.mxu0 0.0
    %198 = vmatpush1.msra.mxu0 0.0
    %199 = vmatprep.subr.mxu0 0.0
    %200 = vmatpush1.msra.mxu0 0.0
    %201 = vmatprep.subr.mxu0 0.0
    %202 = vmatpush1.msra.mxu0 0.0
    %203 = vmatprep.subr.mxu0 0.0
    %204 = vmatpush1.msra.mxu0 0.0
    %205 = vmatprep.subr.mxu0 0.0
    %206 = vmatpush1.msra.mxu0 0.0
    %207 = vmatprep.subr.mxu0 0.0
    %208 = vmatpush1.msra.mxu0 0.0
    %209 = vmatprep.subr.mxu0 0.0
    %210 = vmatpush1.msra.mxu0 0.0
    %211 = vmatprep.subr.mxu0 0.0
    %212 = vmatpush1.msra.mxu0 0.0
    %213 = vmatprep.subr.mxu0 0.0
    %214 = vmatpush1.msra.mxu0 0.0
    %215 = vmatprep.subr.mxu0 0.0
    %216 = vmatpush1.msra.mxu0 0.0
    %217 = vmatprep.subr.mxu0 0.0
    %218 = vmatpush1.msra.mxu0 0.0
    %219 = vmatprep.subr.mxu0 0.0
    %220 = vmatpush1.msra.mxu0 %v60
    %221 = vmatprep.subr.mxu0 0.0
    %222 = vmatpush2.msra.mxu0 0.0
    %223 = vmatprep.subr.mxu0 0.0
    %224 = vmatpush2.msra.mxu0 0.0
    %225 = vmatprep.subr.mxu0 0.0
    %226 = vmatpush2.msra.mxu0 0.0
    %227 = vmatprep.subr.mxu0 0.0
    %228 = vmatpush2.msra.mxu0 0.0
    %229 = vmatprep.subr.mxu0 0.0
    %230 = vmatpush2.msra.mxu0 0.0
    %231 = vmatprep.subr.mxu0 0.0
    %232 = vmatpush2.msra.mxu0 0.0
    %233 = vmatprep.subr.mxu0 0.0
    %234 = vmatpush2.msra.mxu0 0.0
    %235 = vmatprep.subr.mxu0 0.0
    %236 = vmatpush2.msra.mxu0 0.0
    %237 = vmatprep.subr.mxu0 0.0
    %238 = vmatpush2.msra.mxu0 0.0
    %239 = vmatprep.subr.mxu0 0.0
    %240 = vmatpush2.msra.mxu0 0.0
    %241 = vmatprep.subr.mxu0 0.0
    %242 = vmatpush2.msra.mxu0 0.0
    %243 = vmatprep.subr.mxu0 0.0
    %244 = vmatpush2.msra.mxu0 0.0
    %245 = vmatprep.subr.mxu0 0.0
    %246 = vmatpush2.msra.mxu0 0.0
    %247 = vmatprep.subr.mxu0 0.0
    %248 = vmatpush2.msra.mxu0 0.0
    %249 = vmatprep.subr.mxu0 0.0
    %250 = vmatpush2.msra.mxu0 0.0
    %251 = vmatprep.subr.mxu0 0.0
    %252 = vmatpush2.msra.mxu0 0.0
    %253 = vmatprep.mubr.f32.mxu0 0.0
    %254 = vmatmul.mubr.f32.gmra.mxu0 %v178
    %v255 = vpop.f32.mrf.mxu0
    %v256 = vadd.f32 0.0, %v255
    %v257 = vpop.f32.mrf.mxu0
    %258 = vmatprep.mubr.f32.mxu0 0.0
    %259 = vmatmul.mubr.f32.gmra.mxu0 %v181
    %v260 = vpop.f32.mrf.mxu0
    %v261 = vadd.f32 0.0, %v260
    %v262 = vpop.f32.mrf.mxu0
    %263 = vmatprep.mubr.f32.mxu0 0.0
    %264 = vmatmul.mubr.f32.gmra.mxu0 %v184
    %v265 = vpop.f32.mrf.mxu0
    %v266 = vadd.f32 0.0, %v265
    %v267 = vpop.f32.mrf.mxu0
    %268 = vmatprep.mubr.f32.mxu0 0.0
    %269 = vmatmul.mubr.f32.gmra.mxu0 %v187
    %v270 = vpop.f32.mrf.mxu0
    %v271 = vadd.f32 0.0, %v270
    %v272 = vpop.f32.mrf.mxu0
    %273 = vdwg.mxu0
    %v274 = vadd.f32 %v173, %v256
    %v275 = vadd.f32 %v174, %v261
    %v276 = vadd.f32 %v175, %v266
    %v277 = vadd.f32 %v176, %v271
    %v278 = vsub.f32 0.0, %v274
    %v279 = vsub.f32 0.0, %v275
    %v280 = vsub.f32 0.0, %v277
    %v281 = vmul.f32 %v278, 1.442695
    %v282 = vpow.pop %v281
    %v283 = vmul.f32 %v279, 1.442695
    %v284 = vpow.pop %v283
    %v285 = vmul.f32 %v280, 1.442695
    %v286 = vpow.pop %v285
    %v287 = vadd.f32 %v282, 1.0
    %v288 = vadd.f32 %v284, 1.0
    %v289 = vadd.f32 %v286, 1.0
    %v290 = vrcp.pop %v287
    %v291 = vrcp.pop %v288
    %v292 = vrcp.pop %v289
    %v293 = vtanh.pop %v276
    %v294 = vmul.f32 %v291, %v62
    %v295 = vmul.f32 %v290, %v293
    %v296 = vadd.f32 %v294, %v295
    %v297 = vtanh.pop %v296
    %v298 = vmul.f32 %v292, %v297
    %v300 = vsel %vm67, %v47, 0
    %v303 = vsel %vm67, %v48, 0
    %v306 = vsel %vm67, %v49, 0
    %v309 = vsel %vm67, %v50, 0
    %311 = vmatprep.subr.mxu0 0.0
    %312 = vmatpush1.msra.mxu0 0.0
    %313 = vmatprep.subr.mxu0 0.0
    %314 = vmatpush1.msra.mxu0 0.0
    %315 = vmatprep.subr.mxu0 0.0
    %316 = vmatpush1.msra.mxu0 0.0
    %317 = vmatprep.subr.mxu0 0.0
    %318 = vmatpush1.msra.mxu0 0.0
    %319 = vmatprep.subr.mxu0 0.0
    %320 = vmatpush1.msra.mxu0 0.0
    %321 = vmatprep.subr.mxu0 0.0
    %322 = vmatpush1.msra.mxu0 0.0
    %323 = vmatprep.subr.mxu0 0.0
    %324 = vmatpush1.msra.mxu0 0.0
    %325 = vmatprep.subr.mxu0 0.0
    %326 = vmatpush1.msra.mxu0 0.0
    %327 = vmatprep.subr.mxu0 0.0
    %328 = vmatpush1.msra.mxu0 0.0
    %329 = vmatprep.subr.mxu0 0.0
    %330 = vmatpush1.msra.mxu0 0.0
    %331 = vmatprep.subr.mxu0 0.0
    %332 = vmatpush1.msra.mxu0 0.0
    %333 = vmatprep.subr.mxu0 0.0
    %334 = vmatpush1.msra.mxu0 0.0
    %335 = vmatprep.subr.mxu0 0.0
    %336 = vmatpush1.msra.mxu0 0.0
    %337 = vmatprep.subr.mxu0 0.0
    %338 = vmatpush1.msra.mxu0 0.0
    %339 = vmatprep.subr.mxu0 0.0
    %340 = vmatpush1.msra.mxu0 0.0
    %341 = vmatprep.subr.mxu0 0.0
    %342 = vmatpush1.msra.mxu0 %v298
    %343 = vmatprep.subr.mxu0 0.0
    %344 = vmatpush2.msra.mxu0 0.0
    %345 = vmatprep.subr.mxu0 0.0
    %346 = vmatpush2.msra.mxu0 0.0
    %347 = vmatprep.subr.mxu0 0.0
    %348 = vmatpush2.msra.mxu0 0.0
    %349 = vmatprep.subr.mxu0 0.0
    %350 = vmatpush2.msra.mxu0 0.0
    %351 = vmatprep.subr.mxu0 0.0
    %352 = vmatpush2.msra.mxu0 0.0
    %353 = vmatprep.subr.mxu0 0.0
    %354 = vmatpush2.msra.mxu0 0.0
    %355 = vmatprep.subr.mxu0 0.0
    %356 = vmatpush2.msra.mxu0 0.0
    %357 = vmatprep.subr.mxu0 0.0
    %358 = vmatpush2.msra.mxu0 0.0
    %359 = vmatprep.subr.mxu0 0.0
    %360 = vmatpush2.msra.mxu0 0.0
    %361 = vmatprep.subr.mxu0 0.0
    %362 = vmatpush2.msra.mxu0 0.0
    %363 = vmatprep.subr.mxu0 0.0
    %364 = vmatpush2.msra.mxu0 0.0
    %365 = vmatprep.subr.mxu0 0.0
    %366 = vmatpush2.msra.mxu0 0.0
    %367 = vmatprep.subr.mxu0 0.0
    %368 = vmatpush2.msra.mxu0 0.0
    %369 = vmatprep.subr.mxu0 0.0
    %370 = vmatpush2.msra.mxu0 0.0
    %371 = vmatprep.subr.mxu0 0.0
    %372 = vmatpush2.msra.mxu0 0.0
    %373 = vmatprep.subr.mxu0 0.0
    %374 = vmatpush2.msra.mxu0 0.0
    %375 = vmatprep.mubr.f32.mxu0 0.0
    %376 = vmatmul.mubr.f32.gmra.mxu0 %v300
    %v377 = vpop.f32.mrf.mxu0
    %v378 = vadd.f32 0.0, %v377
    %v379 = vpop.f32.mrf.mxu0
    %380 = vmatprep.mubr.f32.mxu0 0.0
    %381 = vmatmul.mubr.f32.gmra.mxu0 %v303
    %v382 = vpop.f32.mrf.mxu0
    %v383 = vadd.f32 0.0, %v382
    %v384 = vpop.f32.mrf.mxu0
    %385 = vmatprep.mubr.f32.mxu0 0.0
    %386 = vmatmul.mubr.f32.gmra.mxu0 %v306
    %v387 = vpop.f32.mrf.mxu0
    %v388 = vadd.f32 0.0, %v387
    %v389 = vpop.f32.mrf.mxu0
    %390 = vmatprep.mubr.f32.mxu0 0.0
    %391 = vmatmul.mubr.f32.gmra.mxu0 %v309
    %v392 = vpop.f32.mrf.mxu0
    %v393 = vadd.f32 0.0, %v392
    %v394 = vpop.f32.mrf.mxu0
    %395 = vdwg.mxu0
    %v396 = vadd.f32 %v147, %v378
    %v397 = vadd.f32 %v152, %v383
    %v398 = vadd.f32 %v157, %v388
    %v399 = vadd.f32 %v162, %v393
    %v400 = vsub.f32 0.0, %v396
    %v401 = vsub.f32 0.0, %v397
    %v402 = vsub.f32 0.0, %v399
    %v403 = vmul.f32 %v400, 1.442695
    %v404 = vpow.pop %v403
    %v405 = vmul.f32 %v401, 1.442695
    %v406 = vpow.pop %v405
    %v407 = vmul.f32 %v402, 1.442695
    %v408 = vpow.pop %v407
    %v409 = vadd.f32 %v404, 1.0
    %v410 = vadd.f32 %v406, 1.0
    %v411 = vadd.f32 %v408, 1.0
    %v412 = vrcp.pop %v409
    %v413 = vrcp.pop %v410
    %v414 = vrcp.pop %v411
    %v415 = vtanh.pop %v398
    %v416 = vmul.f32 %v413, %v66
    %v417 = vmul.f32 %v412, %v415
    %v418 = vadd.f32 %v416, %v417
    %v419 = vtanh.pop %v418
    %v420 = vmul.f32 %v414, %v419
    %421 = vst [vmem:[#allocation3] sm:$0xff] %v420
    %422 = vmatprep.subr.mxu0 0.0
    %423 = vmatpush1.msra.mxu0 0.0
    %424 = vmatprep.subr.mxu0 0.0
    %425 = vmatpush1.msra.mxu0 0.0
    %426 = vmatprep.subr.mxu0 0.0
    %427 = vmatpush1.msra.mxu0 0.0
    %428 = vmatprep.subr.mxu0 0.0
    %429 = vmatpush1.msra.mxu0 0.0
    %430 = vmatprep.subr.mxu0 0.0
    %431 = vmatpush1.msra.mxu0 0.0
    %432 = vmatprep.subr.mxu0 0.0
    %433 = vmatpush1.msra.mxu0 0.0
    %434 = vmatprep.subr.mxu0 0.0
    %435 = vmatpush1.msra.mxu0 0.0
    %436 = vmatprep.subr.mxu0 0.0
    %437 = vmatpush1.msra.mxu0 0.0
    %438 = vmatprep.subr.mxu0 0.0
    %439 = vmatpush1.msra.mxu0 0.0
    %440 = vmatprep.subr.mxu0 0.0
    %441 = vmatpush1.msra.mxu0 0.0
    %442 = vmatprep.subr.mxu0 0.0
    %443 = vmatpush1.msra.mxu0 0.0
    %444 = vmatprep.subr.mxu0 0.0
    %445 = vmatpush1.msra.mxu0 0.0
    %446 = vmatprep.subr.mxu0 0.0
    %447 = vmatpush1.msra.mxu0 0.0
    %448 = vmatprep.subr.mxu0 0.0
    %449 = vmatpush1.msra.mxu0 0.0
    %450 = vmatprep.subr.mxu0 0.0
    %451 = vmatpush1.msra.mxu0 0.0
    %452 = vmatprep.subr.mxu0 0.0
    %453 = vmatpush1.msra.mxu0 %v420
    %454 = vmatprep.subr.mxu0 0.0
    %455 = vmatpush2.msra.mxu0 0.0
    %456 = vmatprep.subr.mxu0 0.0
    %457 = vmatpush2.msra.mxu0 0.0
    %458 = vmatprep.subr.mxu0 0.0
    %459 = vmatpush2.msra.mxu0 0.0
    %460 = vmatprep.subr.mxu0 0.0
    %461 = vmatpush2.msra.mxu0 0.0
    %462 = vmatprep.subr.mxu0 0.0
    %463 = vmatpush2.msra.mxu0 0.0
    %464 = vmatprep.subr.mxu0 0.0
    %465 = vmatpush2.msra.mxu0 0.0
    %466 = vmatprep.subr.mxu0 0.0
    %467 = vmatpush2.msra.mxu0 0.0
    %468 = vmatprep.subr.mxu0 0.0
    %469 = vmatpush2.msra.mxu0 0.0
    %470 = vmatprep.subr.mxu0 0.0
    %471 = vmatpush2.msra.mxu0 0.0
    %472 = vmatprep.subr.mxu0 0.0
    %473 = vmatpush2.msra.mxu0 0.0
    %474 = vmatprep.subr.mxu0 0.0
    %475 = vmatpush2.msra.mxu0 0.0
    %476 = vmatprep.subr.mxu0 0.0
    %477 = vmatpush2.msra.mxu0 0.0
    %478 = vmatprep.subr.mxu0 0.0
    %479 = vmatpush2.msra.mxu0 0.0
    %480 = vmatprep.subr.mxu0 0.0
    %481 = vmatpush2.msra.mxu0 0.0
    %482 = vmatprep.subr.mxu0 0.0
    %483 = vmatpush2.msra.mxu0 0.0
    %484 = vmatprep.subr.mxu0 0.0
    %485 = vmatpush2.msra.mxu0 0.0
    %486 = vmatprep.mubr.f32.mxu0 0.0
    %487 = vmatmul.mubr.f32.gmra.mxu0 %v69
    %v488 = vpop.f32.mrf.mxu0
    %v489 = vadd.f32 %v55, %v488
    %v490 = vpop.f32.mrf.mxu0
    %491 = vmatprep.mubr.f32.mxu0 0.0
    %492 = vmatmul.mubr.f32.gmra.mxu0 %v72
    %v493 = vpop.f32.mrf.mxu0
    %v494 = vadd.f32 %v56, %v493
    %v495 = vpop.f32.mrf.mxu0
    %496 = vmatprep.mubr.f32.mxu0 0.0
    %497 = vmatmul.mubr.f32.gmra.mxu0 %v75
    %v498 = vpop.f32.mrf.mxu0
    %v499 = vadd.f32 %v57, %v498
    %v500 = vpop.f32.mrf.mxu0
    %501 = vmatprep.mubr.f32.mxu0 0.0
    %502 = vmatmul.mubr.f32.gmra.mxu0 %v78
    %v503 = vpop.f32.mrf.mxu0
    %v504 = vadd.f32 %v58, %v503
    %v505 = vpop.f32.mrf.mxu0
    %506 = vdwg.mxu0
    %v507 = vlaneseq
    %v508 = vshrl.u32 %v507, 7
    %v509 = vsub.s32 1, %v508
    %v510 = vrot.slane %v59, %v509
    %v511 = vmul.f32 %v35, %v510
    %v512 = vmul.f32 %v36, %v510
    %v513 = vmul.f32 %v37, %v510
    %v514 = vmul.f32 %v38, %v510
    %v515 = vadd.f32 %v511, %v39
    %v516 = vadd.f32 %v512, %v40
    %v517 = vadd.f32 %v513, %v41
    %v518 = vadd.f32 %v514, %v42
    %519 = vmatprep.subr.mxu0 0.0
    %520 = vmatpush1.msra.mxu0 0.0
    %521 = vmatprep.subr.mxu0 0.0
    %522 = vmatpush1.msra.mxu0 0.0
    %523 = vmatprep.subr.mxu0 0.0
    %524 = vmatpush1.msra.mxu0 0.0
    %525 = vmatprep.subr.mxu0 0.0
    %526 = vmatpush1.msra.mxu0 0.0
    %527 = vmatprep.subr.mxu0 0.0
    %528 = vmatpush1.msra.mxu0 0.0
    %529 = vmatprep.subr.mxu0 0.0
    %530 = vmatpush1.msra.mxu0 0.0
    %531 = vmatprep.subr.mxu0 0.0
    %532 = vmatpush1.msra.mxu0 0.0
    %533 = vmatprep.subr.mxu0 0.0
    %534 = vmatpush1.msra.mxu0 0.0
    %535 = vmatprep.subr.mxu0 0.0
    %536 = vmatpush1.msra.mxu0 0.0
    %537 = vmatprep.subr.mxu0 0.0
    %538 = vmatpush1.msra.mxu0 0.0
    %539 = vmatprep.subr.mxu0 0.0
    %540 = vmatpush1.msra.mxu0 0.0
    %541 = vmatprep.subr.mxu0 0.0
    %542 = vmatpush1.msra.mxu0 0.0
    %543 = vmatprep.subr.mxu0 0.0
    %544 = vmatpush1.msra.mxu0 0.0
    %545 = vmatprep.subr.mxu0 0.0
    %546 = vmatpush1.msra.mxu0 0.0
    %547 = vmatprep.subr.mxu0 0.0
    %548 = vmatpush1.msra.mxu0 0.0
    %549 = vmatprep.subr.mxu0 0.0
    %550 = vmatpush1.msra.mxu0 %v298
    %551 = vmatprep.subr.mxu0 0.0
    %552 = vmatpush2.msra.mxu0 0.0
    %553 = vmatprep.subr.mxu0 0.0
    %554 = vmatpush2.msra.mxu0 0.0
    %555 = vmatprep.subr.mxu0 0.0
    %556 = vmatpush2.msra.mxu0 0.0
    %557 = vmatprep.subr.mxu0 0.0
    %558 = vmatpush2.msra.mxu0 0.0
    %559 = vmatprep.subr.mxu0 0.0
    %560 = vmatpush2.msra.mxu0 0.0
    %561 = vmatprep.subr.mxu0 0.0
    %562 = vmatpush2.msra.mxu0 0.0
    %563 = vmatprep.subr.mxu0 0.0
    %564 = vmatpush2.msra.mxu0 0.0
    %565 = vmatprep.subr.mxu0 0.0
    %566 = vmatpush2.msra.mxu0 0.0
    %567 = vmatprep.subr.mxu0 0.0
    %568 = vmatpush2.msra.mxu0 0.0
    %569 = vmatprep.subr.mxu0 0.0
    %570 = vmatpush2.msra.mxu0 0.0
    %571 = vmatprep.subr.mxu0 0.0
    %572 = vmatpush2.msra.mxu0 0.0
    %573 = vmatprep.subr.mxu0 0.0
    %574 = vmatpush2.msra.mxu0 0.0
    %575 = vmatprep.subr.mxu0 0.0
    %576 = vmatpush2.msra.mxu0 0.0
    %577 = vmatprep.subr.mxu0 0.0
    %578 = vmatpush2.msra.mxu0 0.0
    %579 = vmatprep.subr.mxu0 0.0
    %580 = vmatpush2.msra.mxu0 0.0
    %581 = vmatprep.subr.mxu0 0.0
    %582 = vmatpush2.msra.mxu0 0.0
    %583 = vmatprep.mubr.f32.mxu0 0.0
    %584 = vmatmul.mubr.f32.gmra.mxu0 %v178
    %v585 = vpop.f32.mrf.mxu0
    %v586 = vadd.f32 0.0, %v585
    %v587 = vpop.f32.mrf.mxu0
    %588 = vmatprep.mubr.f32.mxu0 0.0
    %589 = vmatmul.mubr.f32.gmra.mxu0 %v181
    %v590 = vpop.f32.mrf.mxu0
    %v591 = vadd.f32 0.0, %v590
    %v592 = vpop.f32.mrf.mxu0
    %593 = vmatprep.mubr.f32.mxu0 0.0
    %594 = vmatmul.mubr.f32.gmra.mxu0 %v184
    %v595 = vpop.f32.mrf.mxu0
    %v596 = vadd.f32 0.0, %v595
    %v597 = vpop.f32.mrf.mxu0
    %598 = vmatprep.mubr.f32.mxu0 0.0
    %599 = vmatmul.mubr.f32.gmra.mxu0 %v187
    %v600 = vpop.f32.mrf.mxu0
    %v601 = vadd.f32 0.0, %v600
    %v602 = vpop.f32.mrf.mxu0
    %603 = vdwg.mxu0
    %v604 = vadd.f32 %v515, %v586
    %v605 = vadd.f32 %v516, %v591
    %v606 = vadd.f32 %v517, %v596
    %v607 = vadd.f32 %v518, %v601
    %v608 = vsub.f32 0.0, %v604
    %v609 = vsub.f32 0.0, %v605
    %v610 = vsub.f32 0.0, %v607
    %v611 = vmul.f32 %v608, 1.442695
    %v612 = vpow.pop %v611
    %v613 = vmul.f32 %v609, 1.442695
    %v614 = vpow.pop %v613
    %v615 = vmul.f32 %v610, 1.442695
    %v616 = vpow.pop %v615
    %v617 = vadd.f32 %v612, 1.0
    %v618 = vadd.f32 %v614, 1.0
    %v619 = vadd.f32 %v616, 1.0
    %v620 = vrcp.pop %v617
    %v621 = vrcp.pop %v618
    %v622 = vrcp.pop %v619
    %v623 = vtanh.pop %v606
    %v624 = vmul.f32 %v621, %v296
    %v625 = vmul.f32 %v620, %v623
    %v626 = vadd.f32 %v624, %v625
    %v627 = vtanh.pop %v626
    %v628 = vmul.f32 %v622, %v627
    %629 = vmatprep.subr.mxu0 0.0
    %630 = vmatpush1.msra.mxu0 0.0
    %631 = vmatprep.subr.mxu0 0.0
    %632 = vmatpush1.msra.mxu0 0.0
    %633 = vmatprep.subr.mxu0 0.0
    %634 = vmatpush1.msra.mxu0 0.0
    %635 = vmatprep.subr.mxu0 0.0
    %636 = vmatpush1.msra.mxu0 0.0
    %637 = vmatprep.subr.mxu0 0.0
    %638 = vmatpush1.msra.mxu0 0.0
    %639 = vmatprep.subr.mxu0 0.0
    %640 = vmatpush1.msra.mxu0 0.0
    %641 = vmatprep.subr.mxu0 0.0
    %642 = vmatpush1.msra.mxu0 0.0
    %643 = vmatprep.subr.mxu0 0.0
    %644 = vmatpush1.msra.mxu0 0.0
    %645 = vmatprep.subr.mxu0 0.0
    %646 = vmatpush1.msra.mxu0 0.0
    %647 = vmatprep.subr.mxu0 0.0
    %648 = vmatpush1.msra.mxu0 0.0
    %649 = vmatprep.subr.mxu0 0.0
    %650 = vmatpush1.msra.mxu0 0.0
    %651 = vmatprep.subr.mxu0 0.0
    %652 = vmatpush1.msra.mxu0 0.0
    %653 = vmatprep.subr.mxu0 0.0
    %654 = vmatpush1.msra.mxu0 0.0
    %655 = vmatprep.subr.mxu0 0.0
    %656 = vmatpush1.msra.mxu0 0.0
    %657 = vmatprep.subr.mxu0 0.0
    %658 = vmatpush1.msra.mxu0 0.0
    %659 = vmatprep.subr.mxu0 0.0
    %660 = vmatpush1.msra.mxu0 %v628
    %661 = vmatprep.subr.mxu0 0.0
    %662 = vmatpush2.msra.mxu0 0.0
    %663 = vmatprep.subr.mxu0 0.0
    %664 = vmatpush2.msra.mxu0 0.0
    %665 = vmatprep.subr.mxu0 0.0
    %666 = vmatpush2.msra.mxu0 0.0
    %667 = vmatprep.subr.mxu0 0.0
    %668 = vmatpush2.msra.mxu0 0.0
    %669 = vmatprep.subr.mxu0 0.0
    %670 = vmatpush2.msra.mxu0 0.0
    %671 = vmatprep.subr.mxu0 0.0
    %672 = vmatpush2.msra.mxu0 0.0
    %673 = vmatprep.subr.mxu0 0.0
    %674 = vmatpush2.msra.mxu0 0.0
    %675 = vmatprep.subr.mxu0 0.0
    %676 = vmatpush2.msra.mxu0 0.0
    %677 = vmatprep.subr.mxu0 0.0
    %678 = vmatpush2.msra.mxu0 0.0
    %679 = vmatprep.subr.mxu0 0.0
    %680 = vmatpush2.msra.mxu0 0.0
    %681 = vmatprep.subr.mxu0 0.0
    %682 = vmatpush2.msra.mxu0 0.0
    %683 = vmatprep.subr.mxu0 0.0
    %684 = vmatpush2.msra.mxu0 0.0
    %685 = vmatprep.subr.mxu0 0.0
    %686 = vmatpush2.msra.mxu0 0.0
    %687 = vmatprep.subr.mxu0 0.0
    %688 = vmatpush2.msra.mxu0 0.0
    %689 = vmatprep.subr.mxu0 0.0
    %690 = vmatpush2.msra.mxu0 0.0
    %691 = vmatprep.subr.mxu0 0.0
    %692 = vmatpush2.msra.mxu0 0.0
    %693 = vmatprep.mubr.f32.mxu0 0.0
    %694 = vmatmul.mubr.f32.gmra.mxu0 %v300
    %v695 = vpop.f32.mrf.mxu0
    %v696 = vadd.f32 0.0, %v695
    %v697 = vpop.f32.mrf.mxu0
    %698 = vmatprep.mubr.f32.mxu0 0.0
    %699 = vmatmul.mubr.f32.gmra.mxu0 %v303
    %v700 = vpop.f32.mrf.mxu0
    %v701 = vadd.f32 0.0, %v700
    %v702 = vpop.f32.mrf.mxu0
    %703 = vmatprep.mubr.f32.mxu0 0.0
    %704 = vmatmul.mubr.f32.gmra.mxu0 %v306
    %v705 = vpop.f32.mrf.mxu0
    %v706 = vadd.f32 0.0, %v705
    %v707 = vpop.f32.mrf.mxu0
    %708 = vmatprep.mubr.f32.mxu0 0.0
    %709 = vmatmul.mubr.f32.gmra.mxu0 %v309
    %v710 = vpop.f32.mrf.mxu0
    %v711 = vadd.f32 0.0, %v710
    %v712 = vpop.f32.mrf.mxu0
    %713 = vdwg.mxu0
    %v714 = vadd.f32 %v489, %v696
    %v715 = vadd.f32 %v494, %v701
    %v716 = vadd.f32 %v499, %v706
    %v717 = vadd.f32 %v504, %v711
    %v718 = vsub.f32 0.0, %v714
    %v719 = vsub.f32 0.0, %v715
    %v720 = vsub.f32 0.0, %v717
    %v721 = vmul.f32 %v718, 1.442695
    %v722 = vpow.pop %v721
    %v723 = vmul.f32 %v719, 1.442695
    %v724 = vpow.pop %v723
    %v725 = vmul.f32 %v720, 1.442695
    %v726 = vpow.pop %v725
    %v727 = vadd.f32 %v722, 1.0
    %v728 = vadd.f32 %v724, 1.0
    %v729 = vadd.f32 %v726, 1.0
    %v730 = vrcp.pop %v727
    %v731 = vrcp.pop %v728
    %v732 = vrcp.pop %v729
    %v733 = vtanh.pop %v716
    %v734 = vmul.f32 %v731, %v418
    %v735 = vmul.f32 %v730, %v733
    %v736 = vadd.f32 %v734, %v735
    %v737 = vtanh.pop %v736
    %v738 = vmul.f32 %v732, %v737
    %s739 = scalar_lea.vmem [#allocation3], 8
    %740 = vst [vmem:[%s739] sm:$0xff] %v738
    %741 = vmatprep.subr.mxu0 0.0
    %742 = vmatpush1.msra.mxu0 0.0
    %743 = vmatprep.subr.mxu0 0.0
    %744 = vmatpush1.msra.mxu0 0.0
    %745 = vmatprep.subr.mxu0 0.0
    %746 = vmatpush1.msra.mxu0 0.0
    %747 = vmatprep.subr.mxu0 0.0
    %748 = vmatpush1.msra.mxu0 0.0
    %749 = vmatprep.subr.mxu0 0.0
    %750 = vmatpush1.msra.mxu0 0.0
    %751 = vmatprep.subr.mxu0 0.0
    %752 = vmatpush1.msra.mxu0 0.0
    %753 = vmatprep.subr.mxu0 0.0
    %754 = vmatpush1.msra.mxu0 0.0
    %755 = vmatprep.subr.mxu0 0.0
    %756 = vmatpush1.msra.mxu0 0.0
    %757 = vmatprep.subr.mxu0 0.0
    %758 = vmatpush1.msra.mxu0 0.0
    %759 = vmatprep.subr.mxu0 0.0
    %760 = vmatpush1.msra.mxu0 0.0
    %761 = vmatprep.subr.mxu0 0.0
    %762 = vmatpush1.msra.mxu0 0.0
    %763 = vmatprep.subr.mxu0 0.0
    %764 = vmatpush1.msra.mxu0 0.0
    %765 = vmatprep.subr.mxu0 0.0
    %766 = vmatpush1.msra.mxu0 0.0
    %767 = vmatprep.subr.mxu0 0.0
    %768 = vmatpush1.msra.mxu0 0.0
    %769 = vmatprep.subr.mxu0 0.0
    %770 = vmatpush1.msra.mxu0 0.0
    %771 = vmatprep.subr.mxu0 0.0
    %772 = vmatpush1.msra.mxu0 %v738
    %773 = vmatprep.subr.mxu0 0.0
    %774 = vmatpush2.msra.mxu0 0.0
    %775 = vmatprep.subr.mxu0 0.0
    %776 = vmatpush2.msra.mxu0 0.0
    %777 = vmatprep.subr.mxu0 0.0
    %778 = vmatpush2.msra.mxu0 0.0
    %779 = vmatprep.subr.mxu0 0.0
    %780 = vmatpush2.msra.mxu0 0.0
    %781 = vmatprep.subr.mxu0 0.0
    %782 = vmatpush2.msra.mxu0 0.0
    %783 = vmatprep.subr.mxu0 0.0
    %784 = vmatpush2.msra.mxu0 0.0
    %785 = vmatprep.subr.mxu0 0.0
    %786 = vmatpush2.msra.mxu0 0.0
    %787 = vmatprep.subr.mxu0 0.0
    %788 = vmatpush2.msra.mxu0 0.0
    %789 = vmatprep.subr.mxu0 0.0
    %790 = vmatpush2.msra.mxu0 0.0
    %791 = vmatprep.subr.mxu0 0.0
    %792 = vmatpush2.msra.mxu0 0.0
    %793 = vmatprep.subr.mxu0 0.0
    %794 = vmatpush2.msra.mxu0 0.0
    %795 = vmatprep.subr.mxu0 0.0
    %796 = vmatpush2.msra.mxu0 0.0
    %797 = vmatprep.subr.mxu0 0.0
    %798 = vmatpush2.msra.mxu0 0.0
    %799 = vmatprep.subr.mxu0 0.0
    %800 = vmatpush2.msra.mxu0 0.0
    %801 = vmatprep.subr.mxu0 0.0
    %802 = vmatpush2.msra.mxu0 0.0
    %803 = vmatprep.subr.mxu0 0.0
    %804 = vmatpush2.msra.mxu0 0.0
    %805 = vmatprep.mubr.f32.mxu0 0.0
    %806 = vmatmul.mubr.f32.gmra.mxu0 %v69
    %v807 = vpop.f32.mrf.mxu0
    %v808 = vadd.f32 %v55, %v807
    %v809 = vpop.f32.mrf.mxu0
    %810 = vmatprep.mubr.f32.mxu0 0.0
    %811 = vmatmul.mubr.f32.gmra.mxu0 %v72
    %v812 = vpop.f32.mrf.mxu0
    %v813 = vadd.f32 %v56, %v812
    %v814 = vpop.f32.mrf.mxu0
    %815 = vmatprep.mubr.f32.mxu0 0.0
    %816 = vmatmul.mubr.f32.gmra.mxu0 %v75
    %v817 = vpop.f32.mrf.mxu0
    %v818 = vadd.f32 %v57, %v817
    %v819 = vpop.f32.mrf.mxu0
    %820 = vmatprep.mubr.f32.mxu0 0.0
    %821 = vmatmul.mubr.f32.gmra.mxu0 %v78
    %v822 = vpop.f32.mrf.mxu0
    %v823 = vadd.f32 %v58, %v822
    %v824 = vpop.f32.mrf.mxu0
    %825 = vdwg.mxu0
    %v826 = vlaneseq
    %v827 = vshrl.u32 %v826, 7
    %v828 = vsub.s32 2, %v827
    %v829 = vrot.slane %v59, %v828
    %v830 = vmul.f32 %v35, %v829
    %v831 = vmul.f32 %v36, %v829
    %v832 = vmul.f32 %v37, %v829
    %v833 = vmul.f32 %v38, %v829
    %v834 = vadd.f32 %v830, %v39
    %v835 = vadd.f32 %v831, %v40
    %v836 = vadd.f32 %v832, %v41
    %v837 = vadd.f32 %v833, %v42
    %838 = vmatprep.subr.mxu0 0.0
    %839 = vmatpush1.msra.mxu0 0.0
    %840 = vmatprep.subr.mxu0 0.0
    %841 = vmatpush1.msra.mxu0 0.0
    %842 = vmatprep.subr.mxu0 0.0
    %843 = vmatpush1.msra.mxu0 0.0
    %844 = vmatprep.subr.mxu0 0.0
    %845 = vmatpush1.msra.mxu0 0.0
    %846 = vmatprep.subr.mxu0 0.0
    %847 = vmatpush1.msra.mxu0 0.0
    %848 = vmatprep.subr.mxu0 0.0
    %849 = vmatpush1.msra.mxu0 0.0
    %850 = vmatprep.subr.mxu0 0.0
    %851 = vmatpush1.msra.mxu0 0.0
    %852 = vmatprep.subr.mxu0 0.0
    %853 = vmatpush1.msra.mxu0 0.0
    %854 = vmatprep.subr.mxu0 0.0
    %855 = vmatpush1.msra.mxu0 0.0
    %856 = vmatprep.subr.mxu0 0.0
    %857 = vmatpush1.msra.mxu0 0.0
    %858 = vmatprep.subr.mxu0 0.0
    %859 = vmatpush1.msra.mxu0 0.0
    %860 = vmatprep.subr.mxu0 0.0
    %861 = vmatpush1.msra.mxu0 0.0
    %862 = vmatprep.subr.mxu0 0.0
    %863 = vmatpush1.msra.mxu0 0.0
    %864 = vmatprep.subr.mxu0 0.0
    %865 = vmatpush1.msra.mxu0 0.0
    %866 = vmatprep.subr.mxu0 0.0
    %867 = vmatpush1.msra.mxu0 0.0
    %868 = vmatprep.subr.mxu0 0.0
    %869 = vmatpush1.msra.mxu0 %v628
    %870 = vmatprep.subr.mxu0 0.0
    %871 = vmatpush2.msra.mxu0 0.0
    %872 = vmatprep.subr.mxu0 0.0
    %873 = vmatpush2.msra.mxu0 0.0
    %874 = vmatprep.subr.mxu0 0.0
    %875 = vmatpush2.msra.mxu0 0.0
    %876 = vmatprep.subr.mxu0 0.0
    %877 = vmatpush2.msra.mxu0 0.0
    %878 = vmatprep.subr.mxu0 0.0
    %879 = vmatpush2.msra.mxu0 0.0
    %880 = vmatprep.subr.mxu0 0.0
    %881 = vmatpush2.msra.mxu0 0.0
    %882 = vmatprep.subr.mxu0 0.0
    %883 = vmatpush2.msra.mxu0 0.0
    %884 = vmatprep.subr.mxu0 0.0
    %885 = vmatpush2.msra.mxu0 0.0
    %886 = vmatprep.subr.mxu0 0.0
    %887 = vmatpush2.msra.mxu0 0.0
    %888 = vmatprep.subr.mxu0 0.0
    %889 = vmatpush2.msra.mxu0 0.0
    %890 = vmatprep.subr.mxu0 0.0
    %891 = vmatpush2.msra.mxu0 0.0
    %892 = vmatprep.subr.mxu0 0.0
    %893 = vmatpush2.msra.mxu0 0.0
    %894 = vmatprep.subr.mxu0 0.0
    %895 = vmatpush2.msra.mxu0 0.0
    %896 = vmatprep.subr.mxu0 0.0
    %897 = vmatpush2.msra.mxu0 0.0
    %898 = vmatprep.subr.mxu0 0.0
    %899 = vmatpush2.msra.mxu0 0.0
    %900 = vmatprep.subr.mxu0 0.0
    %901 = vmatpush2.msra.mxu0 0.0
    %902 = vmatprep.mubr.f32.mxu0 0.0
    %903 = vmatmul.mubr.f32.gmra.mxu0 %v178
    %v904 = vpop.f32.mrf.mxu0
    %v905 = vadd.f32 0.0, %v904
    %v906 = vpop.f32.mrf.mxu0
    %907 = vmatprep.mubr.f32.mxu0 0.0
    %908 = vmatmul.mubr.f32.gmra.mxu0 %v181
    %v909 = vpop.f32.mrf.mxu0
    %v910 = vadd.f32 0.0, %v909
    %v911 = vpop.f32.mrf.mxu0
    %912 = vmatprep.mubr.f32.mxu0 0.0
    %913 = vmatmul.mubr.f32.gmra.mxu0 %v184
    %v914 = vpop.f32.mrf.mxu0
    %v915 = vadd.f32 0.0, %v914
    %v916 = vpop.f32.mrf.mxu0
    %917 = vmatprep.mubr.f32.mxu0 0.0
    %918 = vmatmul.mubr.f32.gmra.mxu0 %v187
    %v919 = vpop.f32.mrf.mxu0
    %v920 = vadd.f32 0.0, %v919
    %v921 = vpop.f32.mrf.mxu0
    %922 = vdwg.mxu0
    %v923 = vadd.f32 %v834, %v905
    %v924 = vadd.f32 %v835, %v910
    %v925 = vadd.f32 %v836, %v915
    %v926 = vadd.f32 %v837, %v920
    %v927 = vsub.f32 0.0, %v923
    %v928 = vsub.f32 0.0, %v924
    %v929 = vsub.f32 0.0, %v926
    %v930 = vmul.f32 %v927, 1.442695
    %v931 = vpow.pop %v930
    %v932 = vmul.f32 %v928, 1.442695
    %v933 = vpow.pop %v932
    %v934 = vmul.f32 %v929, 1.442695
    %v935 = vpow.pop %v934
    %v936 = vadd.f32 %v931, 1.0
    %v937 = vadd.f32 %v933, 1.0
    %v938 = vadd.f32 %v935, 1.0
    %v939 = vrcp.pop %v936
    %v940 = vrcp.pop %v937
    %v941 = vrcp.pop %v938
    %v942 = vtanh.pop %v925
    %v943 = vmul.f32 %v940, %v626
    %v944 = vmul.f32 %v939, %v942
    %v945 = vadd.f32 %v943, %v944
    %v946 = vtanh.pop %v945
    %v947 = vmul.f32 %v941, %v946
    %948 = vmatprep.subr.mxu0 0.0
    %949 = vmatpush1.msra.mxu0 0.0
    %950 = vmatprep.subr.mxu0 0.0
    %951 = vmatpush1.msra.mxu0 0.0
    %952 = vmatprep.subr.mxu0 0.0
    %953 = vmatpush1.msra.mxu0 0.0
    %954 = vmatprep.subr.mxu0 0.0
    %955 = vmatpush1.msra.mxu0 0.0
    %956 = vmatprep.subr.mxu0 0.0
    %957 = vmatpush1.msra.mxu0 0.0
    %958 = vmatprep.subr.mxu0 0.0
    %959 = vmatpush1.msra.mxu0 0.0
    %960 = vmatprep.subr.mxu0 0.0
    %961 = vmatpush1.msra.mxu0 0.0
    %962 = vmatprep.subr.mxu0 0.0
    %963 = vmatpush1.msra.mxu0 0.0
    %964 = vmatprep.subr.mxu0 0.0
    %965 = vmatpush1.msra.mxu0 0.0
    %966 = vmatprep.subr.mxu0 0.0
    %967 = vmatpush1.msra.mxu0 0.0
    %968 = vmatprep.subr.mxu0 0.0
    %969 = vmatpush1.msra.mxu0 0.0
    %970 = vmatprep.subr.mxu0 0.0
    %971 = vmatpush1.msra.mxu0 0.0
    %972 = vmatprep.subr.mxu0 0.0
    %973 = vmatpush1.msra.mxu0 0.0
    %974 = vmatprep.subr.mxu0 0.0
    %975 = vmatpush1.msra.mxu0 0.0
    %976 = vmatprep.subr.mxu0 0.0
    %977 = vmatpush1.msra.mxu0 0.0
    %978 = vmatprep.subr.mxu0 0.0
    %979 = vmatpush1.msra.mxu0 %v947
    %980 = vmatprep.subr.mxu0 0.0
    %981 = vmatpush2.msra.mxu0 0.0
    %982 = vmatprep.subr.mxu0 0.0
    %983 = vmatpush2.msra.mxu0 0.0
    %984 = vmatprep.subr.mxu0 0.0
    %985 = vmatpush2.msra.mxu0 0.0
    %986 = vmatprep.subr.mxu0 0.0
    %987 = vmatpush2.msra.mxu0 0.0
    %988 = vmatprep.subr.mxu0 0.0
    %989 = vmatpush2.msra.mxu0 0.0
    %990 = vmatprep.subr.mxu0 0.0
    %991 = vmatpush2.msra.mxu0 0.0
    %992 = vmatprep.subr.mxu0 0.0
    %993 = vmatpush2.msra.mxu0 0.0
    %994 = vmatprep.subr.mxu0 0.0
    %995 = vmatpush2.msra.mxu0 0.0
    %996 = vmatprep.subr.mxu0 0.0
    %997 = vmatpush2.msra.mxu0 0.0
    %998 = vmatprep.subr.mxu0 0.0
    %999 = vmatpush2.msra.mxu0 0.0
    %1000 = vmatprep.subr.mxu0 0.0
    %1001 = vmatpush2.msra.mxu0 0.0
    %1002 = vmatprep.subr.mxu0 0.0
    %1003 = vmatpush2.msra.mxu0 0.0
    %1004 = vmatprep.subr.mxu0 0.0
    %1005 = vmatpush2.msra.mxu0 0.0
    %1006 = vmatprep.subr.mxu0 0.0
    %1007 = vmatpush2.msra.mxu0 0.0
    %1008 = vmatprep.subr.mxu0 0.0
    %1009 = vmatpush2.msra.mxu0 0.0
    %1010 = vmatprep.subr.mxu0 0.0
    %1011 = vmatpush2.msra.mxu0 0.0
    %1012 = vmatprep.mubr.f32.mxu0 0.0
    %1013 = vmatmul.mubr.f32.gmra.mxu0 %v300
    %v1014 = vpop.f32.mrf.mxu0
    %v1015 = vadd.f32 0.0, %v1014
    %v1016 = vpop.f32.mrf.mxu0
    %1017 = vmatprep.mubr.f32.mxu0 0.0
    %1018 = vmatmul.mubr.f32.gmra.mxu0 %v303
    %v1019 = vpop.f32.mrf.mxu0
    %v1020 = vadd.f32 0.0, %v1019
    %v1021 = vpop.f32.mrf.mxu0
    %1022 = vmatprep.mubr.f32.mxu0 0.0
    %1023 = vmatmul.mubr.f32.gmra.mxu0 %v306
    %v1024 = vpop.f32.mrf.mxu0
    %v1025 = vadd.f32 0.0, %v1024
    %v1026 = vpop.f32.mrf.mxu0
    %1027 = vmatprep.mubr.f32.mxu0 0.0
    %1028 = vmatmul.mubr.f32.gmra.mxu0 %v309
    %v1029 = vpop.f32.mrf.mxu0
    %v1030 = vadd.f32 0.0, %v1029
    %v1031 = vpop.f32.mrf.mxu0
    %1032 = vdwg.mxu0
    %v1033 = vadd.f32 %v808, %v1015
    %v1034 = vadd.f32 %v813, %v1020
    %v1035 = vadd.f32 %v818, %v1025
    %v1036 = vadd.f32 %v823, %v1030
    %v1037 = vsub.f32 0.0, %v1033
    %v1038 = vsub.f32 0.0, %v1034
    %v1039 = vsub.f32 0.0, %v1036
    %v1040 = vmul.f32 %v1037, 1.442695
    %v1041 = vpow.pop %v1040
    %v1042 = vmul.f32 %v1038, 1.442695
    %v1043 = vpow.pop %v1042
    %v1044 = vmul.f32 %v1039, 1.442695
    %v1045 = vpow.pop %v1044
    %v1046 = vadd.f32 %v1041, 1.0
    %v1047 = vadd.f32 %v1043, 1.0
    %v1048 = vadd.f32 %v1045, 1.0
    %v1049 = vrcp.pop %v1046
    %v1050 = vrcp.pop %v1047
    %v1051 = vrcp.pop %v1048
    %v1052 = vtanh.pop %v1035
    %v1053 = vmul.f32 %v1050, %v736
    %v1054 = vmul.f32 %v1049, %v1052
    %v1055 = vadd.f32 %v1053, %v1054
    %v1056 = vtanh.pop %v1055
    %v1057 = vmul.f32 %v1051, %v1056
    %s1058 = scalar_lea.vmem [#allocation3], 16
    %1059 = vst [vmem:[%s1058] sm:$0xff] %v1057
    %1060 = vmatprep.subr.mxu0 0.0
    %1061 = vmatpush1.msra.mxu0 0.0
    %1062 = vmatprep.subr.mxu0 0.0
    %1063 = vmatpush1.msra.mxu0 0.0
    %1064 = vmatprep.subr.mxu0 0.0
    %1065 = vmatpush1.msra.mxu0 0.0
    %1066 = vmatprep.subr.mxu0 0.0
    %1067 = vmatpush1.msra.mxu0 0.0
    %1068 = vmatprep.subr.mxu0 0.0
    %1069 = vmatpush1.msra.mxu0 0.0
    %1070 = vmatprep.subr.mxu0 0.0
    %1071 = vmatpush1.msra.mxu0 0.0
    %1072 = vmatprep.subr.mxu0 0.0
    %1073 = vmatpush1.msra.mxu0 0.0
    %1074 = vmatprep.subr.mxu0 0.0
    %1075 = vmatpush1.msra.mxu0 0.0
    %1076 = vmatprep.subr.mxu0 0.0
    %1077 = vmatpush1.msra.mxu0 0.0
    %1078 = vmatprep.subr.mxu0 0.0
    %1079 = vmatpush1.msra.mxu0 0.0
    %1080 = vmatprep.subr.mxu0 0.0
    %1081 = vmatpush1.msra.mxu0 0.0
    %1082 = vmatprep.subr.mxu0 0.0
    %1083 = vmatpush1.msra.mxu0 0.0
    %1084 = vmatprep.subr.mxu0 0.0
    %1085 = vmatpush1.msra.mxu0 0.0
    %1086 = vmatprep.subr.mxu0 0.0
    %1087 = vmatpush1.msra.mxu0 0.0
    %1088 = vmatprep.subr.mxu0 0.0
    %1089 = vmatpush1.msra.mxu0 0.0
    %1090 = vmatprep.subr.mxu0 0.0
    %1091 = vmatpush1.msra.mxu0 %v1057
    %1092 = vmatprep.subr.mxu0 0.0
    %1093 = vmatpush2.msra.mxu0 0.0
    %1094 = vmatprep.subr.mxu0 0.0
    %1095 = vmatpush2.msra.mxu0 0.0
    %1096 = vmatprep.subr.mxu0 0.0
    %1097 = vmatpush2.msra.mxu0 0.0
    %1098 = vmatprep.subr.mxu0 0.0
    %1099 = vmatpush2.msra.mxu0 0.0
    %1100 = vmatprep.subr.mxu0 0.0
    %1101 = vmatpush2.msra.mxu0 0.0
    %1102 = vmatprep.subr.mxu0 0.0
    %1103 = vmatpush2.msra.mxu0 0.0
    %1104 = vmatprep.subr.mxu0 0.0
    %1105 = vmatpush2.msra.mxu0 0.0
    %1106 = vmatprep.subr.mxu0 0.0
    %1107 = vmatpush2.msra.mxu0 0.0
    %1108 = vmatprep.subr.mxu0 0.0
    %1109 = vmatpush2.msra.mxu0 0.0
    %1110 = vmatprep.subr.mxu0 0.0
    %1111 = vmatpush2.msra.mxu0 0.0
    %1112 = vmatprep.subr.mxu0 0.0
    %1113 = vmatpush2.msra.mxu0 0.0
    %1114 = vmatprep.subr.mxu0 0.0
    %1115 = vmatpush2.msra.mxu0 0.0
    %1116 = vmatprep.subr.mxu0 0.0
    %1117 = vmatpush2.msra.mxu0 0.0
    %1118 = vmatprep.subr.mxu0 0.0
    %1119 = vmatpush2.msra.mxu0 0.0
    %1120 = vmatprep.subr.mxu0 0.0
    %1121 = vmatpush2.msra.mxu0 0.0
    %1122 = vmatprep.subr.mxu0 0.0
    %1123 = vmatpush2.msra.mxu0 0.0
    %1124 = vmatprep.mubr.f32.mxu0 0.0
    %1125 = vmatmul.mubr.f32.gmra.mxu0 %v69
    %v1126 = vpop.f32.mrf.mxu0
    %v1127 = vadd.f32 %v55, %v1126
    %v1128 = vpop.f32.mrf.mxu0
    %1129 = vmatprep.mubr.f32.mxu0 0.0
    %1130 = vmatmul.mubr.f32.gmra.mxu0 %v72
    %v1131 = vpop.f32.mrf.mxu0
    %v1132 = vadd.f32 %v56, %v1131
    %v1133 = vpop.f32.mrf.mxu0
    %1134 = vmatprep.mubr.f32.mxu0 0.0
    %1135 = vmatmul.mubr.f32.gmra.mxu0 %v75
    %v1136 = vpop.f32.mrf.mxu0
    %v1137 = vadd.f32 %v57, %v1136
    %v1138 = vpop.f32.mrf.mxu0
    %1139 = vmatprep.mubr.f32.mxu0 0.0
    %1140 = vmatmul.mubr.f32.gmra.mxu0 %v78
    %v1141 = vpop.f32.mrf.mxu0
    %v1142 = vadd.f32 %v58, %v1141
    %v1143 = vpop.f32.mrf.mxu0
    %1144 = vdwg.mxu0
    %v1145 = vlaneseq
    %v1146 = vshrl.u32 %v1145, 7
    %v1147 = vsub.s32 3, %v1146
    %v1148 = vrot.slane %v59, %v1147
    %v1149 = vmul.f32 %v35, %v1148
    %v1150 = vmul.f32 %v36, %v1148
    %v1151 = vmul.f32 %v37, %v1148
    %v1152 = vmul.f32 %v38, %v1148
    %v1153 = vadd.f32 %v1149, %v39
    %v1154 = vadd.f32 %v1150, %v40
    %v1155 = vadd.f32 %v1151, %v41
    %v1156 = vadd.f32 %v1152, %v42
    %1157 = vmatprep.subr.mxu0 0.0
    %1158 = vmatpush1.msra.mxu0 0.0
    %1159 = vmatprep.subr.mxu0 0.0
    %1160 = vmatpush1.msra.mxu0 0.0
    %1161 = vmatprep.subr.mxu0 0.0
    %1162 = vmatpush1.msra.mxu0 0.0
    %1163 = vmatprep.subr.mxu0 0.0
    %1164 = vmatpush1.msra.mxu0 0.0
    %1165 = vmatprep.subr.mxu0 0.0
    %1166 = vmatpush1.msra.mxu0 0.0
    %1167 = vmatprep.subr.mxu0 0.0
    %1168 = vmatpush1.msra.mxu0 0.0
    %1169 = vmatprep.subr.mxu0 0.0
    %1170 = vmatpush1.msra.mxu0 0.0
    %1171 = vmatprep.subr.mxu0 0.0
    %1172 = vmatpush1.msra.mxu0 0.0
    %1173 = vmatprep.subr.mxu0 0.0
    %1174 = vmatpush1.msra.mxu0 0.0
    %1175 = vmatprep.subr.mxu0 0.0
    %1176 = vmatpush1.msra.mxu0 0.0
    %1177 = vmatprep.subr.mxu0 0.0
    %1178 = vmatpush1.msra.mxu0 0.0
    %1179 = vmatprep.subr.mxu0 0.0
    %1180 = vmatpush1.msra.mxu0 0.0
    %1181 = vmatprep.subr.mxu0 0.0
    %1182 = vmatpush1.msra.mxu0 0.0
    %1183 = vmatprep.subr.mxu0 0.0
    %1184 = vmatpush1.msra.mxu0 0.0
    %1185 = vmatprep.subr.mxu0 0.0
    %1186 = vmatpush1.msra.mxu0 0.0
    %1187 = vmatprep.subr.mxu0 0.0
    %1188 = vmatpush1.msra.mxu0 %v947
    %1189 = vmatprep.subr.mxu0 0.0
    %1190 = vmatpush2.msra.mxu0 0.0
    %1191 = vmatprep.subr.mxu0 0.0
    %1192 = vmatpush2.msra.mxu0 0.0
    %1193 = vmatprep.subr.mxu0 0.0
    %1194 = vmatpush2.msra.mxu0 0.0
    %1195 = vmatprep.subr.mxu0 0.0
    %1196 = vmatpush2.msra.mxu0 0.0
    %1197 = vmatprep.subr.mxu0 0.0
    %1198 = vmatpush2.msra.mxu0 0.0
    %1199 = vmatprep.subr.mxu0 0.0
    %1200 = vmatpush2.msra.mxu0 0.0
    %1201 = vmatprep.subr.mxu0 0.0
    %1202 = vmatpush2.msra.mxu0 0.0
    %1203 = vmatprep.subr.mxu0 0.0
    %1204 = vmatpush2.msra.mxu0 0.0
    %1205 = vmatprep.subr.mxu0 0.0
    %1206 = vmatpush2.msra.mxu0 0.0
    %1207 = vmatprep.subr.mxu0 0.0
    %1208 = vmatpush2.msra.mxu0 0.0
    %1209 = vmatprep.subr.mxu0 0.0
    %1210 = vmatpush2.msra.mxu0 0.0
    %1211 = vmatprep.subr.mxu0 0.0
    %1212 = vmatpush2.msra.mxu0 0.0
    %1213 = vmatprep.subr.mxu0 0.0
    %1214 = vmatpush2.msra.mxu0 0.0
    %1215 = vmatprep.subr.mxu0 0.0
    %1216 = vmatpush2.msra.mxu0 0.0
    %1217 = vmatprep.subr.mxu0 0.0
    %1218 = vmatpush2.msra.mxu0 0.0
    %1219 = vmatprep.subr.mxu0 0.0
    %1220 = vmatpush2.msra.mxu0 0.0
    %1221 = vmatprep.mubr.f32.mxu0 0.0
    %1222 = vmatmul.mubr.f32.gmra.mxu0 %v178
    %v1223 = vpop.f32.mrf.mxu0
    %v1224 = vadd.f32 0.0, %v1223
    %v1225 = vpop.f32.mrf.mxu0
    %1226 = vmatprep.mubr.f32.mxu0 0.0
    %1227 = vmatmul.mubr.f32.gmra.mxu0 %v181
    %v1228 = vpop.f32.mrf.mxu0
    %v1229 = vadd.f32 0.0, %v1228
    %v1230 = vpop.f32.mrf.mxu0
    %1231 = vmatprep.mubr.f32.mxu0 0.0
    %1232 = vmatmul.mubr.f32.gmra.mxu0 %v184
    %v1233 = vpop.f32.mrf.mxu0
    %v1234 = vadd.f32 0.0, %v1233
    %v1235 = vpop.f32.mrf.mxu0
    %1236 = vmatprep.mubr.f32.mxu0 0.0
    %1237 = vmatmul.mubr.f32.gmra.mxu0 %v187
    %v1238 = vpop.f32.mrf.mxu0
    %v1239 = vadd.f32 0.0, %v1238
    %v1240 = vpop.f32.mrf.mxu0
    %1241 = vdwg.mxu0
    %v1242 = vadd.f32 %v1153, %v1224
    %v1243 = vadd.f32 %v1154, %v1229
    %v1244 = vadd.f32 %v1155, %v1234
    %v1245 = vadd.f32 %v1156, %v1239
    %v1246 = vsub.f32 0.0, %v1242
    %v1247 = vsub.f32 0.0, %v1243
    %v1248 = vsub.f32 0.0, %v1245
    %v1249 = vmul.f32 %v1246, 1.442695
    %v1250 = vpow.pop %v1249
    %v1251 = vmul.f32 %v1247, 1.442695
    %v1252 = vpow.pop %v1251
    %v1253 = vmul.f32 %v1248, 1.442695
    %v1254 = vpow.pop %v1253
    %v1255 = vadd.f32 %v1250, 1.0
    %v1256 = vadd.f32 %v1252, 1.0
    %v1257 = vadd.f32 %v1254, 1.0
    %v1258 = vrcp.pop %v1255
    %v1259 = vrcp.pop %v1256
    %v1260 = vrcp.pop %v1257
    %v1261 = vtanh.pop %v1244
    %v1262 = vmul.f32 %v1259, %v945
    %v1263 = vmul.f32 %v1258, %v1261
    %v1264 = vadd.f32 %v1262, %v1263
    %v1265 = vtanh.pop %v1264
    %v1266 = vmul.f32 %v1260, %v1265
    %1267 = vmatprep.subr.mxu0 0.0
    %1268 = vmatpush1.msra.mxu0 0.0
    %1269 = vmatprep.subr.mxu0 0.0
    %1270 = vmatpush1.msra.mxu0 0.0
    %1271 = vmatprep.subr.mxu0 0.0
    %1272 = vmatpush1.msra.mxu0 0.0
    %1273 = vmatprep.subr.mxu0 0.0
    %1274 = vmatpush1.msra.mxu0 0.0
    %1275 = vmatprep.subr.mxu0 0.0
    %1276 = vmatpush1.msra.mxu0 0.0
    %1277 = vmatprep.subr.mxu0 0.0
    %1278 = vmatpush1.msra.mxu0 0.0
    %1279 = vmatprep.subr.mxu0 0.0
    %1280 = vmatpush1.msra.mxu0 0.0
    %1281 = vmatprep.subr.mxu0 0.0
    %1282 = vmatpush1.msra.mxu0 0.0
    %1283 = vmatprep.subr.mxu0 0.0
    %1284 = vmatpush1.msra.mxu0 0.0
    %1285 = vmatprep.subr.mxu0 0.0
    %1286 = vmatpush1.msra.mxu0 0.0
    %1287 = vmatprep.subr.mxu0 0.0
    %1288 = vmatpush1.msra.mxu0 0.0
    %1289 = vmatprep.subr.mxu0 0.0
    %1290 = vmatpush1.msra.mxu0 0.0
    %1291 = vmatprep.subr.mxu0 0.0
    %1292 = vmatpush1.msra.mxu0 0.0
    %1293 = vmatprep.subr.mxu0 0.0
    %1294 = vmatpush1.msra.mxu0 0.0
    %1295 = vmatprep.subr.mxu0 0.0
    %1296 = vmatpush1.msra.mxu0 0.0
    %1297 = vmatprep.subr.mxu0 0.0
    %1298 = vmatpush1.msra.mxu0 %v1266
    %1299 = vmatprep.subr.mxu0 0.0
    %1300 = vmatpush2.msra.mxu0 0.0
    %1301 = vmatprep.subr.mxu0 0.0
    %1302 = vmatpush2.msra.mxu0 0.0
    %1303 = vmatprep.subr.mxu0 0.0
    %1304 = vmatpush2.msra.mxu0 0.0
    %1305 = vmatprep.subr.mxu0 0.0
    %1306 = vmatpush2.msra.mxu0 0.0
    %1307 = vmatprep.subr.mxu0 0.0
    %1308 = vmatpush2.msra.mxu0 0.0
    %1309 = vmatprep.subr.mxu0 0.0
    %1310 = vmatpush2.msra.mxu0 0.0
    %1311 = vmatprep.subr.mxu0 0.0
    %1312 = vmatpush2.msra.mxu0 0.0
    %1313 = vmatprep.subr.mxu0 0.0
    %1314 = vmatpush2.msra.mxu0 0.0
    %1315 = vmatprep.subr.mxu0 0.0
    %1316 = vmatpush2.msra.mxu0 0.0
    %1317 = vmatprep.subr.mxu0 0.0
    %1318 = vmatpush2.msra.mxu0 0.0
    %1319 = vmatprep.subr.mxu0 0.0
    %1320 = vmatpush2.msra.mxu0 0.0
    %1321 = vmatprep.subr.mxu0 0.0
    %1322 = vmatpush2.msra.mxu0 0.0
    %1323 = vmatprep.subr.mxu0 0.0
    %1324 = vmatpush2.msra.mxu0 0.0
    %1325 = vmatprep.subr.mxu0 0.0
    %1326 = vmatpush2.msra.mxu0 0.0
    %1327 = vmatprep.subr.mxu0 0.0
    %1328 = vmatpush2.msra.mxu0 0.0
    %1329 = vmatprep.subr.mxu0 0.0
    %1330 = vmatpush2.msra.mxu0 0.0
    %1331 = vmatprep.mubr.f32.mxu0 0.0
    %1332 = vmatmul.mubr.f32.gmra.mxu0 %v300
    %v1333 = vpop.f32.mrf.mxu0
    %v1334 = vadd.f32 0.0, %v1333
    %v1335 = vpop.f32.mrf.mxu0
    %1336 = vmatprep.mubr.f32.mxu0 0.0
    %1337 = vmatmul.mubr.f32.gmra.mxu0 %v303
    %v1338 = vpop.f32.mrf.mxu0
    %v1339 = vadd.f32 0.0, %v1338
    %v1340 = vpop.f32.mrf.mxu0
    %1341 = vmatprep.mubr.f32.mxu0 0.0
    %1342 = vmatmul.mubr.f32.gmra.mxu0 %v306
    %v1343 = vpop.f32.mrf.mxu0
    %v1344 = vadd.f32 0.0, %v1343
    %v1345 = vpop.f32.mrf.mxu0
    %1346 = vmatprep.mubr.f32.mxu0 0.0
    %1347 = vmatmul.mubr.f32.gmra.mxu0 %v309
    %v1348 = vpop.f32.mrf.mxu0
    %v1349 = vadd.f32 0.0, %v1348
    %v1350 = vpop.f32.mrf.mxu0
    %1351 = vdwg.mxu0
    %v1352 = vadd.f32 %v1127, %v1334
    %v1353 = vadd.f32 %v1132, %v1339
    %v1354 = vadd.f32 %v1137, %v1344
    %v1355 = vadd.f32 %v1142, %v1349
    %v1356 = vsub.f32 0.0, %v1352
    %v1357 = vsub.f32 0.0, %v1353
    %v1358 = vsub.f32 0.0, %v1355
    %v1359 = vmul.f32 %v1356, 1.442695
    %v1360 = vpow.pop %v1359
    %v1361 = vmul.f32 %v1357, 1.442695
    %v1362 = vpow.pop %v1361
    %v1363 = vmul.f32 %v1358, 1.442695
    %v1364 = vpow.pop %v1363
    %v1365 = vadd.f32 %v1360, 1.0
    %v1366 = vadd.f32 %v1362, 1.0
    %v1367 = vadd.f32 %v1364, 1.0
    %v1368 = vrcp.pop %v1365
    %v1369 = vrcp.pop %v1366
    %v1370 = vrcp.pop %v1367
    %v1371 = vtanh.pop %v1354
    %v1372 = vmul.f32 %v1369, %v1055
    %v1373 = vmul.f32 %v1368, %v1371
    %v1374 = vadd.f32 %v1372, %v1373
    %v1375 = vtanh.pop %v1374
    %v1376 = vmul.f32 %v1370, %v1375
    %s1377 = scalar_lea.vmem [#allocation3], 24
    %1378 = vst [vmem:[%s1377] sm:$0xff] %v1376
    %1379 = vmatprep.subr.mxu0 0.0
    %1380 = vmatpush1.msra.mxu0 0.0
    %1381 = vmatprep.subr.mxu0 0.0
    %1382 = vmatpush1.msra.mxu0 0.0
    %1383 = vmatprep.subr.mxu0 0.0
    %1384 = vmatpush1.msra.mxu0 0.0
    %1385 = vmatprep.subr.mxu0 0.0
    %1386 = vmatpush1.msra.mxu0 0.0
    %1387 = vmatprep.subr.mxu0 0.0
    %1388 = vmatpush1.msra.mxu0 0.0
    %1389 = vmatprep.subr.mxu0 0.0
    %1390 = vmatpush1.msra.mxu0 0.0
    %1391 = vmatprep.subr.mxu0 0.0
    %1392 = vmatpush1.msra.mxu0 0.0
    %1393 = vmatprep.subr.mxu0 0.0
    %1394 = vmatpush1.msra.mxu0 0.0
    %1395 = vmatprep.subr.mxu0 0.0
    %1396 = vmatpush1.msra.mxu0 0.0
    %1397 = vmatprep.subr.mxu0 0.0
    %1398 = vmatpush1.msra.mxu0 0.0
    %1399 = vmatprep.subr.mxu0 0.0
    %1400 = vmatpush1.msra.mxu0 0.0
    %1401 = vmatprep.subr.mxu0 0.0
    %1402 = vmatpush1.msra.mxu0 0.0
    %1403 = vmatprep.subr.mxu0 0.0
    %1404 = vmatpush1.msra.mxu0 0.0
    %1405 = vmatprep.subr.mxu0 0.0
    %1406 = vmatpush1.msra.mxu0 0.0
    %1407 = vmatprep.subr.mxu0 0.0
    %1408 = vmatpush1.msra.mxu0 0.0
    %1409 = vmatprep.subr.mxu0 0.0
    %1410 = vmatpush1.msra.mxu0 %v1376
    %1411 = vmatprep.subr.mxu0 0.0
    %1412 = vmatpush2.msra.mxu0 0.0
    %1413 = vmatprep.subr.mxu0 0.0
    %1414 = vmatpush2.msra.mxu0 0.0
    %1415 = vmatprep.subr.mxu0 0.0
    %1416 = vmatpush2.msra.mxu0 0.0
    %1417 = vmatprep.subr.mxu0 0.0
    %1418 = vmatpush2.msra.mxu0 0.0
    %1419 = vmatprep.subr.mxu0 0.0
    %1420 = vmatpush2.msra.mxu0 0.0
    %1421 = vmatprep.subr.mxu0 0.0
    %1422 = vmatpush2.msra.mxu0 0.0
    %1423 = vmatprep.subr.mxu0 0.0
    %1424 = vmatpush2.msra.mxu0 0.0
    %1425 = vmatprep.subr.mxu0 0.0
    %1426 = vmatpush2.msra.mxu0 0.0
    %1427 = vmatprep.subr.mxu0 0.0
    %1428 = vmatpush2.msra.mxu0 0.0
    %1429 = vmatprep.subr.mxu0 0.0
    %1430 = vmatpush2.msra.mxu0 0.0
    %1431 = vmatprep.subr.mxu0 0.0
    %1432 = vmatpush2.msra.mxu0 0.0
    %1433 = vmatprep.subr.mxu0 0.0
    %1434 = vmatpush2.msra.mxu0 0.0
    %1435 = vmatprep.subr.mxu0 0.0
    %1436 = vmatpush2.msra.mxu0 0.0
    %1437 = vmatprep.subr.mxu0 0.0
    %1438 = vmatpush2.msra.mxu0 0.0
    %1439 = vmatprep.subr.mxu0 0.0
    %1440 = vmatpush2.msra.mxu0 0.0
    %1441 = vmatprep.subr.mxu0 0.0
    %1442 = vmatpush2.msra.mxu0 0.0
    %1443 = vmatprep.mubr.f32.mxu0 0.0
    %1444 = vmatmul.mubr.f32.gmra.mxu0 %v69
    %v1445 = vpop.f32.mrf.mxu0
    %v1446 = vadd.f32 %v55, %v1445
    %v1447 = vpop.f32.mrf.mxu0
    %1448 = vmatprep.mubr.f32.mxu0 0.0
    %1449 = vmatmul.mubr.f32.gmra.mxu0 %v72
    %v1450 = vpop.f32.mrf.mxu0
    %v1451 = vadd.f32 %v56, %v1450
    %v1452 = vpop.f32.mrf.mxu0
    %1453 = vmatprep.mubr.f32.mxu0 0.0
    %1454 = vmatmul.mubr.f32.gmra.mxu0 %v75
    %v1455 = vpop.f32.mrf.mxu0
    %v1456 = vadd.f32 %v57, %v1455
    %v1457 = vpop.f32.mrf.mxu0
    %1458 = vmatprep.mubr.f32.mxu0 0.0
    %1459 = vmatmul.mubr.f32.gmra.mxu0 %v78
    %v1460 = vpop.f32.mrf.mxu0
    %v1461 = vadd.f32 %v58, %v1460
    %v1462 = vpop.f32.mrf.mxu0
    %1463 = vdwg.mxu0
    %v1464 = vlaneseq
    %v1465 = vshrl.u32 %v1464, 7
    %v1466 = vsub.s32 4, %v1465
    %v1467 = vrot.slane %v59, %v1466
    %v1468 = vmul.f32 %v35, %v1467
    %v1469 = vmul.f32 %v36, %v1467
    %v1470 = vmul.f32 %v37, %v1467
    %v1471 = vmul.f32 %v38, %v1467
    %v1472 = vadd.f32 %v1468, %v39
    %v1473 = vadd.f32 %v1469, %v40
    %v1474 = vadd.f32 %v1470, %v41
    %v1475 = vadd.f32 %v1471, %v42
    %1476 = vmatprep.subr.mxu0 0.0
    %1477 = vmatpush1.msra.mxu0 0.0
    %1478 = vmatprep.subr.mxu0 0.0
    %1479 = vmatpush1.msra.mxu0 0.0
    %1480 = vmatprep.subr.mxu0 0.0
    %1481 = vmatpush1.msra.mxu0 0.0
    %1482 = vmatprep.subr.mxu0 0.0
    %1483 = vmatpush1.msra.mxu0 0.0
    %1484 = vmatprep.subr.mxu0 0.0
    %1485 = vmatpush1.msra.mxu0 0.0
    %1486 = vmatprep.subr.mxu0 0.0
    %1487 = vmatpush1.msra.mxu0 0.0
    %1488 = vmatprep.subr.mxu0 0.0
    %1489 = vmatpush1.msra.mxu0 0.0
    %1490 = vmatprep.subr.mxu0 0.0
    %1491 = vmatpush1.msra.mxu0 0.0
    %1492 = vmatprep.subr.mxu0 0.0
    %1493 = vmatpush1.msra.mxu0 0.0
    %1494 = vmatprep.subr.mxu0 0.0
    %1495 = vmatpush1.msra.mxu0 0.0
    %1496 = vmatprep.subr.mxu0 0.0
    %1497 = vmatpush1.msra.mxu0 0.0
    %1498 = vmatprep.subr.mxu0 0.0
    %1499 = vmatpush1.msra.mxu0 0.0
    %1500 = vmatprep.subr.mxu0 0.0
    %1501 = vmatpush1.msra.mxu0 0.0
    %1502 = vmatprep.subr.mxu0 0.0
    %1503 = vmatpush1.msra.mxu0 0.0
    %1504 = vmatprep.subr.mxu0 0.0
    %1505 = vmatpush1.msra.mxu0 0.0
    %1506 = vmatprep.subr.mxu0 0.0
    %1507 = vmatpush1.msra.mxu0 %v1266
    %1508 = vmatprep.subr.mxu0 0.0
    %1509 = vmatpush2.msra.mxu0 0.0
    %1510 = vmatprep.subr.mxu0 0.0
    %1511 = vmatpush2.msra.mxu0 0.0
    %1512 = vmatprep.subr.mxu0 0.0
    %1513 = vmatpush2.msra.mxu0 0.0
    %1514 = vmatprep.subr.mxu0 0.0
    %1515 = vmatpush2.msra.mxu0 0.0
    %1516 = vmatprep.subr.mxu0 0.0
    %1517 = vmatpush2.msra.mxu0 0.0
    %1518 = vmatprep.subr.mxu0 0.0
    %1519 = vmatpush2.msra.mxu0 0.0
    %1520 = vmatprep.subr.mxu0 0.0
    %1521 = vmatpush2.msra.mxu0 0.0
    %1522 = vmatprep.subr.mxu0 0.0
    %1523 = vmatpush2.msra.mxu0 0.0
    %1524 = vmatprep.subr.mxu0 0.0
    %1525 = vmatpush2.msra.mxu0 0.0
    %1526 = vmatprep.subr.mxu0 0.0
    %1527 = vmatpush2.msra.mxu0 0.0
    %1528 = vmatprep.subr.mxu0 0.0
    %1529 = vmatpush2.msra.mxu0 0.0
    %1530 = vmatprep.subr.mxu0 0.0
    %1531 = vmatpush2.msra.mxu0 0.0
    %1532 = vmatprep.subr.mxu0 0.0
    %1533 = vmatpush2.msra.mxu0 0.0
    %1534 = vmatprep.subr.mxu0 0.0
    %1535 = vmatpush2.msra.mxu0 0.0
    %1536 = vmatprep.subr.mxu0 0.0
    %1537 = vmatpush2.msra.mxu0 0.0
    %1538 = vmatprep.subr.mxu0 0.0
    %1539 = vmatpush2.msra.mxu0 0.0
    %1540 = vmatprep.mubr.f32.mxu0 0.0
    %1541 = vmatmul.mubr.f32.gmra.mxu0 %v178
    %v1542 = vpop.f32.mrf.mxu0
    %v1543 = vadd.f32 0.0, %v1542
    %v1544 = vpop.f32.mrf.mxu0
    %1545 = vmatprep.mubr.f32.mxu0 0.0
    %1546 = vmatmul.mubr.f32.gmra.mxu0 %v181
    %v1547 = vpop.f32.mrf.mxu0
    %v1548 = vadd.f32 0.0, %v1547
    %v1549 = vpop.f32.mrf.mxu0
    %1550 = vmatprep.mubr.f32.mxu0 0.0
    %1551 = vmatmul.mubr.f32.gmra.mxu0 %v184
    %v1552 = vpop.f32.mrf.mxu0
    %v1553 = vadd.f32 0.0, %v1552
    %v1554 = vpop.f32.mrf.mxu0
    %1555 = vmatprep.mubr.f32.mxu0 0.0
    %1556 = vmatmul.mubr.f32.gmra.mxu0 %v187
    %v1557 = vpop.f32.mrf.mxu0
    %v1558 = vadd.f32 0.0, %v1557
    %v1559 = vpop.f32.mrf.mxu0
    %1560 = vdwg.mxu0
    %v1561 = vadd.f32 %v1472, %v1543
    %v1562 = vadd.f32 %v1473, %v1548
    %v1563 = vadd.f32 %v1474, %v1553
    %v1564 = vadd.f32 %v1475, %v1558
    %v1565 = vsub.f32 0.0, %v1561
    %v1566 = vsub.f32 0.0, %v1562
    %v1567 = vsub.f32 0.0, %v1564
    %v1568 = vmul.f32 %v1565, 1.442695
    %v1569 = vpow.pop %v1568
    %v1570 = vmul.f32 %v1566, 1.442695
    %v1571 = vpow.pop %v1570
    %v1572 = vmul.f32 %v1567, 1.442695
    %v1573 = vpow.pop %v1572
    %v1574 = vadd.f32 %v1569, 1.0
    %v1575 = vadd.f32 %v1571, 1.0
    %v1576 = vadd.f32 %v1573, 1.0
    %v1577 = vrcp.pop %v1574
    %v1578 = vrcp.pop %v1575
    %v1579 = vrcp.pop %v1576
    %v1580 = vtanh.pop %v1563
    %v1581 = vmul.f32 %v1578, %v1264
    %v1582 = vmul.f32 %v1577, %v1580
    %v1583 = vadd.f32 %v1581, %v1582
    %v1584 = vtanh.pop %v1583
    %v1585 = vmul.f32 %v1579, %v1584
    %1586 = vmatprep.subr.mxu0 0.0
    %1587 = vmatpush1.msra.mxu0 0.0
    %1588 = vmatprep.subr.mxu0 0.0
    %1589 = vmatpush1.msra.mxu0 0.0
    %1590 = vmatprep.subr.mxu0 0.0
    %1591 = vmatpush1.msra.mxu0 0.0
    %1592 = vmatprep.subr.mxu0 0.0
    %1593 = vmatpush1.msra.mxu0 0.0
    %1594 = vmatprep.subr.mxu0 0.0
    %1595 = vmatpush1.msra.mxu0 0.0
    %1596 = vmatprep.subr.mxu0 0.0
    %1597 = vmatpush1.msra.mxu0 0.0
    %1598 = vmatprep.subr.mxu0 0.0
    %1599 = vmatpush1.msra.mxu0 0.0
    %1600 = vmatprep.subr.mxu0 0.0
    %1601 = vmatpush1.msra.mxu0 0.0
    %1602 = vmatprep.subr.mxu0 0.0
    %1603 = vmatpush1.msra.mxu0 0.0
    %1604 = vmatprep.subr.mxu0 0.0
    %1605 = vmatpush1.msra.mxu0 0.0
    %1606 = vmatprep.subr.mxu0 0.0
    %1607 = vmatpush1.msra.mxu0 0.0
    %1608 = vmatprep.subr.mxu0 0.0
    %1609 = vmatpush1.msra.mxu0 0.0
    %1610 = vmatprep.subr.mxu0 0.0
    %1611 = vmatpush1.msra.mxu0 0.0
    %1612 = vmatprep.subr.mxu0 0.0
    %1613 = vmatpush1.msra.mxu0 0.0
    %1614 = vmatprep.subr.mxu0 0.0
    %1615 = vmatpush1.msra.mxu0 0.0
    %1616 = vmatprep.subr.mxu0 0.0
    %1617 = vmatpush1.msra.mxu0 %v1585
    %1618 = vmatprep.subr.mxu0 0.0
    %1619 = vmatpush2.msra.mxu0 0.0
    %1620 = vmatprep.subr.mxu0 0.0
    %1621 = vmatpush2.msra.mxu0 0.0
    %1622 = vmatprep.subr.mxu0 0.0
    %1623 = vmatpush2.msra.mxu0 0.0
    %1624 = vmatprep.subr.mxu0 0.0
    %1625 = vmatpush2.msra.mxu0 0.0
    %1626 = vmatprep.subr.mxu0 0.0
    %1627 = vmatpush2.msra.mxu0 0.0
    %1628 = vmatprep.subr.mxu0 0.0
    %1629 = vmatpush2.msra.mxu0 0.0
    %1630 = vmatprep.subr.mxu0 0.0
    %1631 = vmatpush2.msra.mxu0 0.0
    %1632 = vmatprep.subr.mxu0 0.0
    %1633 = vmatpush2.msra.mxu0 0.0
    %1634 = vmatprep.subr.mxu0 0.0
    %1635 = vmatpush2.msra.mxu0 0.0
    %1636 = vmatprep.subr.mxu0 0.0
    %1637 = vmatpush2.msra.mxu0 0.0
    %1638 = vmatprep.subr.mxu0 0.0
    %1639 = vmatpush2.msra.mxu0 0.0
    %1640 = vmatprep.subr.mxu0 0.0
    %1641 = vmatpush2.msra.mxu0 0.0
    %1642 = vmatprep.subr.mxu0 0.0
    %1643 = vmatpush2.msra.mxu0 0.0
    %1644 = vmatprep.subr.mxu0 0.0
    %1645 = vmatpush2.msra.mxu0 0.0
    %1646 = vmatprep.subr.mxu0 0.0
    %1647 = vmatpush2.msra.mxu0 0.0
    %1648 = vmatprep.subr.mxu0 0.0
    %1649 = vmatpush2.msra.mxu0 0.0
    %1650 = vmatprep.mubr.f32.mxu0 0.0
    %1651 = vmatmul.mubr.f32.gmra.mxu0 %v300
    %v1652 = vpop.f32.mrf.mxu0
    %v1653 = vadd.f32 0.0, %v1652
    %v1654 = vpop.f32.mrf.mxu0
    %1655 = vmatprep.mubr.f32.mxu0 0.0
    %1656 = vmatmul.mubr.f32.gmra.mxu0 %v303
    %v1657 = vpop.f32.mrf.mxu0
    %v1658 = vadd.f32 0.0, %v1657
    %v1659 = vpop.f32.mrf.mxu0
    %1660 = vmatprep.mubr.f32.mxu0 0.0
    %1661 = vmatmul.mubr.f32.gmra.mxu0 %v306
    %v1662 = vpop.f32.mrf.mxu0
    %v1663 = vadd.f32 0.0, %v1662
    %v1664 = vpop.f32.mrf.mxu0
    %1665 = vmatprep.mubr.f32.mxu0 0.0
    %1666 = vmatmul.mubr.f32.gmra.mxu0 %v309
    %v1667 = vpop.f32.mrf.mxu0
    %v1668 = vadd.f32 0.0, %v1667
    %v1669 = vpop.f32.mrf.mxu0
    %1670 = vdwg.mxu0
    %v1671 = vadd.f32 %v1446, %v1653
    %v1672 = vadd.f32 %v1451, %v1658
    %v1673 = vadd.f32 %v1456, %v1663
    %v1674 = vadd.f32 %v1461, %v1668
    %v1675 = vsub.f32 0.0, %v1671
    %v1676 = vsub.f32 0.0, %v1672
    %v1677 = vsub.f32 0.0, %v1674
    %v1678 = vmul.f32 %v1675, 1.442695
    %v1679 = vpow.pop %v1678
    %v1680 = vmul.f32 %v1676, 1.442695
    %v1681 = vpow.pop %v1680
    %v1682 = vmul.f32 %v1677, 1.442695
    %v1683 = vpow.pop %v1682
    %v1684 = vadd.f32 %v1679, 1.0
    %v1685 = vadd.f32 %v1681, 1.0
    %v1686 = vadd.f32 %v1683, 1.0
    %v1687 = vrcp.pop %v1684
    %v1688 = vrcp.pop %v1685
    %v1689 = vrcp.pop %v1686
    %v1690 = vtanh.pop %v1673
    %v1691 = vmul.f32 %v1688, %v1374
    %v1692 = vmul.f32 %v1687, %v1690
    %v1693 = vadd.f32 %v1691, %v1692
    %v1694 = vtanh.pop %v1693
    %v1695 = vmul.f32 %v1689, %v1694
    %s1696 = scalar_lea.vmem [#allocation3], 32
    %1697 = vst [vmem:[%s1696] sm:$0xff] %v1695
    %1698 = vmatprep.subr.mxu0 0.0
    %1699 = vmatpush1.msra.mxu0 0.0
    %1700 = vmatprep.subr.mxu0 0.0
    %1701 = vmatpush1.msra.mxu0 0.0
    %1702 = vmatprep.subr.mxu0 0.0
    %1703 = vmatpush1.msra.mxu0 0.0
    %1704 = vmatprep.subr.mxu0 0.0
    %1705 = vmatpush1.msra.mxu0 0.0
    %1706 = vmatprep.subr.mxu0 0.0
    %1707 = vmatpush1.msra.mxu0 0.0
    %1708 = vmatprep.subr.mxu0 0.0
    %1709 = vmatpush1.msra.mxu0 0.0
    %1710 = vmatprep.subr.mxu0 0.0
    %1711 = vmatpush1.msra.mxu0 0.0
    %1712 = vmatprep.subr.mxu0 0.0
    %1713 = vmatpush1.msra.mxu0 0.0
    %1714 = vmatprep.subr.mxu0 0.0
    %1715 = vmatpush1.msra.mxu0 0.0
    %1716 = vmatprep.subr.mxu0 0.0
    %1717 = vmatpush1.msra.mxu0 0.0
    %1718 = vmatprep.subr.mxu0 0.0
    %1719 = vmatpush1.msra.mxu0 0.0
    %1720 = vmatprep.subr.mxu0 0.0
    %1721 = vmatpush1.msra.mxu0 0.0
    %1722 = vmatprep.subr.mxu0 0.0
    %1723 = vmatpush1.msra.mxu0 0.0
    %1724 = vmatprep.subr.mxu0 0.0
    %1725 = vmatpush1.msra.mxu0 0.0
    %1726 = vmatprep.subr.mxu0 0.0
    %1727 = vmatpush1.msra.mxu0 0.0
    %1728 = vmatprep.subr.mxu0 0.0
    %1729 = vmatpush1.msra.mxu0 %v1695
    %1730 = vmatprep.subr.mxu0 0.0
    %1731 = vmatpush2.msra.mxu0 0.0
    %1732 = vmatprep.subr.mxu0 0.0
    %1733 = vmatpush2.msra.mxu0 0.0
    %1734 = vmatprep.subr.mxu0 0.0
    %1735 = vmatpush2.msra.mxu0 0.0
    %1736 = vmatprep.subr.mxu0 0.0
    %1737 = vmatpush2.msra.mxu0 0.0
    %1738 = vmatprep.subr.mxu0 0.0
    %1739 = vmatpush2.msra.mxu0 0.0
    %1740 = vmatprep.subr.mxu0 0.0
    %1741 = vmatpush2.msra.mxu0 0.0
    %1742 = vmatprep.subr.mxu0 0.0
    %1743 = vmatpush2.msra.mxu0 0.0
    %1744 = vmatprep.subr.mxu0 0.0
    %1745 = vmatpush2.msra.mxu0 0.0
    %1746 = vmatprep.subr.mxu0 0.0
    %1747 = vmatpush2.msra.mxu0 0.0
    %1748 = vmatprep.subr.mxu0 0.0
    %1749 = vmatpush2.msra.mxu0 0.0
    %1750 = vmatprep.subr.mxu0 0.0
    %1751 = vmatpush2.msra.mxu0 0.0
    %1752 = vmatprep.subr.mxu0 0.0
    %1753 = vmatpush2.msra.mxu0 0.0
    %1754 = vmatprep.subr.mxu0 0.0
    %1755 = vmatpush2.msra.mxu0 0.0
    %1756 = vmatprep.subr.mxu0 0.0
    %1757 = vmatpush2.msra.mxu0 0.0
    %1758 = vmatprep.subr.mxu0 0.0
    %1759 = vmatpush2.msra.mxu0 0.0
    %1760 = vmatprep.subr.mxu0 0.0
    %1761 = vmatpush2.msra.mxu0 0.0
    %1762 = vmatprep.mubr.f32.mxu0 0.0
    %1763 = vmatmul.mubr.f32.gmra.mxu0 %v69
    %v1764 = vpop.f32.mrf.mxu0
    %v1765 = vadd.f32 %v55, %v1764
    %v1766 = vpop.f32.mrf.mxu0
    %1767 = vmatprep.mubr.f32.mxu0 0.0
    %1768 = vmatmul.mubr.f32.gmra.mxu0 %v72
    %v1769 = vpop.f32.mrf.mxu0
    %v1770 = vadd.f32 %v56, %v1769
    %v1771 = vpop.f32.mrf.mxu0
    %1772 = vmatprep.mubr.f32.mxu0 0.0
    %1773 = vmatmul.mubr.f32.gmra.mxu0 %v75
    %v1774 = vpop.f32.mrf.mxu0
    %v1775 = vadd.f32 %v57, %v1774
    %v1776 = vpop.f32.mrf.mxu0
    %1777 = vmatprep.mubr.f32.mxu0 0.0
    %1778 = vmatmul.mubr.f32.gmra.mxu0 %v78
    %v1779 = vpop.f32.mrf.mxu0
    %v1780 = vadd.f32 %v58, %v1779
    %v1781 = vpop.f32.mrf.mxu0
    %1782 = vdwg.mxu0
    %v1783 = vlaneseq
    %v1784 = vshrl.u32 %v1783, 7
    %v1785 = vsub.s32 5, %v1784
    %v1786 = vrot.slane %v59, %v1785
    %v1787 = vmul.f32 %v35, %v1786
    %v1788 = vmul.f32 %v36, %v1786
    %v1789 = vmul.f32 %v37, %v1786
    %v1790 = vmul.f32 %v38, %v1786
    %v1791 = vadd.f32 %v1787, %v39
    %v1792 = vadd.f32 %v1788, %v40
    %v1793 = vadd.f32 %v1789, %v41
    %v1794 = vadd.f32 %v1790, %v42
    %1795 = vmatprep.subr.mxu0 0.0
    %1796 = vmatpush1.msra.mxu0 0.0
    %1797 = vmatprep.subr.mxu0 0.0
    %1798 = vmatpush1.msra.mxu0 0.0
    %1799 = vmatprep.subr.mxu0 0.0
    %1800 = vmatpush1.msra.mxu0 0.0
    %1801 = vmatprep.subr.mxu0 0.0
    %1802 = vmatpush1.msra.mxu0 0.0
    %1803 = vmatprep.subr.mxu0 0.0
    %1804 = vmatpush1.msra.mxu0 0.0
    %1805 = vmatprep.subr.mxu0 0.0
    %1806 = vmatpush1.msra.mxu0 0.0
    %1807 = vmatprep.subr.mxu0 0.0
    %1808 = vmatpush1.msra.mxu0 0.0
    %1809 = vmatprep.subr.mxu0 0.0
    %1810 = vmatpush1.msra.mxu0 0.0
    %1811 = vmatprep.subr.mxu0 0.0
    %1812 = vmatpush1.msra.mxu0 0.0
    %1813 = vmatprep.subr.mxu0 0.0
    %1814 = vmatpush1.msra.mxu0 0.0
    %1815 = vmatprep.subr.mxu0 0.0
    %1816 = vmatpush1.msra.mxu0 0.0
    %1817 = vmatprep.subr.mxu0 0.0
    %1818 = vmatpush1.msra.mxu0 0.0
    %1819 = vmatprep.subr.mxu0 0.0
    %1820 = vmatpush1.msra.mxu0 0.0
    %1821 = vmatprep.subr.mxu0 0.0
    %1822 = vmatpush1.msra.mxu0 0.0
    %1823 = vmatprep.subr.mxu0 0.0
    %1824 = vmatpush1.msra.mxu0 0.0
    %1825 = vmatprep.subr.mxu0 0.0
    %1826 = vmatpush1.msra.mxu0 %v1585
    %1827 = vmatprep.subr.mxu0 0.0
    %1828 = vmatpush2.msra.mxu0 0.0
    %1829 = vmatprep.subr.mxu0 0.0
    %1830 = vmatpush2.msra.mxu0 0.0
    %1831 = vmatprep.subr.mxu0 0.0
    %1832 = vmatpush2.msra.mxu0 0.0
    %1833 = vmatprep.subr.mxu0 0.0
    %1834 = vmatpush2.msra.mxu0 0.0
    %1835 = vmatprep.subr.mxu0 0.0
    %1836 = vmatpush2.msra.mxu0 0.0
    %1837 = vmatprep.subr.mxu0 0.0
    %1838 = vmatpush2.msra.mxu0 0.0
    %1839 = vmatprep.subr.mxu0 0.0
    %1840 = vmatpush2.msra.mxu0 0.0
    %1841 = vmatprep.subr.mxu0 0.0
    %1842 = vmatpush2.msra.mxu0 0.0
    %1843 = vmatprep.subr.mxu0 0.0
    %1844 = vmatpush2.msra.mxu0 0.0
    %1845 = vmatprep.subr.mxu0 0.0
    %1846 = vmatpush2.msra.mxu0 0.0
    %1847 = vmatprep.subr.mxu0 0.0
    %1848 = vmatpush2.msra.mxu0 0.0
    %1849 = vmatprep.subr.mxu0 0.0
    %1850 = vmatpush2.msra.mxu0 0.0
    %1851 = vmatprep.subr.mxu0 0.0
    %1852 = vmatpush2.msra.mxu0 0.0
    %1853 = vmatprep.subr.mxu0 0.0
    %1854 = vmatpush2.msra.mxu0 0.0
    %1855 = vmatprep.subr.mxu0 0.0
    %1856 = vmatpush2.msra.mxu0 0.0
    %1857 = vmatprep.subr.mxu0 0.0
    %1858 = vmatpush2.msra.mxu0 0.0
    %1859 = vmatprep.mubr.f32.mxu0 0.0
    %1860 = vmatmul.mubr.f32.gmra.mxu0 %v178
    %v1861 = vpop.f32.mrf.mxu0
    %v1862 = vadd.f32 0.0, %v1861
    %v1863 = vpop.f32.mrf.mxu0
    %1864 = vmatprep.mubr.f32.mxu0 0.0
    %1865 = vmatmul.mubr.f32.gmra.mxu0 %v181
    %v1866 = vpop.f32.mrf.mxu0
    %v1867 = vadd.f32 0.0, %v1866
    %v1868 = vpop.f32.mrf.mxu0
    %1869 = vmatprep.mubr.f32.mxu0 0.0
    %1870 = vmatmul.mubr.f32.gmra.mxu0 %v184
    %v1871 = vpop.f32.mrf.mxu0
    %v1872 = vadd.f32 0.0, %v1871
    %v1873 = vpop.f32.mrf.mxu0
    %1874 = vmatprep.mubr.f32.mxu0 0.0
    %1875 = vmatmul.mubr.f32.gmra.mxu0 %v187
    %v1876 = vpop.f32.mrf.mxu0
    %v1877 = vadd.f32 0.0, %v1876
    %v1878 = vpop.f32.mrf.mxu0
    %1879 = vdwg.mxu0
    %v1880 = vadd.f32 %v1791, %v1862
    %v1881 = vadd.f32 %v1792, %v1867
    %v1882 = vadd.f32 %v1793, %v1872
    %v1883 = vadd.f32 %v1794, %v1877
    %v1884 = vsub.f32 0.0, %v1880
    %v1885 = vsub.f32 0.0, %v1881
    %v1886 = vsub.f32 0.0, %v1883
    %v1887 = vmul.f32 %v1884, 1.442695
    %v1888 = vpow.pop %v1887
    %v1889 = vmul.f32 %v1885, 1.442695
    %v1890 = vpow.pop %v1889
    %v1891 = vmul.f32 %v1886, 1.442695
    %v1892 = vpow.pop %v1891
    %v1893 = vadd.f32 %v1888, 1.0
    %v1894 = vadd.f32 %v1890, 1.0
    %v1895 = vadd.f32 %v1892, 1.0
    %v1896 = vrcp.pop %v1893
    %v1897 = vrcp.pop %v1894
    %v1898 = vrcp.pop %v1895
    %v1899 = vtanh.pop %v1882
    %v1900 = vmul.f32 %v1897, %v1583
    %v1901 = vmul.f32 %v1896, %v1899
    %v1902 = vadd.f32 %v1900, %v1901
    %v1903 = vtanh.pop %v1902
    %v1904 = vmul.f32 %v1898, %v1903
    %1905 = vmatprep.subr.mxu0 0.0
    %1906 = vmatpush1.msra.mxu0 0.0
    %1907 = vmatprep.subr.mxu0 0.0
    %1908 = vmatpush1.msra.mxu0 0.0
    %1909 = vmatprep.subr.mxu0 0.0
    %1910 = vmatpush1.msra.mxu0 0.0
    %1911 = vmatprep.subr.mxu0 0.0
    %1912 = vmatpush1.msra.mxu0 0.0
    %1913 = vmatprep.subr.mxu0 0.0
    %1914 = vmatpush1.msra.mxu0 0.0
    %1915 = vmatprep.subr.mxu0 0.0
    %1916 = vmatpush1.msra.mxu0 0.0
    %1917 = vmatprep.subr.mxu0 0.0
    %1918 = vmatpush1.msra.mxu0 0.0
    %1919 = vmatprep.subr.mxu0 0.0
    %1920 = vmatpush1.msra.mxu0 0.0
    %1921 = vmatprep.subr.mxu0 0.0
    %1922 = vmatpush1.msra.mxu0 0.0
    %1923 = vmatprep.subr.mxu0 0.0
    %1924 = vmatpush1.msra.mxu0 0.0
    %1925 = vmatprep.subr.mxu0 0.0
    %1926 = vmatpush1.msra.mxu0 0.0
    %1927 = vmatprep.subr.mxu0 0.0
    %1928 = vmatpush1.msra.mxu0 0.0
    %1929 = vmatprep.subr.mxu0 0.0
    %1930 = vmatpush1.msra.mxu0 0.0
    %1931 = vmatprep.subr.mxu0 0.0
    %1932 = vmatpush1.msra.mxu0 0.0
    %1933 = vmatprep.subr.mxu0 0.0
    %1934 = vmatpush1.msra.mxu0 0.0
    %1935 = vmatprep.subr.mxu0 0.0
    %1936 = vmatpush1.msra.mxu0 %v1904
    %1937 = vmatprep.subr.mxu0 0.0
    %1938 = vmatpush2.msra.mxu0 0.0
    %1939 = vmatprep.subr.mxu0 0.0
    %1940 = vmatpush2.msra.mxu0 0.0
    %1941 = vmatprep.subr.mxu0 0.0
    %1942 = vmatpush2.msra.mxu0 0.0
    %1943 = vmatprep.subr.mxu0 0.0
    %1944 = vmatpush2.msra.mxu0 0.0
    %1945 = vmatprep.subr.mxu0 0.0
    %1946 = vmatpush2.msra.mxu0 0.0
    %1947 = vmatprep.subr.mxu0 0.0
    %1948 = vmatpush2.msra.mxu0 0.0
    %1949 = vmatprep.subr.mxu0 0.0
    %1950 = vmatpush2.msra.mxu0 0.0
    %1951 = vmatprep.subr.mxu0 0.0
    %1952 = vmatpush2.msra.mxu0 0.0
    %1953 = vmatprep.subr.mxu0 0.0
    %1954 = vmatpush2.msra.mxu0 0.0
    %1955 = vmatprep.subr.mxu0 0.0
    %1956 = vmatpush2.msra.mxu0 0.0
    %1957 = vmatprep.subr.mxu0 0.0
    %1958 = vmatpush2.msra.mxu0 0.0
    %1959 = vmatprep.subr.mxu0 0.0
    %1960 = vmatpush2.msra.mxu0 0.0
    %1961 = vmatprep.subr.mxu0 0.0
    %1962 = vmatpush2.msra.mxu0 0.0
    %1963 = vmatprep.subr.mxu0 0.0
    %1964 = vmatpush2.msra.mxu0 0.0
    %1965 = vmatprep.subr.mxu0 0.0
    %1966 = vmatpush2.msra.mxu0 0.0
    %1967 = vmatprep.subr.mxu0 0.0
    %1968 = vmatpush2.msra.mxu0 0.0
    %1969 = vmatprep.mubr.f32.mxu0 0.0
    %1970 = vmatmul.mubr.f32.gmra.mxu0 %v300
    %v1971 = vpop.f32.mrf.mxu0
    %v1972 = vadd.f32 0.0, %v1971
    %v1973 = vpop.f32.mrf.mxu0
    %1974 = vmatprep.mubr.f32.mxu0 0.0
    %1975 = vmatmul.mubr.f32.gmra.mxu0 %v303
    %v1976 = vpop.f32.mrf.mxu0
    %v1977 = vadd.f32 0.0, %v1976
    %v1978 = vpop.f32.mrf.mxu0
    %1979 = vmatprep.mubr.f32.mxu0 0.0
    %1980 = vmatmul.mubr.f32.gmra.mxu0 %v306
    %v1981 = vpop.f32.mrf.mxu0
    %v1982 = vadd.f32 0.0, %v1981
    %v1983 = vpop.f32.mrf.mxu0
    %1984 = vmatprep.mubr.f32.mxu0 0.0
    %1985 = vmatmul.mubr.f32.gmra.mxu0 %v309
    %v1986 = vpop.f32.mrf.mxu0
    %v1987 = vadd.f32 0.0, %v1986
    %v1988 = vpop.f32.mrf.mxu0
    %1989 = vdwg.mxu0
    %v1990 = vadd.f32 %v1765, %v1972
    %v1991 = vadd.f32 %v1770, %v1977
    %v1992 = vadd.f32 %v1775, %v1982
    %v1993 = vadd.f32 %v1780, %v1987
    %v1994 = vsub.f32 0.0, %v1990
    %v1995 = vsub.f32 0.0, %v1991
    %v1996 = vsub.f32 0.0, %v1993
    %v1997 = vmul.f32 %v1994, 1.442695
    %v1998 = vpow.pop %v1997
    %v1999 = vmul.f32 %v1995, 1.442695
    %v2000 = vpow.pop %v1999
    %v2001 = vmul.f32 %v1996, 1.442695
    %v2002 = vpow.pop %v2001
    %v2003 = vadd.f32 %v1998, 1.0
    %v2004 = vadd.f32 %v2000, 1.0
    %v2005 = vadd.f32 %v2002, 1.0
    %v2006 = vrcp.pop %v2003
    %v2007 = vrcp.pop %v2004
    %v2008 = vrcp.pop %v2005
    %v2009 = vtanh.pop %v1992
    %v2010 = vmul.f32 %v2007, %v1693
    %v2011 = vmul.f32 %v2006, %v2009
    %v2012 = vadd.f32 %v2010, %v2011
    %v2013 = vtanh.pop %v2012
    %v2014 = vmul.f32 %v2008, %v2013
    %s2015 = scalar_lea.vmem [#allocation3], 40
    %2016 = vst [vmem:[%s2015] sm:$0xff] %v2014
    %2017 = vmatprep.subr.mxu0 0.0
    %2018 = vmatpush1.msra.mxu0 0.0
    %2019 = vmatprep.subr.mxu0 0.0
    %2020 = vmatpush1.msra.mxu0 0.0
    %2021 = vmatprep.subr.mxu0 0.0
    %2022 = vmatpush1.msra.mxu0 0.0
    %2023 = vmatprep.subr.mxu0 0.0
    %2024 = vmatpush1.msra.mxu0 0.0
    %2025 = vmatprep.subr.mxu0 0.0
    %2026 = vmatpush1.msra.mxu0 0.0
    %2027 = vmatprep.subr.mxu0 0.0
    %2028 = vmatpush1.msra.mxu0 0.0
    %2029 = vmatprep.subr.mxu0 0.0
    %2030 = vmatpush1.msra.mxu0 0.0
    %2031 = vmatprep.subr.mxu0 0.0
    %2032 = vmatpush1.msra.mxu0 0.0
    %2033 = vmatprep.subr.mxu0 0.0
    %2034 = vmatpush1.msra.mxu0 0.0
    %2035 = vmatprep.subr.mxu0 0.0
    %2036 = vmatpush1.msra.mxu0 0.0
    %2037 = vmatprep.subr.mxu0 0.0
    %2038 = vmatpush1.msra.mxu0 0.0
    %2039 = vmatprep.subr.mxu0 0.0
    %2040 = vmatpush1.msra.mxu0 0.0
    %2041 = vmatprep.subr.mxu0 0.0
    %2042 = vmatpush1.msra.mxu0 0.0
    %2043 = vmatprep.subr.mxu0 0.0
    %2044 = vmatpush1.msra.mxu0 0.0
    %2045 = vmatprep.subr.mxu0 0.0
    %2046 = vmatpush1.msra.mxu0 0.0
    %2047 = vmatprep.subr.mxu0 0.0
    %2048 = vmatpush1.msra.mxu0 %v2014
    %2049 = vmatprep.subr.mxu0 0.0
    %2050 = vmatpush2.msra.mxu0 0.0
    %2051 = vmatprep.subr.mxu0 0.0
    %2052 = vmatpush2.msra.mxu0 0.0
    %2053 = vmatprep.subr.mxu0 0.0
    %2054 = vmatpush2.msra.mxu0 0.0
    %2055 = vmatprep.subr.mxu0 0.0
    %2056 = vmatpush2.msra.mxu0 0.0
    %2057 = vmatprep.subr.mxu0 0.0
    %2058 = vmatpush2.msra.mxu0 0.0
    %2059 = vmatprep.subr.mxu0 0.0
    %2060 = vmatpush2.msra.mxu0 0.0
    %2061 = vmatprep.subr.mxu0 0.0
    %2062 = vmatpush2.msra.mxu0 0.0
    %2063 = vmatprep.subr.mxu0 0.0
    %2064 = vmatpush2.msra.mxu0 0.0
    %2065 = vmatprep.subr.mxu0 0.0
    %2066 = vmatpush2.msra.mxu0 0.0
    %2067 = vmatprep.subr.mxu0 0.0
    %2068 = vmatpush2.msra.mxu0 0.0
    %2069 = vmatprep.subr.mxu0 0.0
    %2070 = vmatpush2.msra.mxu0 0.0
    %2071 = vmatprep.subr.mxu0 0.0
    %2072 = vmatpush2.msra.mxu0 0.0
    %2073 = vmatprep.subr.mxu0 0.0
    %2074 = vmatpush2.msra.mxu0 0.0
    %2075 = vmatprep.subr.mxu0 0.0
    %2076 = vmatpush2.msra.mxu0 0.0
    %2077 = vmatprep.subr.mxu0 0.0
    %2078 = vmatpush2.msra.mxu0 0.0
    %2079 = vmatprep.subr.mxu0 0.0
    %2080 = vmatpush2.msra.mxu0 0.0
    %2081 = vmatprep.mubr.f32.mxu0 0.0
    %2082 = vmatmul.mubr.f32.gmra.mxu0 %v69
    %v2083 = vpop.f32.mrf.mxu0
    %v2084 = vadd.f32 %v55, %v2083
    %v2085 = vpop.f32.mrf.mxu0
    %2086 = vmatprep.mubr.f32.mxu0 0.0
    %2087 = vmatmul.mubr.f32.gmra.mxu0 %v72
    %v2088 = vpop.f32.mrf.mxu0
    %v2089 = vadd.f32 %v56, %v2088
    %v2090 = vpop.f32.mrf.mxu0
    %2091 = vmatprep.mubr.f32.mxu0 0.0
    %2092 = vmatmul.mubr.f32.gmra.mxu0 %v75
    %v2093 = vpop.f32.mrf.mxu0
    %v2094 = vadd.f32 %v57, %v2093
    %v2095 = vpop.f32.mrf.mxu0
    %2096 = vmatprep.mubr.f32.mxu0 0.0
    %2097 = vmatmul.mubr.f32.gmra.mxu0 %v78
    %v2098 = vpop.f32.mrf.mxu0
    %v2099 = vadd.f32 %v58, %v2098
    %v2100 = vpop.f32.mrf.mxu0
    %2101 = vdwg.mxu0
    %v2102 = vlaneseq
    %v2103 = vshrl.u32 %v2102, 7
    %v2104 = vsub.s32 6, %v2103
    %v2105 = vrot.slane %v59, %v2104
    %v2106 = vmul.f32 %v35, %v2105
    %v2107 = vmul.f32 %v36, %v2105
    %v2108 = vmul.f32 %v37, %v2105
    %v2109 = vmul.f32 %v38, %v2105
    %v2110 = vadd.f32 %v2106, %v39
    %v2111 = vadd.f32 %v2107, %v40
    %v2112 = vadd.f32 %v2108, %v41
    %v2113 = vadd.f32 %v2109, %v42
    %2114 = vmatprep.subr.mxu0 0.0
    %2115 = vmatpush1.msra.mxu0 0.0
    %2116 = vmatprep.subr.mxu0 0.0
    %2117 = vmatpush1.msra.mxu0 0.0
    %2118 = vmatprep.subr.mxu0 0.0
    %2119 = vmatpush1.msra.mxu0 0.0
    %2120 = vmatprep.subr.mxu0 0.0
    %2121 = vmatpush1.msra.mxu0 0.0
    %2122 = vmatprep.subr.mxu0 0.0
    %2123 = vmatpush1.msra.mxu0 0.0
    %2124 = vmatprep.subr.mxu0 0.0
    %2125 = vmatpush1.msra.mxu0 0.0
    %2126 = vmatprep.subr.mxu0 0.0
    %2127 = vmatpush1.msra.mxu0 0.0
    %2128 = vmatprep.subr.mxu0 0.0
    %2129 = vmatpush1.msra.mxu0 0.0
    %2130 = vmatprep.subr.mxu0 0.0
    %2131 = vmatpush1.msra.mxu0 0.0
    %2132 = vmatprep.subr.mxu0 0.0
    %2133 = vmatpush1.msra.mxu0 0.0
    %2134 = vmatprep.subr.mxu0 0.0
    %2135 = vmatpush1.msra.mxu0 0.0
    %2136 = vmatprep.subr.mxu0 0.0
    %2137 = vmatpush1.msra.mxu0 0.0
    %2138 = vmatprep.subr.mxu0 0.0
    %2139 = vmatpush1.msra.mxu0 0.0
    %2140 = vmatprep.subr.mxu0 0.0
    %2141 = vmatpush1.msra.mxu0 0.0
    %2142 = vmatprep.subr.mxu0 0.0
    %2143 = vmatpush1.msra.mxu0 0.0
    %2144 = vmatprep.subr.mxu0 0.0
    %2145 = vmatpush1.msra.mxu0 %v1904
    %2146 = vmatprep.subr.mxu0 0.0
    %2147 = vmatpush2.msra.mxu0 0.0
    %2148 = vmatprep.subr.mxu0 0.0
    %2149 = vmatpush2.msra.mxu0 0.0
    %2150 = vmatprep.subr.mxu0 0.0
    %2151 = vmatpush2.msra.mxu0 0.0
    %2152 = vmatprep.subr.mxu0 0.0
    %2153 = vmatpush2.msra.mxu0 0.0
    %2154 = vmatprep.subr.mxu0 0.0
    %2155 = vmatpush2.msra.mxu0 0.0
    %2156 = vmatprep.subr.mxu0 0.0
    %2157 = vmatpush2.msra.mxu0 0.0
    %2158 = vmatprep.subr.mxu0 0.0
    %2159 = vmatpush2.msra.mxu0 0.0
    %2160 = vmatprep.subr.mxu0 0.0
    %2161 = vmatpush2.msra.mxu0 0.0
    %2162 = vmatprep.subr.mxu0 0.0
    %2163 = vmatpush2.msra.mxu0 0.0
    %2164 = vmatprep.subr.mxu0 0.0
    %2165 = vmatpush2.msra.mxu0 0.0
    %2166 = vmatprep.subr.mxu0 0.0
    %2167 = vmatpush2.msra.mxu0 0.0
    %2168 = vmatprep.subr.mxu0 0.0
    %2169 = vmatpush2.msra.mxu0 0.0
    %2170 = vmatprep.subr.mxu0 0.0
    %2171 = vmatpush2.msra.mxu0 0.0
    %2172 = vmatprep.subr.mxu0 0.0
    %2173 = vmatpush2.msra.mxu0 0.0
    %2174 = vmatprep.subr.mxu0 0.0
    %2175 = vmatpush2.msra.mxu0 0.0
    %2176 = vmatprep.subr.mxu0 0.0
    %2177 = vmatpush2.msra.mxu0 0.0
    %2178 = vmatprep.mubr.f32.mxu0 0.0
    %2179 = vmatmul.mubr.f32.gmra.mxu0 %v178
    %v2180 = vpop.f32.mrf.mxu0
    %v2181 = vadd.f32 0.0, %v2180
    %v2182 = vpop.f32.mrf.mxu0
    %2183 = vmatprep.mubr.f32.mxu0 0.0
    %2184 = vmatmul.mubr.f32.gmra.mxu0 %v181
    %v2185 = vpop.f32.mrf.mxu0
    %v2186 = vadd.f32 0.0, %v2185
    %v2187 = vpop.f32.mrf.mxu0
    %2188 = vmatprep.mubr.f32.mxu0 0.0
    %2189 = vmatmul.mubr.f32.gmra.mxu0 %v184
    %v2190 = vpop.f32.mrf.mxu0
    %v2191 = vadd.f32 0.0, %v2190
    %v2192 = vpop.f32.mrf.mxu0
    %2193 = vmatprep.mubr.f32.mxu0 0.0
    %2194 = vmatmul.mubr.f32.gmra.mxu0 %v187
    %v2195 = vpop.f32.mrf.mxu0
    %v2196 = vadd.f32 0.0, %v2195
    %v2197 = vpop.f32.mrf.mxu0
    %2198 = vdwg.mxu0
    %v2199 = vadd.f32 %v2110, %v2181
    %v2200 = vadd.f32 %v2111, %v2186
    %v2201 = vadd.f32 %v2112, %v2191
    %v2202 = vadd.f32 %v2113, %v2196
    %v2203 = vsub.f32 0.0, %v2199
    %v2204 = vsub.f32 0.0, %v2200
    %v2205 = vsub.f32 0.0, %v2202
    %v2206 = vmul.f32 %v2203, 1.442695
    %v2207 = vpow.pop %v2206
    %v2208 = vmul.f32 %v2204, 1.442695
    %v2209 = vpow.pop %v2208
    %v2210 = vmul.f32 %v2205, 1.442695
    %v2211 = vpow.pop %v2210
    %v2212 = vadd.f32 %v2207, 1.0
    %v2213 = vadd.f32 %v2209, 1.0
    %v2214 = vadd.f32 %v2211, 1.0
    %v2215 = vrcp.pop %v2212
    %v2216 = vrcp.pop %v2213
    %v2217 = vrcp.pop %v2214
    %v2218 = vtanh.pop %v2201
    %v2219 = vmul.f32 %v2216, %v1902
    %v2220 = vmul.f32 %v2215, %v2218
    %v2221 = vadd.f32 %v2219, %v2220
    %v2222 = vtanh.pop %v2221
    %v2223 = vmul.f32 %v2217, %v2222
    %2224 = vmatprep.subr.mxu0 0.0
    %2225 = vmatpush1.msra.mxu0 0.0
    %2226 = vmatprep.subr.mxu0 0.0
    %2227 = vmatpush1.msra.mxu0 0.0
    %2228 = vmatprep.subr.mxu0 0.0
    %2229 = vmatpush1.msra.mxu0 0.0
    %2230 = vmatprep.subr.mxu0 0.0
    %2231 = vmatpush1.msra.mxu0 0.0
    %2232 = vmatprep.subr.mxu0 0.0
    %2233 = vmatpush1.msra.mxu0 0.0
    %2234 = vmatprep.subr.mxu0 0.0
    %2235 = vmatpush1.msra.mxu0 0.0
    %2236 = vmatprep.subr.mxu0 0.0
    %2237 = vmatpush1.msra.mxu0 0.0
    %2238 = vmatprep.subr.mxu0 0.0
    %2239 = vmatpush1.msra.mxu0 0.0
    %2240 = vmatprep.subr.mxu0 0.0
    %2241 = vmatpush1.msra.mxu0 0.0
    %2242 = vmatprep.subr.mxu0 0.0
    %2243 = vmatpush1.msra.mxu0 0.0
    %2244 = vmatprep.subr.mxu0 0.0
    %2245 = vmatpush1.msra.mxu0 0.0
    %2246 = vmatprep.subr.mxu0 0.0
    %2247 = vmatpush1.msra.mxu0 0.0
    %2248 = vmatprep.subr.mxu0 0.0
    %2249 = vmatpush1.msra.mxu0 0.0
    %2250 = vmatprep.subr.mxu0 0.0
    %2251 = vmatpush1.msra.mxu0 0.0
    %2252 = vmatprep.subr.mxu0 0.0
    %2253 = vmatpush1.msra.mxu0 0.0
    %2254 = vmatprep.subr.mxu0 0.0
    %2255 = vmatpush1.msra.mxu0 %v2223
    %2256 = vmatprep.subr.mxu0 0.0
    %2257 = vmatpush2.msra.mxu0 0.0
    %2258 = vmatprep.subr.mxu0 0.0
    %2259 = vmatpush2.msra.mxu0 0.0
    %2260 = vmatprep.subr.mxu0 0.0
    %2261 = vmatpush2.msra.mxu0 0.0
    %2262 = vmatprep.subr.mxu0 0.0
    %2263 = vmatpush2.msra.mxu0 0.0
    %2264 = vmatprep.subr.mxu0 0.0
    %2265 = vmatpush2.msra.mxu0 0.0
    %2266 = vmatprep.subr.mxu0 0.0
    %2267 = vmatpush2.msra.mxu0 0.0
    %2268 = vmatprep.subr.mxu0 0.0
    %2269 = vmatpush2.msra.mxu0 0.0
    %2270 = vmatprep.subr.mxu0 0.0
    %2271 = vmatpush2.msra.mxu0 0.0
    %2272 = vmatprep.subr.mxu0 0.0
    %2273 = vmatpush2.msra.mxu0 0.0
    %2274 = vmatprep.subr.mxu0 0.0
    %2275 = vmatpush2.msra.mxu0 0.0
    %2276 = vmatprep.subr.mxu0 0.0
    %2277 = vmatpush2.msra.mxu0 0.0
    %2278 = vmatprep.subr.mxu0 0.0
    %2279 = vmatpush2.msra.mxu0 0.0
    %2280 = vmatprep.subr.mxu0 0.0
    %2281 = vmatpush2.msra.mxu0 0.0
    %2282 = vmatprep.subr.mxu0 0.0
    %2283 = vmatpush2.msra.mxu0 0.0
    %2284 = vmatprep.subr.mxu0 0.0
    %2285 = vmatpush2.msra.mxu0 0.0
    %2286 = vmatprep.subr.mxu0 0.0
    %2287 = vmatpush2.msra.mxu0 0.0
    %2288 = vmatprep.mubr.f32.mxu0 0.0
    %2289 = vmatmul.mubr.f32.gmra.mxu0 %v300
    %v2290 = vpop.f32.mrf.mxu0
    %v2291 = vadd.f32 0.0, %v2290
    %v2292 = vpop.f32.mrf.mxu0
    %2293 = vmatprep.mubr.f32.mxu0 0.0
    %2294 = vmatmul.mubr.f32.gmra.mxu0 %v303
    %v2295 = vpop.f32.mrf.mxu0
    %v2296 = vadd.f32 0.0, %v2295
    %v2297 = vpop.f32.mrf.mxu0
    %2298 = vmatprep.mubr.f32.mxu0 0.0
    %2299 = vmatmul.mubr.f32.gmra.mxu0 %v306
    %v2300 = vpop.f32.mrf.mxu0
    %v2301 = vadd.f32 0.0, %v2300
    %v2302 = vpop.f32.mrf.mxu0
    %2303 = vmatprep.mubr.f32.mxu0 0.0
    %2304 = vmatmul.mubr.f32.gmra.mxu0 %v309
    %v2305 = vpop.f32.mrf.mxu0
    %v2306 = vadd.f32 0.0, %v2305
    %v2307 = vpop.f32.mrf.mxu0
    %2308 = vdwg.mxu0
    %v2309 = vadd.f32 %v2084, %v2291
    %v2310 = vadd.f32 %v2089, %v2296
    %v2311 = vadd.f32 %v2094, %v2301
    %v2312 = vadd.f32 %v2099, %v2306
    %v2313 = vsub.f32 0.0, %v2309
    %v2314 = vsub.f32 0.0, %v2310
    %v2315 = vsub.f32 0.0, %v2312
    %v2316 = vmul.f32 %v2313, 1.442695
    %v2317 = vpow.pop %v2316
    %v2318 = vmul.f32 %v2314, 1.442695
    %v2319 = vpow.pop %v2318
    %v2320 = vmul.f32 %v2315, 1.442695
    %v2321 = vpow.pop %v2320
    %v2322 = vadd.f32 %v2317, 1.0
    %v2323 = vadd.f32 %v2319, 1.0
    %v2324 = vadd.f32 %v2321, 1.0
    %v2325 = vrcp.pop %v2322
    %v2326 = vrcp.pop %v2323
    %v2327 = vrcp.pop %v2324
    %v2328 = vtanh.pop %v2311
    %v2329 = vmul.f32 %v2326, %v2012
    %v2330 = vmul.f32 %v2325, %v2328
    %v2331 = vadd.f32 %v2329, %v2330
    %v2332 = vtanh.pop %v2331
    %v2333 = vmul.f32 %v2327, %v2332
    %s2334 = scalar_lea.vmem [#allocation3], 48
    %2335 = vst [vmem:[%s2334] sm:$0xff] %v2333
    %2336 = vmatprep.subr.mxu0 0.0
    %2337 = vmatpush1.msra.mxu0 0.0
    %2338 = vmatprep.subr.mxu0 0.0
    %2339 = vmatpush1.msra.mxu0 0.0
    %2340 = vmatprep.subr.mxu0 0.0
    %2341 = vmatpush1.msra.mxu0 0.0
    %2342 = vmatprep.subr.mxu0 0.0
    %2343 = vmatpush1.msra.mxu0 0.0
    %2344 = vmatprep.subr.mxu0 0.0
    %2345 = vmatpush1.msra.mxu0 0.0
    %2346 = vmatprep.subr.mxu0 0.0
    %2347 = vmatpush1.msra.mxu0 0.0
    %2348 = vmatprep.subr.mxu0 0.0
    %2349 = vmatpush1.msra.mxu0 0.0
    %2350 = vmatprep.subr.mxu0 0.0
    %2351 = vmatpush1.msra.mxu0 0.0
    %2352 = vmatprep.subr.mxu0 0.0
    %2353 = vmatpush1.msra.mxu0 0.0
    %2354 = vmatprep.subr.mxu0 0.0
    %2355 = vmatpush1.msra.mxu0 0.0
    %2356 = vmatprep.subr.mxu0 0.0
    %2357 = vmatpush1.msra.mxu0 0.0
    %2358 = vmatprep.subr.mxu0 0.0
    %2359 = vmatpush1.msra.mxu0 0.0
    %2360 = vmatprep.subr.mxu0 0.0
    %2361 = vmatpush1.msra.mxu0 0.0
    %2362 = vmatprep.subr.mxu0 0.0
    %2363 = vmatpush1.msra.mxu0 0.0
    %2364 = vmatprep.subr.mxu0 0.0
    %2365 = vmatpush1.msra.mxu0 0.0
    %2366 = vmatprep.subr.mxu0 0.0
    %2367 = vmatpush1.msra.mxu0 %v2333
    %2368 = vmatprep.subr.mxu0 0.0
    %2369 = vmatpush2.msra.mxu0 0.0
    %2370 = vmatprep.subr.mxu0 0.0
    %2371 = vmatpush2.msra.mxu0 0.0
    %2372 = vmatprep.subr.mxu0 0.0
    %2373 = vmatpush2.msra.mxu0 0.0
    %2374 = vmatprep.subr.mxu0 0.0
    %2375 = vmatpush2.msra.mxu0 0.0
    %2376 = vmatprep.subr.mxu0 0.0
    %2377 = vmatpush2.msra.mxu0 0.0
    %2378 = vmatprep.subr.mxu0 0.0
    %2379 = vmatpush2.msra.mxu0 0.0
    %2380 = vmatprep.subr.mxu0 0.0
    %2381 = vmatpush2.msra.mxu0 0.0
    %2382 = vmatprep.subr.mxu0 0.0
    %2383 = vmatpush2.msra.mxu0 0.0
    %2384 = vmatprep.subr.mxu0 0.0
    %2385 = vmatpush2.msra.mxu0 0.0
    %2386 = vmatprep.subr.mxu0 0.0
    %2387 = vmatpush2.msra.mxu0 0.0
    %2388 = vmatprep.subr.mxu0 0.0
    %2389 = vmatpush2.msra.mxu0 0.0
    %2390 = vmatprep.subr.mxu0 0.0
    %2391 = vmatpush2.msra.mxu0 0.0
    %2392 = vmatprep.subr.mxu0 0.0
    %2393 = vmatpush2.msra.mxu0 0.0
    %2394 = vmatprep.subr.mxu0 0.0
    %2395 = vmatpush2.msra.mxu0 0.0
    %2396 = vmatprep.subr.mxu0 0.0
    %2397 = vmatpush2.msra.mxu0 0.0
    %2398 = vmatprep.subr.mxu0 0.0
    %2399 = vmatpush2.msra.mxu0 0.0
    %2400 = vmatprep.mubr.f32.mxu0 0.0
    %2401 = vmatmul.mubr.f32.gmra.mxu0 %v69
    %v2402 = vpop.f32.mrf.mxu0
    %v2403 = vadd.f32 %v55, %v2402
    %v2404 = vpop.f32.mrf.mxu0
    %2405 = vmatprep.mubr.f32.mxu0 0.0
    %2406 = vmatmul.mubr.f32.gmra.mxu0 %v72
    %v2407 = vpop.f32.mrf.mxu0
    %v2408 = vadd.f32 %v56, %v2407
    %v2409 = vpop.f32.mrf.mxu0
    %2410 = vmatprep.mubr.f32.mxu0 0.0
    %2411 = vmatmul.mubr.f32.gmra.mxu0 %v75
    %v2412 = vpop.f32.mrf.mxu0
    %v2413 = vadd.f32 %v57, %v2412
    %v2414 = vpop.f32.mrf.mxu0
    %2415 = vmatprep.mubr.f32.mxu0 0.0
    %2416 = vmatmul.mubr.f32.gmra.mxu0 %v78
    %v2417 = vpop.f32.mrf.mxu0
    %v2418 = vadd.f32 %v58, %v2417
    %v2419 = vpop.f32.mrf.mxu0
    %2420 = vdwg.mxu0
    %v2421 = vlaneseq
    %v2422 = vshrl.u32 %v2421, 7
    %v2423 = vsub.s32 7, %v2422
    %v2424 = vrot.slane %v59, %v2423
    %v2425 = vmul.f32 %v35, %v2424
    %v2426 = vmul.f32 %v36, %v2424
    %v2427 = vmul.f32 %v37, %v2424
    %v2428 = vmul.f32 %v38, %v2424
    %v2429 = vadd.f32 %v2425, %v39
    %v2430 = vadd.f32 %v2426, %v40
    %v2431 = vadd.f32 %v2427, %v41
    %v2432 = vadd.f32 %v2428, %v42
    %2433 = vmatprep.subr.mxu0 0.0
    %2434 = vmatpush1.msra.mxu0 0.0
    %2435 = vmatprep.subr.mxu0 0.0
    %2436 = vmatpush1.msra.mxu0 0.0
    %2437 = vmatprep.subr.mxu0 0.0
    %2438 = vmatpush1.msra.mxu0 0.0
    %2439 = vmatprep.subr.mxu0 0.0
    %2440 = vmatpush1.msra.mxu0 0.0
    %2441 = vmatprep.subr.mxu0 0.0
    %2442 = vmatpush1.msra.mxu0 0.0
    %2443 = vmatprep.subr.mxu0 0.0
    %2444 = vmatpush1.msra.mxu0 0.0
    %2445 = vmatprep.subr.mxu0 0.0
    %2446 = vmatpush1.msra.mxu0 0.0
    %2447 = vmatprep.subr.mxu0 0.0
    %2448 = vmatpush1.msra.mxu0 0.0
    %2449 = vmatprep.subr.mxu0 0.0
    %2450 = vmatpush1.msra.mxu0 0.0
    %2451 = vmatprep.subr.mxu0 0.0
    %2452 = vmatpush1.msra.mxu0 0.0
    %2453 = vmatprep.subr.mxu0 0.0
    %2454 = vmatpush1.msra.mxu0 0.0
    %2455 = vmatprep.subr.mxu0 0.0
    %2456 = vmatpush1.msra.mxu0 0.0
    %2457 = vmatprep.subr.mxu0 0.0
    %2458 = vmatpush1.msra.mxu0 0.0
    %2459 = vmatprep.subr.mxu0 0.0
    %2460 = vmatpush1.msra.mxu0 0.0
    %2461 = vmatprep.subr.mxu0 0.0
    %2462 = vmatpush1.msra.mxu0 0.0
    %2463 = vmatprep.subr.mxu0 0.0
    %2464 = vmatpush1.msra.mxu0 %v2223
    %2465 = vmatprep.subr.mxu0 0.0
    %2466 = vmatpush2.msra.mxu0 0.0
    %2467 = vmatprep.subr.mxu0 0.0
    %2468 = vmatpush2.msra.mxu0 0.0
    %2469 = vmatprep.subr.mxu0 0.0
    %2470 = vmatpush2.msra.mxu0 0.0
    %2471 = vmatprep.subr.mxu0 0.0
    %2472 = vmatpush2.msra.mxu0 0.0
    %2473 = vmatprep.subr.mxu0 0.0
    %2474 = vmatpush2.msra.mxu0 0.0
    %2475 = vmatprep.subr.mxu0 0.0
    %2476 = vmatpush2.msra.mxu0 0.0
    %2477 = vmatprep.subr.mxu0 0.0
    %2478 = vmatpush2.msra.mxu0 0.0
    %2479 = vmatprep.subr.mxu0 0.0
    %2480 = vmatpush2.msra.mxu0 0.0
    %2481 = vmatprep.subr.mxu0 0.0
    %2482 = vmatpush2.msra.mxu0 0.0
    %2483 = vmatprep.subr.mxu0 0.0
    %2484 = vmatpush2.msra.mxu0 0.0
    %2485 = vmatprep.subr.mxu0 0.0
    %2486 = vmatpush2.msra.mxu0 0.0
    %2487 = vmatprep.subr.mxu0 0.0
    %2488 = vmatpush2.msra.mxu0 0.0
    %2489 = vmatprep.subr.mxu0 0.0
    %2490 = vmatpush2.msra.mxu0 0.0
    %2491 = vmatprep.subr.mxu0 0.0
    %2492 = vmatpush2.msra.mxu0 0.0
    %2493 = vmatprep.subr.mxu0 0.0
    %2494 = vmatpush2.msra.mxu0 0.0
    %2495 = vmatprep.subr.mxu0 0.0
    %2496 = vmatpush2.msra.mxu0 0.0
    %2497 = vmatprep.mubr.f32.mxu0 0.0
    %2498 = vmatmul.mubr.f32.gmra.mxu0 %v178
    %v2499 = vpop.f32.mrf.mxu0
    %v2500 = vadd.f32 0.0, %v2499
    %v2501 = vpop.f32.mrf.mxu0
    %2502 = vmatprep.mubr.f32.mxu0 0.0
    %2503 = vmatmul.mubr.f32.gmra.mxu0 %v181
    %v2504 = vpop.f32.mrf.mxu0
    %v2505 = vadd.f32 0.0, %v2504
    %v2506 = vpop.f32.mrf.mxu0
    %2507 = vmatprep.mubr.f32.mxu0 0.0
    %2508 = vmatmul.mubr.f32.gmra.mxu0 %v184
    %v2509 = vpop.f32.mrf.mxu0
    %v2510 = vadd.f32 0.0, %v2509
    %v2511 = vpop.f32.mrf.mxu0
    %2512 = vmatprep.mubr.f32.mxu0 0.0
    %2513 = vmatmul.mubr.f32.gmra.mxu0 %v187
    %v2514 = vpop.f32.mrf.mxu0
    %v2515 = vadd.f32 0.0, %v2514
    %v2516 = vpop.f32.mrf.mxu0
    %2517 = vdwg.mxu0
    %v2518 = vadd.f32 %v2429, %v2500
    %v2519 = vadd.f32 %v2430, %v2505
    %v2520 = vadd.f32 %v2431, %v2510
    %v2521 = vadd.f32 %v2432, %v2515
    %v2522 = vsub.f32 0.0, %v2518
    %v2523 = vsub.f32 0.0, %v2519
    %v2524 = vsub.f32 0.0, %v2521
    %v2525 = vmul.f32 %v2522, 1.442695
    %v2526 = vpow.pop %v2525
    %v2527 = vmul.f32 %v2523, 1.442695
    %v2528 = vpow.pop %v2527
    %v2529 = vmul.f32 %v2524, 1.442695
    %v2530 = vpow.pop %v2529
    %v2531 = vadd.f32 %v2526, 1.0
    %v2532 = vadd.f32 %v2528, 1.0
    %v2533 = vadd.f32 %v2530, 1.0
    %v2534 = vrcp.pop %v2531
    %v2535 = vrcp.pop %v2532
    %v2536 = vrcp.pop %v2533
    %v2537 = vtanh.pop %v2520
    %v2538 = vmul.f32 %v2535, %v2221
    %v2539 = vmul.f32 %v2534, %v2537
    %v2540 = vadd.f32 %v2538, %v2539
    %v2541 = vtanh.pop %v2540
    %v2542 = vmul.f32 %v2536, %v2541
    %2543 = vmatprep.subr.mxu0 0.0
    %2544 = vmatpush1.msra.mxu0 0.0
    %2545 = vmatprep.subr.mxu0 0.0
    %2546 = vmatpush1.msra.mxu0 0.0
    %2547 = vmatprep.subr.mxu0 0.0
    %2548 = vmatpush1.msra.mxu0 0.0
    %2549 = vmatprep.subr.mxu0 0.0
    %2550 = vmatpush1.msra.mxu0 0.0
    %2551 = vmatprep.subr.mxu0 0.0
    %2552 = vmatpush1.msra.mxu0 0.0
    %2553 = vmatprep.subr.mxu0 0.0
    %2554 = vmatpush1.msra.mxu0 0.0
    %2555 = vmatprep.subr.mxu0 0.0
    %2556 = vmatpush1.msra.mxu0 0.0
    %2557 = vmatprep.subr.mxu0 0.0
    %2558 = vmatpush1.msra.mxu0 0.0
    %2559 = vmatprep.subr.mxu0 0.0
    %2560 = vmatpush1.msra.mxu0 0.0
    %2561 = vmatprep.subr.mxu0 0.0
    %2562 = vmatpush1.msra.mxu0 0.0
    %2563 = vmatprep.subr.mxu0 0.0
    %2564 = vmatpush1.msra.mxu0 0.0
    %2565 = vmatprep.subr.mxu0 0.0
    %2566 = vmatpush1.msra.mxu0 0.0
    %2567 = vmatprep.subr.mxu0 0.0
    %2568 = vmatpush1.msra.mxu0 0.0
    %2569 = vmatprep.subr.mxu0 0.0
    %2570 = vmatpush1.msra.mxu0 0.0
    %2571 = vmatprep.subr.mxu0 0.0
    %2572 = vmatpush1.msra.mxu0 0.0
    %2573 = vmatprep.subr.mxu0 0.0
    %2574 = vmatpush1.msra.mxu0 %v2542
    %2575 = vmatprep.subr.mxu0 0.0
    %2576 = vmatpush2.msra.mxu0 0.0
    %2577 = vmatprep.subr.mxu0 0.0
    %2578 = vmatpush2.msra.mxu0 0.0
    %2579 = vmatprep.subr.mxu0 0.0
    %2580 = vmatpush2.msra.mxu0 0.0
    %2581 = vmatprep.subr.mxu0 0.0
    %2582 = vmatpush2.msra.mxu0 0.0
    %2583 = vmatprep.subr.mxu0 0.0
    %2584 = vmatpush2.msra.mxu0 0.0
    %2585 = vmatprep.subr.mxu0 0.0
    %2586 = vmatpush2.msra.mxu0 0.0
    %2587 = vmatprep.subr.mxu0 0.0
    %2588 = vmatpush2.msra.mxu0 0.0
    %2589 = vmatprep.subr.mxu0 0.0
    %2590 = vmatpush2.msra.mxu0 0.0
    %2591 = vmatprep.subr.mxu0 0.0
    %2592 = vmatpush2.msra.mxu0 0.0
    %2593 = vmatprep.subr.mxu0 0.0
    %2594 = vmatpush2.msra.mxu0 0.0
    %2595 = vmatprep.subr.mxu0 0.0
    %2596 = vmatpush2.msra.mxu0 0.0
    %2597 = vmatprep.subr.mxu0 0.0
    %2598 = vmatpush2.msra.mxu0 0.0
    %2599 = vmatprep.subr.mxu0 0.0
    %2600 = vmatpush2.msra.mxu0 0.0
    %2601 = vmatprep.subr.mxu0 0.0
    %2602 = vmatpush2.msra.mxu0 0.0
    %2603 = vmatprep.subr.mxu0 0.0
    %2604 = vmatpush2.msra.mxu0 0.0
    %2605 = vmatprep.subr.mxu0 0.0
    %2606 = vmatpush2.msra.mxu0 0.0
    %2607 = vmatprep.mubr.f32.mxu0 0.0
    %2608 = vmatmul.mubr.f32.gmra.mxu0 %v300
    %v2609 = vpop.f32.mrf.mxu0
    %v2610 = vadd.f32 0.0, %v2609
    %v2611 = vpop.f32.mrf.mxu0
    %2612 = vmatprep.mubr.f32.mxu0 0.0
    %2613 = vmatmul.mubr.f32.gmra.mxu0 %v303
    %v2614 = vpop.f32.mrf.mxu0
    %v2615 = vadd.f32 0.0, %v2614
    %v2616 = vpop.f32.mrf.mxu0
    %2617 = vmatprep.mubr.f32.mxu0 0.0
    %2618 = vmatmul.mubr.f32.gmra.mxu0 %v306
    %v2619 = vpop.f32.mrf.mxu0
    %v2620 = vadd.f32 0.0, %v2619
    %v2621 = vpop.f32.mrf.mxu0
    %2622 = vmatprep.mubr.f32.mxu0 0.0
    %2623 = vmatmul.mubr.f32.gmra.mxu0 %v309
    %v2624 = vpop.f32.mrf.mxu0
    %v2625 = vadd.f32 0.0, %v2624
    %v2626 = vpop.f32.mrf.mxu0
    %2627 = vdwg.mxu0
    %v2628 = vadd.f32 %v2403, %v2610
    %v2629 = vadd.f32 %v2408, %v2615
    %v2630 = vadd.f32 %v2413, %v2620
    %v2631 = vadd.f32 %v2418, %v2625
    %v2632 = vsub.f32 0.0, %v2628
    %v2633 = vsub.f32 0.0, %v2629
    %v2634 = vsub.f32 0.0, %v2631
    %v2635 = vmul.f32 %v2632, 1.442695
    %v2636 = vpow.pop %v2635
    %v2637 = vmul.f32 %v2633, 1.442695
    %v2638 = vpow.pop %v2637
    %v2639 = vmul.f32 %v2634, 1.442695
    %v2640 = vpow.pop %v2639
    %v2641 = vadd.f32 %v2636, 1.0
    %v2642 = vadd.f32 %v2638, 1.0
    %v2643 = vadd.f32 %v2640, 1.0
    %v2644 = vrcp.pop %v2641
    %v2645 = vrcp.pop %v2642
    %v2646 = vrcp.pop %v2643
    %v2647 = vtanh.pop %v2630
    %v2648 = vmul.f32 %v2645, %v2331
    %v2649 = vmul.f32 %v2644, %v2647
    %v2650 = vadd.f32 %v2648, %v2649
    %v2651 = vtanh.pop %v2650
    %v2652 = vmul.f32 %v2646, %v2651
    %s2653 = scalar_lea.vmem [#allocation3], 56
    %2654 = vst [vmem:[%s2653] sm:$0xff] %v2652
    %2655 = vst [vmem:[#allocation2] sm:$0xff] %v2542
    %2656 = vst [vmem:[%s61] sm:$0xff] %v2540
    %2657 = vst [vmem:[%s63] sm:$0xff] %v2652
    %2658 = vst [vmem:[%s65] sm:$0xff] %v2650
    // Predicated region
    $region34: #{tpu_custom_call.1} parent=1 // pred_check
      _
    $region35: #{tpu_custom_call.1} parent=1 // pred_check_branch
      %2660 = sbr.rel (0) target = $region37
    $region36: #{tpu_custom_call.1} parent=1 // pred_region
      %s2662 = ssub.s32 1024, 1024
      %2663 = vsyncadd [#allocation4], %s2662
      %s2664 = sshll.u32 [#allocation3], 4
      %s2665 = int_to_ptr.vmem [resolvable:$true] %s2664
      %2670 = dma.vmem_to_hbm [thread:$0]  %s2665, 1024, %s7, [#allocation4], 128, 128, 8
    $region37: #{tpu_custom_call.1} parent=1 // pred_fallthru
      _
    // Predicated region
    $region38: #{tpu_custom_call.1} parent=1 // pred_check
      _
    $region39: #{tpu_custom_call.1} parent=1 // pred_check_branch
      %2672 = sbr.rel (0) target = $region41
    $region40: #{tpu_custom_call.1} parent=1 // pred_region
      %2673 = dma.done [#allocation4], 1024
    $region41: #{tpu_custom_call.1} parent=1 // pred_fallthru
      _
    %2674 = vsyncpa [#allocation4], 1

</llo_original>
